<compile_context>
chip_gen: v5e
topology: v5e:2x2
jax: 0.10.0
libtpu: 0.0.40
codegen_flags: <defaults>
</compile_context>

<pallas_src>
import functools
import math

import jax
import jax.numpy as jnp
import numpy as np
from jax.experimental import pallas as pl
from jax.experimental.pallas import tpu as pltpu


# ------------------------------- fused kernel ------------------------------- #

def _net_kernel(xw_ref, w1_ref, w2_ref, wf1_ref, wf2_ref, wf3_ref, bias_ref,
                o_ref, slab1_ref, slab2_ref, x1_ref, *, bsz):
    """Whole forward pass for `bsz` images per grid step.

    xw_ref  : (8, 7*B, 128) bf16  stride-4 row windows of the images
                                  (window o holds image rows o, o+4, ..., o+24;
                                   rows within a block ordered u*B + b)
    w1_ref  : (640, 168) bf16     conv1 block-Toeplitz weight (kh folded in K,
                                  both pooling column parities s along N)
    w2_ref  : (640, 160) bf16     conv2 block-Toeplitz weight
    wf1_ref : (5, 80, 120) bf16   fc1 weight, rows permuted to kernel layout
    wf3_ref : (84, 128) bf16      fc3 weight padded to 128 output lanes
    bias_ref: (8, 128) f32        all biases packed (rows 0..4)
    o_ref   : (B, 128) f32        log-probs (classes in lanes 0..9)
    slab1/2 : VMEM im2col slabs;  x1_ref: pooled conv1, split by row parity.
    """
    f32, bf16 = jnp.float32, jnp.bfloat16
    B = bsz
    M1 = 7 * B                     # conv1 rows per (row-parity) matmul
    M2 = 5 * B                     # conv2 rows per matmul

    # Packed biases (broadcast rows).
    b1 = bias_ref[0:1, 0:84]       # conv1 bias, tiled over the 14 output cols
    b2 = bias_ref[1:2, 0:80]       # conv2 bias, tiled over the 5 output cols
    bf1 = bias_ref[2:3, 0:120]
    bf2 = bias_ref[3:4, 0:84]
    bf3 = bias_ref[4:5, 0:128]

    # Lanes 84:128 of the pooled-conv1 scratch feed the zero rows of the conv2
    # Toeplitz weight; zero them so no stale/NaN garbage reaches the MXU.
    x1_ref[:, :, 84:] = jnp.zeros((2, M1, 44), bf16)

    # ---- conv1 (5x5, 3->6) + bias + ReLU fused with 2x2 max-pool ----------
    # Output rows are produced already split by their parity t (q = 2u + t);
    # the matmul for (r, t) yields the pre-pool activation at rows 4u + 2t + r
    # for BOTH column parities s (N = 2*84).  Pool = max over (r, s).
    for t in range(2):
        for r in range(2):
            for kh in range(5):                      # fold kh into the MXU K dim
                slab1_ref[2 * t + r, :, kh * 128:(kh + 1) * 128] = \
                    xw_ref[2 * t + r + kh]
        r0 = jnp.dot(slab1_ref[2 * t], w1_ref[...], preferred_element_type=f32)
        r1 = jnp.dot(slab1_ref[2 * t + 1], w1_ref[...], preferred_element_type=f32)
        m = jnp.maximum(r0, r1)                      # max over row parity r
        m = jnp.maximum(m[:, 0:84], m[:, 84:168])    # max over col parity s
        x1_ref[t, :, 0:84] = jnp.maximum(m + b1, 0.0).astype(bf16)

    # ---- conv2 (5x5, 6->16) + bias + ReLU fused with 2x2 max-pool ---------
    # All slab reads are contiguous thanks to the row-parity-split x1 scratch.
    for r2 in range(2):
        for kh in range(5):
            o2 = r2 + kh
            slab2_ref[r2, :, kh * 128:(kh + 1) * 128] = \
                x1_ref[o2 % 2, (o2 // 2) * B:(o2 // 2 + 5) * B, :]
    r0 = jnp.dot(slab2_ref[0], w2_ref[...], preferred_element_type=f32)
    r1 = jnp.dot(slab2_ref[1], w2_ref[...], preferred_element_type=f32)
    m = jnp.maximum(r0, r1)
    m = jnp.maximum(m[:, 0:80], m[:, 80:160])
    x2 = jnp.maximum(m + b2, 0.0)                    # (5B, 80), rows = q2*B + b

    # ---- fc1 (400->120); NCHW flatten folded into wf1's row permutation ----
    acc = jnp.zeros((B, 120), f32)
    for q in range(5):
        acc = acc + jnp.dot(x2[q * B:(q + 1) * B, :].astype(bf16), wf1_ref[q],
                            preferred_element_type=f32)
    h = jnp.maximum(acc + bf1, 0.0)

    # ---- fc2 -> relu -> fc3 -> relu -> log_softmax -------------------------
    h = jnp.maximum(jnp.dot(h.astype(bf16), wf2_ref[...],
                            preferred_element_type=f32) + bf2, 0.0)
    h = jnp.maximum(jnp.dot(h.astype(bf16), wf3_ref[...],
                            preferred_element_type=f32) + bf3, 0.0)
    lane = jax.lax.broadcasted_iota(jnp.int32, (B, 128), 1)
    z = jnp.where(lane < 10, h, -1e30)               # mask the 118 pad classes
    z = z - jnp.max(z, axis=-1, keepdims=True)
    o_ref[...] = z - jnp.log(jnp.sum(jnp.exp(z), axis=-1, keepdims=True))


# ------------------------------ parameters ---------------------------------- #

def init_params(key):
    """PyTorch-layout parameters with Net.msra_init() weight stds."""
    ks = jax.random.split(key, 10)

    def msra_conv(k, shape):                       # (Cout, Cin, KH, KW)
        fan_in = shape[1] * shape[2] * shape[3]
        return jax.random.normal(k, shape, jnp.float32) * math.sqrt(2.0 / fan_in)

    def msra_fc(k, shape):                         # stored as (in, out)
        return jax.random.normal(k, shape, jnp.float32) * math.sqrt(2.0 / shape[0])

    def default_bias(k, n, fan_in):                # PyTorch default bias init
        bound = 1.0 / math.sqrt(fan_in)
        return jax.random.uniform(k, (n,), jnp.float32, -bound, bound)

    return dict(
        w_conv1=msra_conv(ks[0], (6, 3, 5, 5)),   b_conv1=default_bias(ks[1], 6, 75),
        w_conv2=msra_conv(ks[2], (16, 6, 5, 5)),  b_conv2=default_bias(ks[3], 16, 150),
        w_fc1=msra_fc(ks[4], (400, 120)),         b_fc1=default_bias(ks[5], 120, 400),
        w_fc2=msra_fc(ks[6], (120, 84)),          b_fc2=default_bias(ks[7], 84, 120),
        w_fc3=msra_fc(ks[8], (84, 10)),           b_fc3=default_bias(ks[9], 10, 84),
    )


def prepare_kernel_params(params):
    """One-time host-side re-packing into the layouts the fused kernel consumes."""

    def conv_block_toeplitz(w, out_w):
        # Row index kh*128 + (iw*Cin + c)  (each kh block zero-padded to 128 rows
        # so the in-kernel im2col copies are full-vreg-width and lane aligned);
        # col index s*(out_w*Cout) + p*Cout + o.  Then slab(r) @ W gives the
        # pre-pool conv output at output columns 2p + s for both parities s.
        w = np.asarray(w, np.float32)              # (Cout, Cin, K, K)
        cout, cin, K, _ = w.shape
        T = np.zeros((K, 128, 2, out_w, cout), np.float32)
        for kh in range(K):
            for s in range(2):
                for p in range(out_w):
                    for kw in range(K):
                        iw = 2 * p + s + kw        # always in-bounds (valid conv)
                        T[kh, iw * cin:(iw + 1) * cin, s, p, :] = w[:, :, kh, kw].T
        return jnp.asarray(T.reshape(K * 128, 2 * out_w * cout), jnp.bfloat16)

    # fc1 rows permuted from PyTorch's NCHW flatten order (c*25 + h*5 + w) to
    # the kernel's (h-major rows, lane = w*16 + c) layout: folds the flatten
    # into the weight instead of moving the activation.
    wf1 = np.asarray(params["w_fc1"], np.float32)  # (400, 120)
    idx = np.empty((5, 80), np.int64)
    for h in range(5):
        for w in range(5):
            for c in range(16):
                idx[h, w * 16 + c] = c * 25 + h * 5 + w
    wf1_k = wf1[idx.reshape(-1), :].reshape(5, 80, 120)

    # fc3 padded to 128 output lanes (lane-dense output store).
    wf3 = np.zeros((84, 128), np.float32)
    wf3[:, :10] = np.asarray(params["w_fc3"], np.float32)

    # All biases packed into a single (8, 128) operand.
    bias = np.zeros((8, 128), np.float32)
    bias[0, :84] = np.tile(np.asarray(params["b_conv1"], np.float32), 14)
    bias[1, :80] = np.tile(np.asarray(params["b_conv2"], np.float32), 5)
    bias[2, :120] = np.asarray(params["b_fc1"], np.float32)
    bias[3, :84] = np.asarray(params["b_fc2"], np.float32)
    bias[4, :10] = np.asarray(params["b_fc3"], np.float32)

    return dict(
        w1=conv_block_toeplitz(params["w_conv1"], 14),   # (640, 168)
        w2=conv_block_toeplitz(params["w_conv2"], 5),    # (640, 160)
        wf1=jnp.asarray(wf1_k, jnp.bfloat16),            # (5, 80, 120)
        wf2=jnp.asarray(params["w_fc2"], jnp.bfloat16),  # (120, 84)
        wf3=jnp.asarray(wf3, jnp.bfloat16),              # (84, 128)
        bias=jnp.asarray(bias, jnp.float32),             # (8, 128)
    )


# ------------------------------ forward pass --------------------------------- #

def net_forward(kp, x_nchw, b_tile=8):
    """Fused forward pass; b_tile images per grid step (must be a multiple of 8)."""
    assert b_tile % 8 == 0
    N = x_nchw.shape[0]
    B = b_tile
    npad = (-N) % B
    if npad:
        x_nchw = jnp.pad(x_nchw, ((0, npad), (0, 0), (0, 0), (0, 0)))
    Np = N + npad
    G = Np // B

    # NCHW -> channels-fastest 2-D rows (h, w*3+c), zero-padded to 128 lanes,
    # pre-cast to bf16 (halves the input DMA, removes in-kernel converts).
    x2d = jnp.transpose(x_nchw, (0, 2, 3, 1)).reshape(Np, 32, 96)
    x2d = jnp.pad(x2d, ((0, 0), (0, 0), (0, 32))).astype(jnp.bfloat16)
    # 8 stride-4 row windows: window o holds image rows o, o+4, ..., o+24, which
    # is exactly the im2col row block the kernel needs for conv-output rows
    # 4u + 2t + r with o = 2t + r + kh, so every in-kernel copy is contiguous.
    win = jnp.stack([x2d[:, o:o + 25:4, :] for o in range(8)], axis=0)  # (8,Np,7,128)
    xw = (win.reshape(8, G, B, 7, 128)
             .transpose(0, 1, 3, 2, 4)            # rows within a block: u*B + b
             .reshape(8, G * 7 * B, 128))

    grid_spec = pltpu.PrefetchScalarGridSpec(
        num_scalar_prefetch=0,
        grid=(G,),
        in_specs=[
            pl.BlockSpec((8, 7 * B, 128), lambda i: (0, i, 0)),   # image windows
            pl.BlockSpec((640, 168), lambda i: (0, 0)),           # conv1 (resident)
            pl.BlockSpec((640, 160), lambda i: (0, 0)),           # conv2 (resident)
            pl.BlockSpec((5, 80, 120), lambda i: (0, 0, 0)),      # fc1
            pl.BlockSpec((120, 84), lambda i: (0, 0)),            # fc2
            pl.BlockSpec((84, 128), lambda i: (0, 0)),            # fc3 (padded N)
            pl.BlockSpec((8, 128), lambda i: (0, 0)),             # packed biases
        ],
        out_specs=pl.BlockSpec((B, 128), lambda i: (i, 0)),
        scratch_shapes=[
            pltpu.VMEM((4, 7 * B, 640), jnp.bfloat16),   # conv1 im2col slabs
            pltpu.VMEM((2, 5 * B, 640), jnp.bfloat16),   # conv2 im2col slabs
            pltpu.VMEM((2, 7 * B, 128), jnp.bfloat16),   # pooled conv1 (row-parity split)
        ],
    )

    out = pl.pallas_call(
        functools.partial(_net_kernel, bsz=B),
        out_shape=jax.ShapeDtypeStruct((Np, 128), jnp.float32),
        grid_spec=grid_spec,
        compiler_params=pltpu.CompilerParams(
            dimension_semantics=("parallel",),     # megacore-shard the batch on v7x
            vmem_limit_bytes=32 * 1024 * 1024,
        ),
    )(xw, kp["w1"], kp["w2"], kp["wf1"], kp["wf2"], kp["wf3"], kp["bias"])
    return out[:N, :10]


# --------------------------- pure-JAX reference ------------------------------ #

def reference_forward(params, x_nchw):
    """Straightforward im2col/pool/flatten reference (same bf16 matmul inputs,
    f32 accumulation) used to validate the fused kernel."""
    bf16, f32 = jnp.bfloat16, jnp.float32

    def conv(xc, w, b):
        N, C, H, W = xc.shape
        cout, cin, K, _ = w.shape
        OH, OW = H - K + 1, W - K + 1
        xh = jnp.transpose(xc, (0, 2, 3, 1))
        cols = [xh[:, kh:kh + OH, kw:kw + OW, :] for kh in range(K) for kw in range(K)]
        patches = jnp.concatenate(cols, axis=-1).reshape(N * OH * OW, K * K * cin)
        wmat = jnp.transpose(w, (2, 3, 1, 0)).reshape(K * K * cin, cout)
        out = jnp.dot(patches.astype(bf16), wmat.astype(bf16),
                      preferred_element_type=f32) + b[None, :]
        return jnp.transpose(out.reshape(N, OH, OW, cout), (0, 3, 1, 2))

    def pool(xc):
        N, C, H, W = xc.shape
        return xc.reshape(N, C, H // 2, 2, W // 2, 2).max(axis=(3, 5))

    y = pool(jax.nn.relu(conv(x_nchw, params["w_conv1"], params["b_conv1"])))
    y = pool(jax.nn.relu(conv(y, params["w_conv2"], params["b_conv2"])))
    y = y.reshape(y.shape[0], 400)                              # PyTorch view(-1, 400)
    y = jax.nn.relu(jnp.dot(y.astype(bf16), params["w_fc1"].astype(bf16),
                            preferred_element_type=f32) + params["b_fc1"])
    y = jax.nn.relu(jnp.dot(y.astype(bf16), params["w_fc2"].astype(bf16),
                            preferred_element_type=f32) + params["b_fc2"])
    y = jax.nn.relu(jnp.dot(y.astype(bf16), params["w_fc3"].astype(bf16),
                            preferred_element_type=f32) + params["b_fc3"])
    return jax.nn.log_softmax(y, axis=-1)


# ---------------------------------- main ------------------------------------- #

if __name__ == "__main__":
    key = jax.random.PRNGKey(0)
    pkey, xkey = jax.random.split(key)
    params = init_params(pkey)
    kparams = prepare_kernel_params(params)      # one-time host-side repacking

    # PyTorch-style NCHW input; 3x32x32 is required by the 400-wide flatten.
    # N=32 with B_TILE=8 gives a grid of 4 (enough to feed both v7x TCs).
    x = jax.random.normal(xkey, (32, 3, 32, 32), jnp.float32)

    log_probs = jax.block_until_ready(jax.jit(net_forward)(kparams, x))

    assert log_probs.shape == (32, 10)
    lp = np.asarray(log_probs)
    assert np.all(np.isfinite(lp))
    assert np.allclose(np.exp(lp).sum(axis=1), 1.0, atol=1e-3)

    ref = np.asarray(jax.block_until_ready(jax.jit(reference_forward)(params, x)))
    np.testing.assert_allclose(lp, ref, atol=3e-2, rtol=0)

    print("KERNEL_OK")
</pallas_src>

<mosaic_0001>
module attributes {stable_mosaic.version = 11 : i64} {
  func.func @_net_kernel(%arg0: i32, %arg1: memref<8x56x128xbf16, #tpu.memory_space<vmem>>, %arg2: memref<640x168xbf16, #tpu.memory_space<vmem>>, %arg3: memref<640x160xbf16, #tpu.memory_space<vmem>>, %arg4: memref<5x80x120xbf16, #tpu.memory_space<vmem>>, %arg5: memref<120x84xbf16, #tpu.memory_space<vmem>>, %arg6: memref<84x128xbf16, #tpu.memory_space<vmem>>, %arg7: memref<8x128xf32, #tpu.memory_space<vmem>>, %arg8: memref<8x128xf32, #tpu.memory_space<vmem>>, %arg9: memref<4x56x640xbf16, #tpu.memory_space<vmem>>, %arg10: memref<2x40x640xbf16, #tpu.memory_space<vmem>>, %arg11: memref<2x56x128xbf16, #tpu.memory_space<vmem>>) attributes {dimension_semantics = [#tpu.dimension_semantics<parallel>], iteration_bounds = array<i64: 4>, scalar_prefetch = 0 : i64, scratch_operands = 3 : i64, tpu.core_type = #tpu.core_type<tc>, window_params = [{transform_indices = @transform_0, window_bounds = array<i64: 8, 56, 128>}, {pipeline_mode = #tpu.pipeline_mode<synchronous>, transform_indices = @transform_1, window_bounds = array<i64: 640, 168>}, {pipeline_mode = #tpu.pipeline_mode<synchronous>, transform_indices = @transform_2, window_bounds = array<i64: 640, 160>}, {pipeline_mode = #tpu.pipeline_mode<synchronous>, transform_indices = @transform_3, window_bounds = array<i64: 5, 80, 120>}, {pipeline_mode = #tpu.pipeline_mode<synchronous>, transform_indices = @transform_4, window_bounds = array<i64: 120, 84>}, {pipeline_mode = #tpu.pipeline_mode<synchronous>, transform_indices = @transform_5, window_bounds = array<i64: 84, 128>}, {pipeline_mode = #tpu.pipeline_mode<synchronous>, transform_indices = @transform_6, window_bounds = array<i64: 8, 128>}, {transform_indices = @transform_7, window_bounds = array<i64: 8, 128>}]} {
    %c0 = arith.constant 0 : index
    %c0_0 = arith.constant 0 : index
    %0 = vector.load %arg7[%c0, %c0_0] : memref<8x128xf32, #tpu.memory_space<vmem>>, vector<1x84xf32>
    %c1 = arith.constant 1 : index
    %c0_1 = arith.constant 0 : index
    %1 = vector.load %arg7[%c1, %c0_1] : memref<8x128xf32, #tpu.memory_space<vmem>>, vector<1x80xf32>
    %c2 = arith.constant 2 : index
    %c0_2 = arith.constant 0 : index
    %2 = vector.load %arg7[%c2, %c0_2] : memref<8x128xf32, #tpu.memory_space<vmem>>, vector<1x120xf32>
    %c3 = arith.constant 3 : index
    %c0_3 = arith.constant 0 : index
    %3 = vector.load %arg7[%c3, %c0_3] : memref<8x128xf32, #tpu.memory_space<vmem>>, vector<1x84xf32>
    %c4 = arith.constant 4 : index
    %c0_4 = arith.constant 0 : index
    %4 = vector.load %arg7[%c4, %c0_4] : memref<8x128xf32, #tpu.memory_space<vmem>>, vector<1x128xf32>
    %cst = arith.constant 0.000000e+00 : bf16
    %5 = vector.broadcast %cst : bf16 to vector<2x56x44xbf16>
    %c0_5 = arith.constant 0 : index
    %c0_6 = arith.constant 0 : index
    %c84 = arith.constant 84 : index
    %6 = vector.load %arg11[%c0_5, %c0_6, %c84] : memref<2x56x128xbf16, #tpu.memory_space<vmem>>, vector<2x56x44xbf16>
    tpu.vector_store %arg11[%c0_5, %c0_6, %c84], %5 {strides = array<i32>} : memref<2x56x128xbf16, #tpu.memory_space<vmem>>, vector<2x56x44xbf16>,
    %c0_7 = arith.constant 0 : index
    %c0_8 = arith.constant 0 : index
    %c0_9 = arith.constant 0 : index
    %7 = vector.load %arg1[%c0_7, %c0_8, %c0_9] : memref<8x56x128xbf16, #tpu.memory_space<vmem>>, vector<1x56x128xbf16>
    %8 = vector.shape_cast %7 : vector<1x56x128xbf16> to vector<56x128xbf16>
    %c0_10 = arith.constant 0 : index
    %c0_11 = arith.constant 0 : index
    %c0_12 = arith.constant 0 : index
    %9 = vector.load %arg9[%c0_10, %c0_11, %c0_12] : memref<4x56x640xbf16, #tpu.memory_space<vmem>>, vector<1x56x128xbf16>
    %10 = vector.shape_cast %9 : vector<1x56x128xbf16> to vector<56x128xbf16>
    %11 = vector.shape_cast %8 : vector<56x128xbf16> to vector<1x56x128xbf16>
    tpu.vector_store %arg9[%c0_10, %c0_11, %c0_12], %11 {strides = array<i32>} : memref<4x56x640xbf16, #tpu.memory_space<vmem>>, vector<1x56x128xbf16>,
    %c1_13 = arith.constant 1 : index
    %c0_14 = arith.constant 0 : index
    %c0_15 = arith.constant 0 : index
    %12 = vector.load %arg1[%c1_13, %c0_14, %c0_15] : memref<8x56x128xbf16, #tpu.memory_space<vmem>>, vector<1x56x128xbf16>
    %13 = vector.shape_cast %12 : vector<1x56x128xbf16> to vector<56x128xbf16>
    %c0_16 = arith.constant 0 : index
    %c0_17 = arith.constant 0 : index
    %c128 = arith.constant 128 : index
    %14 = vector.load %arg9[%c0_16, %c0_17, %c128] : memref<4x56x640xbf16, #tpu.memory_space<vmem>>, vector<1x56x128xbf16>
    %15 = vector.shape_cast %14 : vector<1x56x128xbf16> to vector<56x128xbf16>
    %16 = vector.shape_cast %13 : vector<56x128xbf16> to vector<1x56x128xbf16>
    tpu.vector_store %arg9[%c0_16, %c0_17, %c128], %16 {strides = array<i32>} : memref<4x56x640xbf16, #tpu.memory_space<vmem>>, vector<1x56x128xbf16>,
    %c2_18 = arith.constant 2 : index
    %c0_19 = arith.constant 0 : index
    %c0_20 = arith.constant 0 : index
    %17 = vector.load %arg1[%c2_18, %c0_19, %c0_20] : memref<8x56x128xbf16, #tpu.memory_space<vmem>>, vector<1x56x128xbf16>
    %18 = vector.shape_cast %17 : vector<1x56x128xbf16> to vector<56x128xbf16>
    %c0_21 = arith.constant 0 : index
    %c0_22 = arith.constant 0 : index
    %c256 = arith.constant 256 : index
    %19 = vector.load %arg9[%c0_21, %c0_22, %c256] : memref<4x56x640xbf16, #tpu.memory_space<vmem>>, vector<1x56x128xbf16>
    %20 = vector.shape_cast %19 : vector<1x56x128xbf16> to vector<56x128xbf16>
    %21 = vector.shape_cast %18 : vector<56x128xbf16> to vector<1x56x128xbf16>
    tpu.vector_store %arg9[%c0_21, %c0_22, %c256], %21 {strides = array<i32>} : memref<4x56x640xbf16, #tpu.memory_space<vmem>>, vector<1x56x128xbf16>,
    %c3_23 = arith.constant 3 : index
    %c0_24 = arith.constant 0 : index
    %c0_25 = arith.constant 0 : index
    %22 = vector.load %arg1[%c3_23, %c0_24, %c0_25] : memref<8x56x128xbf16, #tpu.memory_space<vmem>>, vector<1x56x128xbf16>
    %23 = vector.shape_cast %22 : vector<1x56x128xbf16> to vector<56x128xbf16>
    %c0_26 = arith.constant 0 : index
    %c0_27 = arith.constant 0 : index
    %c384 = arith.constant 384 : index
    %24 = vector.load %arg9[%c0_26, %c0_27, %c384] : memref<4x56x640xbf16, #tpu.memory_space<vmem>>, vector<1x56x128xbf16>
    %25 = vector.shape_cast %24 : vector<1x56x128xbf16> to vector<56x128xbf16>
    %26 = vector.shape_cast %23 : vector<56x128xbf16> to vector<1x56x128xbf16>
    tpu.vector_store %arg9[%c0_26, %c0_27, %c384], %26 {strides = array<i32>} : memref<4x56x640xbf16, #tpu.memory_space<vmem>>, vector<1x56x128xbf16>,
    %c4_28 = arith.constant 4 : index
    %c0_29 = arith.constant 0 : index
    %c0_30 = arith.constant 0 : index
    %27 = vector.load %arg1[%c4_28, %c0_29, %c0_30] : memref<8x56x128xbf16, #tpu.memory_space<vmem>>, vector<1x56x128xbf16>
    %28 = vector.shape_cast %27 : vector<1x56x128xbf16> to vector<56x128xbf16>
    %c0_31 = arith.constant 0 : index
    %c0_32 = arith.constant 0 : index
    %c512 = arith.constant 512 : index
    %29 = vector.load %arg9[%c0_31, %c0_32, %c512] : memref<4x56x640xbf16, #tpu.memory_space<vmem>>, vector<1x56x128xbf16>
    %30 = vector.shape_cast %29 : vector<1x56x128xbf16> to vector<56x128xbf16>
    %31 = vector.shape_cast %28 : vector<56x128xbf16> to vector<1x56x128xbf16>
    tpu.vector_store %arg9[%c0_31, %c0_32, %c512], %31 {strides = array<i32>} : memref<4x56x640xbf16, #tpu.memory_space<vmem>>, vector<1x56x128xbf16>,
    %c1_33 = arith.constant 1 : index
    %c0_34 = arith.constant 0 : index
    %c0_35 = arith.constant 0 : index
    %32 = vector.load %arg1[%c1_33, %c0_34, %c0_35] : memref<8x56x128xbf16, #tpu.memory_space<vmem>>, vector<1x56x128xbf16>
    %33 = vector.shape_cast %32 : vector<1x56x128xbf16> to vector<56x128xbf16>
    %c1_36 = arith.constant 1 : index
    %c0_37 = arith.constant 0 : index
    %c0_38 = arith.constant 0 : index
    %34 = vector.load %arg9[%c1_36, %c0_37, %c0_38] : memref<4x56x640xbf16, #tpu.memory_space<vmem>>, vector<1x56x128xbf16>
    %35 = vector.shape_cast %34 : vector<1x56x128xbf16> to vector<56x128xbf16>
    %36 = vector.shape_cast %33 : vector<56x128xbf16> to vector<1x56x128xbf16>
    tpu.vector_store %arg9[%c1_36, %c0_37, %c0_38], %36 {strides = array<i32>} : memref<4x56x640xbf16, #tpu.memory_space<vmem>>, vector<1x56x128xbf16>,
    %c2_39 = arith.constant 2 : index
    %c0_40 = arith.constant 0 : index
    %c0_41 = arith.constant 0 : index
    %37 = vector.load %arg1[%c2_39, %c0_40, %c0_41] : memref<8x56x128xbf16, #tpu.memory_space<vmem>>, vector<1x56x128xbf16>
    %38 = vector.shape_cast %37 : vector<1x56x128xbf16> to vector<56x128xbf16>
    %c1_42 = arith.constant 1 : index
    %c0_43 = arith.constant 0 : index
    %c128_44 = arith.constant 128 : index
    %39 = vector.load %arg9[%c1_42, %c0_43, %c128_44] : memref<4x56x640xbf16, #tpu.memory_space<vmem>>, vector<1x56x128xbf16>
    %40 = vector.shape_cast %39 : vector<1x56x128xbf16> to vector<56x128xbf16>
    %41 = vector.shape_cast %38 : vector<56x128xbf16> to vector<1x56x128xbf16>
    tpu.vector_store %arg9[%c1_42, %c0_43, %c128_44], %41 {strides = array<i32>} : memref<4x56x640xbf16, #tpu.memory_space<vmem>>, vector<1x56x128xbf16>,
    %c3_45 = arith.constant 3 : index
    %c0_46 = arith.constant 0 : index
    %c0_47 = arith.constant 0 : index
    %42 = vector.load %arg1[%c3_45, %c0_46, %c0_47] : memref<8x56x128xbf16, #tpu.memory_space<vmem>>, vector<1x56x128xbf16>
    %43 = vector.shape_cast %42 : vector<1x56x128xbf16> to vector<56x128xbf16>
    %c1_48 = arith.constant 1 : index
    %c0_49 = arith.constant 0 : index
    %c256_50 = arith.constant 256 : index
    %44 = vector.load %arg9[%c1_48, %c0_49, %c256_50] : memref<4x56x640xbf16, #tpu.memory_space<vmem>>, vector<1x56x128xbf16>
    %45 = vector.shape_cast %44 : vector<1x56x128xbf16> to vector<56x128xbf16>
    %46 = vector.shape_cast %43 : vector<56x128xbf16> to vector<1x56x128xbf16>
    tpu.vector_store %arg9[%c1_48, %c0_49, %c256_50], %46 {strides = array<i32>} : memref<4x56x640xbf16, #tpu.memory_space<vmem>>, vector<1x56x128xbf16>,
    %c4_51 = arith.constant 4 : index
    %c0_52 = arith.constant 0 : index
    %c0_53 = arith.constant 0 : index
    %47 = vector.load %arg1[%c4_51, %c0_52, %c0_53] : memref<8x56x128xbf16, #tpu.memory_space<vmem>>, vector<1x56x128xbf16>
    %48 = vector.shape_cast %47 : vector<1x56x128xbf16> to vector<56x128xbf16>
    %c1_54 = arith.constant 1 : index
    %c0_55 = arith.constant 0 : index
    %c384_56 = arith.constant 384 : index
    %49 = vector.load %arg9[%c1_54, %c0_55, %c384_56] : memref<4x56x640xbf16, #tpu.memory_space<vmem>>, vector<1x56x128xbf16>
    %50 = vector.shape_cast %49 : vector<1x56x128xbf16> to vector<56x128xbf16>
    %51 = vector.shape_cast %48 : vector<56x128xbf16> to vector<1x56x128xbf16>
    tpu.vector_store %arg9[%c1_54, %c0_55, %c384_56], %51 {strides = array<i32>} : memref<4x56x640xbf16, #tpu.memory_space<vmem>>, vector<1x56x128xbf16>,
    %c5 = arith.constant 5 : index
    %c0_57 = arith.constant 0 : index
    %c0_58 = arith.constant 0 : index
    %52 = vector.load %arg1[%c5, %c0_57, %c0_58] : memref<8x56x128xbf16, #tpu.memory_space<vmem>>, vector<1x56x128xbf16>
    %53 = vector.shape_cast %52 : vector<1x56x128xbf16> to vector<56x128xbf16>
    %c1_59 = arith.constant 1 : index
    %c0_60 = arith.constant 0 : index
    %c512_61 = arith.constant 512 : index
    %54 = vector.load %arg9[%c1_59, %c0_60, %c512_61] : memref<4x56x640xbf16, #tpu.memory_space<vmem>>, vector<1x56x128xbf16>
    %55 = vector.shape_cast %54 : vector<1x56x128xbf16> to vector<56x128xbf16>
    %56 = vector.shape_cast %53 : vector<56x128xbf16> to vector<1x56x128xbf16>
    tpu.vector_store %arg9[%c1_59, %c0_60, %c512_61], %56 {strides = array<i32>} : memref<4x56x640xbf16, #tpu.memory_space<vmem>>, vector<1x56x128xbf16>,
    %c0_62 = arith.constant 0 : index
    %c0_63 = arith.constant 0 : index
    %c0_64 = arith.constant 0 : index
    %57 = vector.load %arg9[%c0_62, %c0_63, %c0_64] : memref<4x56x640xbf16, #tpu.memory_space<vmem>>, vector<1x56x640xbf16>
    %58 = vector.shape_cast %57 : vector<1x56x640xbf16> to vector<56x640xbf16>
    %c0_65 = arith.constant 0 : index
    %c0_66 = arith.constant 0 : index
    %59 = vector.load %arg2[%c0_65, %c0_66] : memref<640x168xbf16, #tpu.memory_space<vmem>>, vector<640x168xbf16>
    %cst_67 = arith.constant dense<0.000000e+00> : vector<56x168xf32>
    %60 = tpu.matmul %58, %59, %cst_67 {dimension_numbers = #tpu.dot_dimension_numbers<[1], [0], [0], [1], [0, 0, 1, 1], [], []>} : vector<56x640xbf16>, vector<640x168xbf16>, vector<56x168xf32> -> vector<56x168xf32>
    %c1_68 = arith.constant 1 : index
    %c0_69 = arith.constant 0 : index
    %c0_70 = arith.constant 0 : index
    %61 = vector.load %arg9[%c1_68, %c0_69, %c0_70] : memref<4x56x640xbf16, #tpu.memory_space<vmem>>, vector<1x56x640xbf16>
    %62 = vector.shape_cast %61 : vector<1x56x640xbf16> to vector<56x640xbf16>
    %c0_71 = arith.constant 0 : index
    %c0_72 = arith.constant 0 : index
    %63 = vector.load %arg2[%c0_71, %c0_72] : memref<640x168xbf16, #tpu.memory_space<vmem>>, vector<640x168xbf16>
    %cst_73 = arith.constant dense<0.000000e+00> : vector<56x168xf32>
    %64 = tpu.matmul %62, %63, %cst_73 {dimension_numbers = #tpu.dot_dimension_numbers<[1], [0], [0], [1], [0, 0, 1, 1], [], []>} : vector<56x640xbf16>, vector<640x168xbf16>, vector<56x168xf32> -> vector<56x168xf32>
    %65 = arith.maximumf %60, %64 : vector<56x168xf32>
    %66 = vector.extract_strided_slice %65 {offsets = [0, 0], sizes = [56, 84], strides = [1, 1]} : vector<56x168xf32> to vector<56x84xf32>
    %67 = vector.extract_strided_slice %65 {offsets = [0, 84], sizes = [56, 84], strides = [1, 1]} : vector<56x168xf32> to vector<56x84xf32>
    %68 = arith.maximumf %66, %67 : vector<56x84xf32>
    %69 = vector.broadcast %0 : vector<1x84xf32> to vector<56x84xf32>
    %70 = arith.addf %68, %69 : vector<56x84xf32>
    %cst_74 = arith.constant 0.000000e+00 : f32
    %71 = vector.broadcast %cst_74 : f32 to vector<56x84xf32>
    %72 = arith.maximumf %70, %71 : vector<56x84xf32>
    %73 = arith.truncf %72 : vector<56x84xf32> to vector<56x84xbf16>
    %c0_75 = arith.constant 0 : index
    %c0_76 = arith.constant 0 : index
    %c0_77 = arith.constant 0 : index
    %74 = vector.load %arg11[%c0_75, %c0_76, %c0_77] : memref<2x56x128xbf16, #tpu.memory_space<vmem>>, vector<1x56x84xbf16>
    %75 = vector.shape_cast %74 : vector<1x56x84xbf16> to vector<56x84xbf16>
    %76 = vector.shape_cast %73 : vector<56x84xbf16> to vector<1x56x84xbf16>
    tpu.vector_store %arg11[%c0_75, %c0_76, %c0_77], %76 {strides = array<i32>} : memref<2x56x128xbf16, #tpu.memory_space<vmem>>, vector<1x56x84xbf16>,
    %c2_78 = arith.constant 2 : index
    %c0_79 = arith.constant 0 : index
    %c0_80 = arith.constant 0 : index
    %77 = vector.load %arg1[%c2_78, %c0_79, %c0_80] : memref<8x56x128xbf16, #tpu.memory_space<vmem>>, vector<1x56x128xbf16>
    %78 = vector.shape_cast %77 : vector<1x56x128xbf16> to vector<56x128xbf16>
    %c2_81 = arith.constant 2 : index
    %c0_82 = arith.constant 0 : index
    %c0_83 = arith.constant 0 : index
    %79 = vector.load %arg9[%c2_81, %c0_82, %c0_83] : memref<4x56x640xbf16, #tpu.memory_space<vmem>>, vector<1x56x128xbf16>
    %80 = vector.shape_cast %79 : vector<1x56x128xbf16> to vector<56x128xbf16>
    %81 = vector.shape_cast %78 : vector<56x128xbf16> to vector<1x56x128xbf16>
    tpu.vector_store %arg9[%c2_81, %c0_82, %c0_83], %81 {strides = array<i32>} : memref<4x56x640xbf16, #tpu.memory_space<vmem>>, vector<1x56x128xbf16>,
    %c3_84 = arith.constant 3 : index
    %c0_85 = arith.constant 0 : index
    %c0_86 = arith.constant 0 : index
    %82 = vector.load %arg1[%c3_84, %c0_85, %c0_86] : memref<8x56x128xbf16, #tpu.memory_space<vmem>>, vector<1x56x128xbf16>
    %83 = vector.shape_cast %82 : vector<1x56x128xbf16> to vector<56x128xbf16>
    %c2_87 = arith.constant 2 : index
    %c0_88 = arith.constant 0 : index
    %c128_89 = arith.constant 128 : index
    %84 = vector.load %arg9[%c2_87, %c0_88, %c128_89] : memref<4x56x640xbf16, #tpu.memory_space<vmem>>, vector<1x56x128xbf16>
    %85 = vector.shape_cast %84 : vector<1x56x128xbf16> to vector<56x128xbf16>
    %86 = vector.shape_cast %83 : vector<56x128xbf16> to vector<1x56x128xbf16>
    tpu.vector_store %arg9[%c2_87, %c0_88, %c128_89], %86 {strides = array<i32>} : memref<4x56x640xbf16, #tpu.memory_space<vmem>>, vector<1x56x128xbf16>,
    %c4_90 = arith.constant 4 : index
    %c0_91 = arith.constant 0 : index
    %c0_92 = arith.constant 0 : index
    %87 = vector.load %arg1[%c4_90, %c0_91, %c0_92] : memref<8x56x128xbf16, #tpu.memory_space<vmem>>, vector<1x56x128xbf16>
    %88 = vector.shape_cast %87 : vector<1x56x128xbf16> to vector<56x128xbf16>
    %c2_93 = arith.constant 2 : index
    %c0_94 = arith.constant 0 : index
    %c256_95 = arith.constant 256 : index
    %89 = vector.load %arg9[%c2_93, %c0_94, %c256_95] : memref<4x56x640xbf16, #tpu.memory_space<vmem>>, vector<1x56x128xbf16>
    %90 = vector.shape_cast %89 : vector<1x56x128xbf16> to vector<56x128xbf16>
    %91 = vector.shape_cast %88 : vector<56x128xbf16> to vector<1x56x128xbf16>
    tpu.vector_store %arg9[%c2_93, %c0_94, %c256_95], %91 {strides = array<i32>} : memref<4x56x640xbf16, #tpu.memory_space<vmem>>, vector<1x56x128xbf16>,
    %c5_96 = arith.constant 5 : index
    %c0_97 = arith.constant 0 : index
    %c0_98 = arith.constant 0 : index
    %92 = vector.load %arg1[%c5_96, %c0_97, %c0_98] : memref<8x56x128xbf16, #tpu.memory_space<vmem>>, vector<1x56x128xbf16>
    %93 = vector.shape_cast %92 : vector<1x56x128xbf16> to vector<56x128xbf16>
    %c2_99 = arith.constant 2 : index
    %c0_100 = arith.constant 0 : index
    %c384_101 = arith.constant 384 : index
    %94 = vector.load %arg9[%c2_99, %c0_100, %c384_101] : memref<4x56x640xbf16, #tpu.memory_space<vmem>>, vector<1x56x128xbf16>
    %95 = vector.shape_cast %94 : vector<1x56x128xbf16> to vector<56x128xbf16>
    %96 = vector.shape_cast %93 : vector<56x128xbf16> to vector<1x56x128xbf16>
    tpu.vector_store %arg9[%c2_99, %c0_100, %c384_101], %96 {strides = array<i32>} : memref<4x56x640xbf16, #tpu.memory_space<vmem>>, vector<1x56x128xbf16>,
    %c6 = arith.constant 6 : index
    %c0_102 = arith.constant 0 : index
    %c0_103 = arith.constant 0 : index
    %97 = vector.load %arg1[%c6, %c0_102, %c0_103] : memref<8x56x128xbf16, #tpu.memory_space<vmem>>, vector<1x56x128xbf16>
    %98 = vector.shape_cast %97 : vector<1x56x128xbf16> to vector<56x128xbf16>
    %c2_104 = arith.constant 2 : index
    %c0_105 = arith.constant 0 : index
    %c512_106 = arith.constant 512 : index
    %99 = vector.load %arg9[%c2_104, %c0_105, %c512_106] : memref<4x56x640xbf16, #tpu.memory_space<vmem>>, vector<1x56x128xbf16>
    %100 = vector.shape_cast %99 : vector<1x56x128xbf16> to vector<56x128xbf16>
    %101 = vector.shape_cast %98 : vector<56x128xbf16> to vector<1x56x128xbf16>
    tpu.vector_store %arg9[%c2_104, %c0_105, %c512_106], %101 {strides = array<i32>} : memref<4x56x640xbf16, #tpu.memory_space<vmem>>, vector<1x56x128xbf16>,
    %c3_107 = arith.constant 3 : index
    %c0_108 = arith.constant 0 : index
    %c0_109 = arith.constant 0 : index
    %102 = vector.load %arg1[%c3_107, %c0_108, %c0_109] : memref<8x56x128xbf16, #tpu.memory_space<vmem>>, vector<1x56x128xbf16>
    %103 = vector.shape_cast %102 : vector<1x56x128xbf16> to vector<56x128xbf16>
    %c3_110 = arith.constant 3 : index
    %c0_111 = arith.constant 0 : index
    %c0_112 = arith.constant 0 : index
    %104 = vector.load %arg9[%c3_110, %c0_111, %c0_112] : memref<4x56x640xbf16, #tpu.memory_space<vmem>>, vector<1x56x128xbf16>
    %105 = vector.shape_cast %104 : vector<1x56x128xbf16> to vector<56x128xbf16>
    %106 = vector.shape_cast %103 : vector<56x128xbf16> to vector<1x56x128xbf16>
    tpu.vector_store %arg9[%c3_110, %c0_111, %c0_112], %106 {strides = array<i32>} : memref<4x56x640xbf16, #tpu.memory_space<vmem>>, vector<1x56x128xbf16>,
    %c4_113 = arith.constant 4 : index
    %c0_114 = arith.constant 0 : index
    %c0_115 = arith.constant 0 : index
    %107 = vector.load %arg1[%c4_113, %c0_114, %c0_115] : memref<8x56x128xbf16, #tpu.memory_space<vmem>>, vector<1x56x128xbf16>
    %108 = vector.shape_cast %107 : vector<1x56x128xbf16> to vector<56x128xbf16>
    %c3_116 = arith.constant 3 : index
    %c0_117 = arith.constant 0 : index
    %c128_118 = arith.constant 128 : index
    %109 = vector.load %arg9[%c3_116, %c0_117, %c128_118] : memref<4x56x640xbf16, #tpu.memory_space<vmem>>, vector<1x56x128xbf16>
    %110 = vector.shape_cast %109 : vector<1x56x128xbf16> to vector<56x128xbf16>
    %111 = vector.shape_cast %108 : vector<56x128xbf16> to vector<1x56x128xbf16>
    tpu.vector_store %arg9[%c3_116, %c0_117, %c128_118], %111 {strides = array<i32>} : memref<4x56x640xbf16, #tpu.memory_space<vmem>>, vector<1x56x128xbf16>,
    %c5_119 = arith.constant 5 : index
    %c0_120 = arith.constant 0 : index
    %c0_121 = arith.constant 0 : index
    %112 = vector.load %arg1[%c5_119, %c0_120, %c0_121] : memref<8x56x128xbf16, #tpu.memory_space<vmem>>, vector<1x56x128xbf16>
    %113 = vector.shape_cast %112 : vector<1x56x128xbf16> to vector<56x128xbf16>
    %c3_122 = arith.constant 3 : index
    %c0_123 = arith.constant 0 : index
    %c256_124 = arith.constant 256 : index
    %114 = vector.load %arg9[%c3_122, %c0_123, %c256_124] : memref<4x56x640xbf16, #tpu.memory_space<vmem>>, vector<1x56x128xbf16>
    %115 = vector.shape_cast %114 : vector<1x56x128xbf16> to vector<56x128xbf16>
    %116 = vector.shape_cast %113 : vector<56x128xbf16> to vector<1x56x128xbf16>
    tpu.vector_store %arg9[%c3_122, %c0_123, %c256_124], %116 {strides = array<i32>} : memref<4x56x640xbf16, #tpu.memory_space<vmem>>, vector<1x56x128xbf16>,
    %c6_125 = arith.constant 6 : index
    %c0_126 = arith.constant 0 : index
    %c0_127 = arith.constant 0 : index
    %117 = vector.load %arg1[%c6_125, %c0_126, %c0_127] : memref<8x56x128xbf16, #tpu.memory_space<vmem>>, vector<1x56x128xbf16>
    %118 = vector.shape_cast %117 : vector<1x56x128xbf16> to vector<56x128xbf16>
    %c3_128 = arith.constant 3 : index
    %c0_129 = arith.constant 0 : index
    %c384_130 = arith.constant 384 : index
    %119 = vector.load %arg9[%c3_128, %c0_129, %c384_130] : memref<4x56x640xbf16, #tpu.memory_space<vmem>>, vector<1x56x128xbf16>
    %120 = vector.shape_cast %119 : vector<1x56x128xbf16> to vector<56x128xbf16>
    %121 = vector.shape_cast %118 : vector<56x128xbf16> to vector<1x56x128xbf16>
    tpu.vector_store %arg9[%c3_128, %c0_129, %c384_130], %121 {strides = array<i32>} : memref<4x56x640xbf16, #tpu.memory_space<vmem>>, vector<1x56x128xbf16>,
    %c7 = arith.constant 7 : index
    %c0_131 = arith.constant 0 : index
    %c0_132 = arith.constant 0 : index
    %122 = vector.load %arg1[%c7, %c0_131, %c0_132] : memref<8x56x128xbf16, #tpu.memory_space<vmem>>, vector<1x56x128xbf16>
    %123 = vector.shape_cast %122 : vector<1x56x128xbf16> to vector<56x128xbf16>
    %c3_133 = arith.constant 3 : index
    %c0_134 = arith.constant 0 : index
    %c512_135 = arith.constant 512 : index
    %124 = vector.load %arg9[%c3_133, %c0_134, %c512_135] : memref<4x56x640xbf16, #tpu.memory_space<vmem>>, vector<1x56x128xbf16>
    %125 = vector.shape_cast %124 : vector<1x56x128xbf16> to vector<56x128xbf16>
    %126 = vector.shape_cast %123 : vector<56x128xbf16> to vector<1x56x128xbf16>
    tpu.vector_store %arg9[%c3_133, %c0_134, %c512_135], %126 {strides = array<i32>} : memref<4x56x640xbf16, #tpu.memory_space<vmem>>, vector<1x56x128xbf16>,
    %c2_136 = arith.constant 2 : index
    %c0_137 = arith.constant 0 : index
    %c0_138 = arith.constant 0 : index
    %127 = vector.load %arg9[%c2_136, %c0_137, %c0_138] : memref<4x56x640xbf16, #tpu.memory_space<vmem>>, vector<1x56x640xbf16>
    %128 = vector.shape_cast %127 : vector<1x56x640xbf16> to vector<56x640xbf16>
    %c0_139 = arith.constant 0 : index
    %c0_140 = arith.constant 0 : index
    %129 = vector.load %arg2[%c0_139, %c0_140] : memref<640x168xbf16, #tpu.memory_space<vmem>>, vector<640x168xbf16>
    %cst_141 = arith.constant dense<0.000000e+00> : vector<56x168xf32>
    %130 = tpu.matmul %128, %129, %cst_141 {dimension_numbers = #tpu.dot_dimension_numbers<[1], [0], [0], [1], [0, 0, 1, 1], [], []>} : vector<56x640xbf16>, vector<640x168xbf16>, vector<56x168xf32> -> vector<56x168xf32>
    %c3_142 = arith.constant 3 : index
    %c0_143 = arith.constant 0 : index
    %c0_144 = arith.constant 0 : index
    %131 = vector.load %arg9[%c3_142, %c0_143, %c0_144] : memref<4x56x640xbf16, #tpu.memory_space<vmem>>, vector<1x56x640xbf16>
    %132 = vector.shape_cast %131 : vector<1x56x640xbf16> to vector<56x640xbf16>
    %c0_145 = arith.constant 0 : index
    %c0_146 = arith.constant 0 : index
    %133 = vector.load %arg2[%c0_145, %c0_146] : memref<640x168xbf16, #tpu.memory_space<vmem>>, vector<640x168xbf16>
    %cst_147 = arith.constant dense<0.000000e+00> : vector<56x168xf32>
    %134 = tpu.matmul %132, %133, %cst_147 {dimension_numbers = #tpu.dot_dimension_numbers<[1], [0], [0], [1], [0, 0, 1, 1], [], []>} : vector<56x640xbf16>, vector<640x168xbf16>, vector<56x168xf32> -> vector<56x168xf32>
    %135 = arith.maximumf %130, %134 : vector<56x168xf32>
    %136 = vector.extract_strided_slice %135 {offsets = [0, 0], sizes = [56, 84], strides = [1, 1]} : vector<56x168xf32> to vector<56x84xf32>
    %137 = vector.extract_strided_slice %135 {offsets = [0, 84], sizes = [56, 84], strides = [1, 1]} : vector<56x168xf32> to vector<56x84xf32>
    %138 = arith.maximumf %136, %137 : vector<56x84xf32>
    %139 = vector.broadcast %0 : vector<1x84xf32> to vector<56x84xf32>
    %140 = arith.addf %138, %139 : vector<56x84xf32>
    %cst_148 = arith.constant 0.000000e+00 : f32
    %141 = vector.broadcast %cst_148 : f32 to vector<56x84xf32>
    %142 = arith.maximumf %140, %141 : vector<56x84xf32>
    %143 = arith.truncf %142 : vector<56x84xf32> to vector<56x84xbf16>
    %c1_149 = arith.constant 1 : index
    %c0_150 = arith.constant 0 : index
    %c0_151 = arith.constant 0 : index
    %144 = vector.load %arg11[%c1_149, %c0_150, %c0_151] : memref<2x56x128xbf16, #tpu.memory_space<vmem>>, vector<1x56x84xbf16>
    %145 = vector.shape_cast %144 : vector<1x56x84xbf16> to vector<56x84xbf16>
    %146 = vector.shape_cast %143 : vector<56x84xbf16> to vector<1x56x84xbf16>
    tpu.vector_store %arg11[%c1_149, %c0_150, %c0_151], %146 {strides = array<i32>} : memref<2x56x128xbf16, #tpu.memory_space<vmem>>, vector<1x56x84xbf16>,
    %c0_152 = arith.constant 0 : index
    %c0_153 = arith.constant 0 : index
    %c0_154 = arith.constant 0 : index
    %147 = vector.load %arg11[%c0_152, %c0_153, %c0_154] : memref<2x56x128xbf16, #tpu.memory_space<vmem>>, vector<1x40x128xbf16>
    %148 = vector.shape_cast %147 : vector<1x40x128xbf16> to vector<40x128xbf16>
    %c0_155 = arith.constant 0 : index
    %c0_156 = arith.constant 0 : index
    %c0_157 = arith.constant 0 : index
    %149 = vector.load %arg10[%c0_155, %c0_156, %c0_157] : memref<2x40x640xbf16, #tpu.memory_space<vmem>>, vector<1x40x128xbf16>
    %150 = vector.shape_cast %149 : vector<1x40x128xbf16> to vector<40x128xbf16>
    %151 = vector.shape_cast %148 : vector<40x128xbf16> to vector<1x40x128xbf16>
    tpu.vector_store %arg10[%c0_155, %c0_156, %c0_157], %151 {strides = array<i32>} : memref<2x40x640xbf16, #tpu.memory_space<vmem>>, vector<1x40x128xbf16>,
    %c1_158 = arith.constant 1 : index
    %c0_159 = arith.constant 0 : index
    %c0_160 = arith.constant 0 : index
    %152 = vector.load %arg11[%c1_158, %c0_159, %c0_160] : memref<2x56x128xbf16, #tpu.memory_space<vmem>>, vector<1x40x128xbf16>
    %153 = vector.shape_cast %152 : vector<1x40x128xbf16> to vector<40x128xbf16>
    %c0_161 = arith.constant 0 : index
    %c0_162 = arith.constant 0 : index
    %c128_163 = arith.constant 128 : index
    %154 = vector.load %arg10[%c0_161, %c0_162, %c128_163] : memref<2x40x640xbf16, #tpu.memory_space<vmem>>, vector<1x40x128xbf16>
    %155 = vector.shape_cast %154 : vector<1x40x128xbf16> to vector<40x128xbf16>
    %156 = vector.shape_cast %153 : vector<40x128xbf16> to vector<1x40x128xbf16>
    tpu.vector_store %arg10[%c0_161, %c0_162, %c128_163], %156 {strides = array<i32>} : memref<2x40x640xbf16, #tpu.memory_space<vmem>>, vector<1x40x128xbf16>,
    %c0_164 = arith.constant 0 : index
    %c8 = arith.constant 8 : index
    %c0_165 = arith.constant 0 : index
    %157 = vector.load %arg11[%c0_164, %c8, %c0_165] : memref<2x56x128xbf16, #tpu.memory_space<vmem>>, vector<1x40x128xbf16>
    %158 = vector.shape_cast %157 : vector<1x40x128xbf16> to vector<40x128xbf16>
    %c0_166 = arith.constant 0 : index
    %c0_167 = arith.constant 0 : index
    %c256_168 = arith.constant 256 : index
    %159 = vector.load %arg10[%c0_166, %c0_167, %c256_168] : memref<2x40x640xbf16, #tpu.memory_space<vmem>>, vector<1x40x128xbf16>
    %160 = vector.shape_cast %159 : vector<1x40x128xbf16> to vector<40x128xbf16>
    %161 = vector.shape_cast %158 : vector<40x128xbf16> to vector<1x40x128xbf16>
    tpu.vector_store %arg10[%c0_166, %c0_167, %c256_168], %161 {strides = array<i32>} : memref<2x40x640xbf16, #tpu.memory_space<vmem>>, vector<1x40x128xbf16>,
    %c1_169 = arith.constant 1 : index
    %c8_170 = arith.constant 8 : index
    %c0_171 = arith.constant 0 : index
    %162 = vector.load %arg11[%c1_169, %c8_170, %c0_171] : memref<2x56x128xbf16, #tpu.memory_space<vmem>>, vector<1x40x128xbf16>
    %163 = vector.shape_cast %162 : vector<1x40x128xbf16> to vector<40x128xbf16>
    %c0_172 = arith.constant 0 : index
    %c0_173 = arith.constant 0 : index
    %c384_174 = arith.constant 384 : index
    %164 = vector.load %arg10[%c0_172, %c0_173, %c384_174] : memref<2x40x640xbf16, #tpu.memory_space<vmem>>, vector<1x40x128xbf16>
    %165 = vector.shape_cast %164 : vector<1x40x128xbf16> to vector<40x128xbf16>
    %166 = vector.shape_cast %163 : vector<40x128xbf16> to vector<1x40x128xbf16>
    tpu.vector_store %arg10[%c0_172, %c0_173, %c384_174], %166 {strides = array<i32>} : memref<2x40x640xbf16, #tpu.memory_space<vmem>>, vector<1x40x128xbf16>,
    %c0_175 = arith.constant 0 : index
    %c16 = arith.constant 16 : index
    %c0_176 = arith.constant 0 : index
    %167 = vector.load %arg11[%c0_175, %c16, %c0_176] : memref<2x56x128xbf16, #tpu.memory_space<vmem>>, vector<1x40x128xbf16>
    %168 = vector.shape_cast %167 : vector<1x40x128xbf16> to vector<40x128xbf16>
    %c0_177 = arith.constant 0 : index
    %c0_178 = arith.constant 0 : index
    %c512_179 = arith.constant 512 : index
    %169 = vector.load %arg10[%c0_177, %c0_178, %c512_179] : memref<2x40x640xbf16, #tpu.memory_space<vmem>>, vector<1x40x128xbf16>
    %170 = vector.shape_cast %169 : vector<1x40x128xbf16> to vector<40x128xbf16>
    %171 = vector.shape_cast %168 : vector<40x128xbf16> to vector<1x40x128xbf16>
    tpu.vector_store %arg10[%c0_177, %c0_178, %c512_179], %171 {strides = array<i32>} : memref<2x40x640xbf16, #tpu.memory_space<vmem>>, vector<1x40x128xbf16>,
    %c1_180 = arith.constant 1 : index
    %c0_181 = arith.constant 0 : index
    %c0_182 = arith.constant 0 : index
    %172 = vector.load %arg11[%c1_180, %c0_181, %c0_182] : memref<2x56x128xbf16, #tpu.memory_space<vmem>>, vector<1x40x128xbf16>
    %173 = vector.shape_cast %172 : vector<1x40x128xbf16> to vector<40x128xbf16>
    %c1_183 = arith.constant 1 : index
    %c0_184 = arith.constant 0 : index
    %c0_185 = arith.constant 0 : index
    %174 = vector.load %arg10[%c1_183, %c0_184, %c0_185] : memref<2x40x640xbf16, #tpu.memory_space<vmem>>, vector<1x40x128xbf16>
    %175 = vector.shape_cast %174 : vector<1x40x128xbf16> to vector<40x128xbf16>
    %176 = vector.shape_cast %173 : vector<40x128xbf16> to vector<1x40x128xbf16>
    tpu.vector_store %arg10[%c1_183, %c0_184, %c0_185], %176 {strides = array<i32>} : memref<2x40x640xbf16, #tpu.memory_space<vmem>>, vector<1x40x128xbf16>,
    %c0_186 = arith.constant 0 : index
    %c8_187 = arith.constant 8 : index
    %c0_188 = arith.constant 0 : index
    %177 = vector.load %arg11[%c0_186, %c8_187, %c0_188] : memref<2x56x128xbf16, #tpu.memory_space<vmem>>, vector<1x40x128xbf16>
    %178 = vector.shape_cast %177 : vector<1x40x128xbf16> to vector<40x128xbf16>
    %c1_189 = arith.constant 1 : index
    %c0_190 = arith.constant 0 : index
    %c128_191 = arith.constant 128 : index
    %179 = vector.load %arg10[%c1_189, %c0_190, %c128_191] : memref<2x40x640xbf16, #tpu.memory_space<vmem>>, vector<1x40x128xbf16>
    %180 = vector.shape_cast %179 : vector<1x40x128xbf16> to vector<40x128xbf16>
    %181 = vector.shape_cast %178 : vector<40x128xbf16> to vector<1x40x128xbf16>
    tpu.vector_store %arg10[%c1_189, %c0_190, %c128_191], %181 {strides = array<i32>} : memref<2x40x640xbf16, #tpu.memory_space<vmem>>, vector<1x40x128xbf16>,
    %c1_192 = arith.constant 1 : index
    %c8_193 = arith.constant 8 : index
    %c0_194 = arith.constant 0 : index
    %182 = vector.load %arg11[%c1_192, %c8_193, %c0_194] : memref<2x56x128xbf16, #tpu.memory_space<vmem>>, vector<1x40x128xbf16>
    %183 = vector.shape_cast %182 : vector<1x40x128xbf16> to vector<40x128xbf16>
    %c1_195 = arith.constant 1 : index
    %c0_196 = arith.constant 0 : index
    %c256_197 = arith.constant 256 : index
    %184 = vector.load %arg10[%c1_195, %c0_196, %c256_197] : memref<2x40x640xbf16, #tpu.memory_space<vmem>>, vector<1x40x128xbf16>
    %185 = vector.shape_cast %184 : vector<1x40x128xbf16> to vector<40x128xbf16>
    %186 = vector.shape_cast %183 : vector<40x128xbf16> to vector<1x40x128xbf16>
    tpu.vector_store %arg10[%c1_195, %c0_196, %c256_197], %186 {strides = array<i32>} : memref<2x40x640xbf16, #tpu.memory_space<vmem>>, vector<1x40x128xbf16>,
    %c0_198 = arith.constant 0 : index
    %c16_199 = arith.constant 16 : index
    %c0_200 = arith.constant 0 : index
    %187 = vector.load %arg11[%c0_198, %c16_199, %c0_200] : memref<2x56x128xbf16, #tpu.memory_space<vmem>>, vector<1x40x128xbf16>
    %188 = vector.shape_cast %187 : vector<1x40x128xbf16> to vector<40x128xbf16>
    %c1_201 = arith.constant 1 : index
    %c0_202 = arith.constant 0 : index
    %c384_203 = arith.constant 384 : index
    %189 = vector.load %arg10[%c1_201, %c0_202, %c384_203] : memref<2x40x640xbf16, #tpu.memory_space<vmem>>, vector<1x40x128xbf16>
    %190 = vector.shape_cast %189 : vector<1x40x128xbf16> to vector<40x128xbf16>
    %191 = vector.shape_cast %188 : vector<40x128xbf16> to vector<1x40x128xbf16>
    tpu.vector_store %arg10[%c1_201, %c0_202, %c384_203], %191 {strides = array<i32>} : memref<2x40x640xbf16, #tpu.memory_space<vmem>>, vector<1x40x128xbf16>,
    %c1_204 = arith.constant 1 : index
    %c16_205 = arith.constant 16 : index
    %c0_206 = arith.constant 0 : index
    %192 = vector.load %arg11[%c1_204, %c16_205, %c0_206] : memref<2x56x128xbf16, #tpu.memory_space<vmem>>, vector<1x40x128xbf16>
    %193 = vector.shape_cast %192 : vector<1x40x128xbf16> to vector<40x128xbf16>
    %c1_207 = arith.constant 1 : index
    %c0_208 = arith.constant 0 : index
    %c512_209 = arith.constant 512 : index
    %194 = vector.load %arg10[%c1_207, %c0_208, %c512_209] : memref<2x40x640xbf16, #tpu.memory_space<vmem>>, vector<1x40x128xbf16>
    %195 = vector.shape_cast %194 : vector<1x40x128xbf16> to vector<40x128xbf16>
    %196 = vector.shape_cast %193 : vector<40x128xbf16> to vector<1x40x128xbf16>
    tpu.vector_store %arg10[%c1_207, %c0_208, %c512_209], %196 {strides = array<i32>} : memref<2x40x640xbf16, #tpu.memory_space<vmem>>, vector<1x40x128xbf16>,
    %c0_210 = arith.constant 0 : index
    %c0_211 = arith.constant 0 : index
    %c0_212 = arith.constant 0 : index
    %197 = vector.load %arg10[%c0_210, %c0_211, %c0_212] : memref<2x40x640xbf16, #tpu.memory_space<vmem>>, vector<1x40x640xbf16>
    %198 = vector.shape_cast %197 : vector<1x40x640xbf16> to vector<40x640xbf16>
    %c0_213 = arith.constant 0 : index
    %c0_214 = arith.constant 0 : index
    %199 = vector.load %arg3[%c0_213, %c0_214] : memref<640x160xbf16, #tpu.memory_space<vmem>>, vector<640x160xbf16>
    %cst_215 = arith.constant dense<0.000000e+00> : vector<40x160xf32>
    %200 = tpu.matmul %198, %199, %cst_215 {dimension_numbers = #tpu.dot_dimension_numbers<[1], [0], [0], [1], [0, 0, 1, 1], [], []>} : vector<40x640xbf16>, vector<640x160xbf16>, vector<40x160xf32> -> vector<40x160xf32>
    %c1_216 = arith.constant 1 : index
    %c0_217 = arith.constant 0 : index
    %c0_218 = arith.constant 0 : index
    %201 = vector.load %arg10[%c1_216, %c0_217, %c0_218] : memref<2x40x640xbf16, #tpu.memory_space<vmem>>, vector<1x40x640xbf16>
    %202 = vector.shape_cast %201 : vector<1x40x640xbf16> to vector<40x640xbf16>
    %c0_219 = arith.constant 0 : index
    %c0_220 = arith.constant 0 : index
    %203 = vector.load %arg3[%c0_219, %c0_220] : memref<640x160xbf16, #tpu.memory_space<vmem>>, vector<640x160xbf16>
    %cst_221 = arith.constant dense<0.000000e+00> : vector<40x160xf32>
    %204 = tpu.matmul %202, %203, %cst_221 {dimension_numbers = #tpu.dot_dimension_numbers<[1], [0], [0], [1], [0, 0, 1, 1], [], []>} : vector<40x640xbf16>, vector<640x160xbf16>, vector<40x160xf32> -> vector<40x160xf32>
    %205 = arith.maximumf %200, %204 : vector<40x160xf32>
    %206 = vector.extract_strided_slice %205 {offsets = [0, 0], sizes = [40, 80], strides = [1, 1]} : vector<40x160xf32> to vector<40x80xf32>
    %207 = vector.extract_strided_slice %205 {offsets = [0, 80], sizes = [40, 80], strides = [1, 1]} : vector<40x160xf32> to vector<40x80xf32>
    %208 = arith.maximumf %206, %207 : vector<40x80xf32>
    %209 = vector.broadcast %1 : vector<1x80xf32> to vector<40x80xf32>
    %210 = arith.addf %208, %209 : vector<40x80xf32>
    %cst_222 = arith.constant 0.000000e+00 : f32
    %211 = vector.broadcast %cst_222 : f32 to vector<40x80xf32>
    %212 = arith.maximumf %210, %211 : vector<40x80xf32>
    %cst_223 = arith.constant 0.000000e+00 : f32
    %213 = vector.broadcast %cst_223 : f32 to vector<8x120xf32>
    %214 = vector.extract_strided_slice %212 {offsets = [0, 0], sizes = [8, 80], strides = [1, 1]} : vector<40x80xf32> to vector<8x80xf32>
    %215 = arith.truncf %214 : vector<8x80xf32> to vector<8x80xbf16>
    %c0_224 = arith.constant 0 : index
    %c0_225 = arith.constant 0 : index
    %c0_226 = arith.constant 0 : index
    %216 = vector.load %arg4[%c0_224, %c0_225, %c0_226] : memref<5x80x120xbf16, #tpu.memory_space<vmem>>, vector<1x80x120xbf16>
    %217 = vector.shape_cast %216 : vector<1x80x120xbf16> to vector<80x120xbf16>
    %cst_227 = arith.constant dense<0.000000e+00> : vector<8x120xf32>
    %218 = tpu.matmul %215, %217, %cst_227 {dimension_numbers = #tpu.dot_dimension_numbers<[1], [0], [0], [1], [0, 0, 1, 1], [], []>} : vector<8x80xbf16>, vector<80x120xbf16>, vector<8x120xf32> -> vector<8x120xf32>
    %219 = arith.addf %213, %218 : vector<8x120xf32>
    %220 = vector.extract_strided_slice %212 {offsets = [8, 0], sizes = [8, 80], strides = [1, 1]} : vector<40x80xf32> to vector<8x80xf32>
    %221 = arith.truncf %220 : vector<8x80xf32> to vector<8x80xbf16>
    %c1_228 = arith.constant 1 : index
    %c0_229 = arith.constant 0 : index
    %c0_230 = arith.constant 0 : index
    %222 = vector.load %arg4[%c1_228, %c0_229, %c0_230] : memref<5x80x120xbf16, #tpu.memory_space<vmem>>, vector<1x80x120xbf16>
    %223 = vector.shape_cast %222 : vector<1x80x120xbf16> to vector<80x120xbf16>
    %cst_231 = arith.constant dense<0.000000e+00> : vector<8x120xf32>
    %224 = tpu.matmul %221, %223, %cst_231 {dimension_numbers = #tpu.dot_dimension_numbers<[1], [0], [0], [1], [0, 0, 1, 1], [], []>} : vector<8x80xbf16>, vector<80x120xbf16>, vector<8x120xf32> -> vector<8x120xf32>
    %225 = arith.addf %219, %224 : vector<8x120xf32>
    %226 = vector.extract_strided_slice %212 {offsets = [16, 0], sizes = [8, 80], strides = [1, 1]} : vector<40x80xf32> to vector<8x80xf32>
    %227 = arith.truncf %226 : vector<8x80xf32> to vector<8x80xbf16>
    %c2_232 = arith.constant 2 : index
    %c0_233 = arith.constant 0 : index
    %c0_234 = arith.constant 0 : index
    %228 = vector.load %arg4[%c2_232, %c0_233, %c0_234] : memref<5x80x120xbf16, #tpu.memory_space<vmem>>, vector<1x80x120xbf16>
    %229 = vector.shape_cast %228 : vector<1x80x120xbf16> to vector<80x120xbf16>
    %cst_235 = arith.constant dense<0.000000e+00> : vector<8x120xf32>
    %230 = tpu.matmul %227, %229, %cst_235 {dimension_numbers = #tpu.dot_dimension_numbers<[1], [0], [0], [1], [0, 0, 1, 1], [], []>} : vector<8x80xbf16>, vector<80x120xbf16>, vector<8x120xf32> -> vector<8x120xf32>
    %231 = arith.addf %225, %230 : vector<8x120xf32>
    %232 = vector.extract_strided_slice %212 {offsets = [24, 0], sizes = [8, 80], strides = [1, 1]} : vector<40x80xf32> to vector<8x80xf32>
    %233 = arith.truncf %232 : vector<8x80xf32> to vector<8x80xbf16>
    %c3_236 = arith.constant 3 : index
    %c0_237 = arith.constant 0 : index
    %c0_238 = arith.constant 0 : index
    %234 = vector.load %arg4[%c3_236, %c0_237, %c0_238] : memref<5x80x120xbf16, #tpu.memory_space<vmem>>, vector<1x80x120xbf16>
    %235 = vector.shape_cast %234 : vector<1x80x120xbf16> to vector<80x120xbf16>
    %cst_239 = arith.constant dense<0.000000e+00> : vector<8x120xf32>
    %236 = tpu.matmul %233, %235, %cst_239 {dimension_numbers = #tpu.dot_dimension_numbers<[1], [0], [0], [1], [0, 0, 1, 1], [], []>} : vector<8x80xbf16>, vector<80x120xbf16>, vector<8x120xf32> -> vector<8x120xf32>
    %237 = arith.addf %231, %236 : vector<8x120xf32>
    %238 = vector.extract_strided_slice %212 {offsets = [32, 0], sizes = [8, 80], strides = [1, 1]} : vector<40x80xf32> to vector<8x80xf32>
    %239 = arith.truncf %238 : vector<8x80xf32> to vector<8x80xbf16>
    %c4_240 = arith.constant 4 : index
    %c0_241 = arith.constant 0 : index
    %c0_242 = arith.constant 0 : index
    %240 = vector.load %arg4[%c4_240, %c0_241, %c0_242] : memref<5x80x120xbf16, #tpu.memory_space<vmem>>, vector<1x80x120xbf16>
    %241 = vector.shape_cast %240 : vector<1x80x120xbf16> to vector<80x120xbf16>
    %cst_243 = arith.constant dense<0.000000e+00> : vector<8x120xf32>
    %242 = tpu.matmul %239, %241, %cst_243 {dimension_numbers = #tpu.dot_dimension_numbers<[1], [0], [0], [1], [0, 0, 1, 1], [], []>} : vector<8x80xbf16>, vector<80x120xbf16>, vector<8x120xf32> -> vector<8x120xf32>
    %243 = arith.addf %237, %242 : vector<8x120xf32>
    %244 = vector.broadcast %2 : vector<1x120xf32> to vector<8x120xf32>
    %245 = arith.addf %243, %244 : vector<8x120xf32>
    %cst_244 = arith.constant 0.000000e+00 : f32
    %246 = vector.broadcast %cst_244 : f32 to vector<8x120xf32>
    %247 = arith.maximumf %245, %246 : vector<8x120xf32>
    %248 = arith.truncf %247 : vector<8x120xf32> to vector<8x120xbf16>
    %c0_245 = arith.constant 0 : index
    %c0_246 = arith.constant 0 : index
    %249 = vector.load %arg5[%c0_245, %c0_246] : memref<120x84xbf16, #tpu.memory_space<vmem>>, vector<120x84xbf16>
    %cst_247 = arith.constant dense<0.000000e+00> : vector<8x84xf32>
    %250 = tpu.matmul %248, %249, %cst_247 {dimension_numbers = #tpu.dot_dimension_numbers<[1], [0], [0], [1], [0, 0, 1, 1], [], []>} : vector<8x120xbf16>, vector<120x84xbf16>, vector<8x84xf32> -> vector<8x84xf32>
    %251 = vector.broadcast %3 : vector<1x84xf32> to vector<8x84xf32>
    %252 = arith.addf %250, %251 : vector<8x84xf32>
    %cst_248 = arith.constant 0.000000e+00 : f32
    %253 = vector.broadcast %cst_248 : f32 to vector<8x84xf32>
    %254 = arith.maximumf %252, %253 : vector<8x84xf32>
    %255 = arith.truncf %254 : vector<8x84xf32> to vector<8x84xbf16>
    %c0_249 = arith.constant 0 : index
    %c0_250 = arith.constant 0 : index
    %256 = vector.load %arg6[%c0_249, %c0_250] : memref<84x128xbf16, #tpu.memory_space<vmem>>, vector<84x128xbf16>
    %cst_251 = arith.constant dense<0.000000e+00> : vector<8x128xf32>
    %257 = tpu.matmul %255, %256, %cst_251 {dimension_numbers = #tpu.dot_dimension_numbers<[1], [0], [0], [1], [0, 0, 1, 1], [], []>} : vector<8x84xbf16>, vector<84x128xbf16>, vector<8x128xf32> -> vector<8x128xf32>
    %258 = vector.broadcast %4 : vector<1x128xf32> to vector<8x128xf32>
    %259 = arith.addf %257, %258 : vector<8x128xf32>
    %cst_252 = arith.constant 0.000000e+00 : f32
    %260 = vector.broadcast %cst_252 : f32 to vector<8x128xf32>
    %261 = arith.maximumf %259, %260 : vector<8x128xf32>
    %262 = tpu.iota {dimensions = array<i32: 1>} : vector<8x128xi32>
    %c10_i32 = arith.constant 10 : i32
    %263 = vector.broadcast %c10_i32 : i32 to vector<8x128xi32>
    %264 = arith.cmpi slt, %262, %263 : vector<8x128xi32>
    %cst_253 = arith.constant -1.000000e+30 : f32
    %265 = vector.broadcast %cst_253 : f32 to vector<8x128xf32>
    %266 = arith.select %264, %261, %265 : vector<8x128xi1>, vector<8x128xf32>
    %cst_254 = arith.constant dense<0xFF800000> : vector<8xf32>
    %267 = vector.multi_reduction <maximumf>, %266, %cst_254 [1] : vector<8x128xf32> to vector<8xf32>
    %268 = vector.shape_cast %267 : vector<8xf32> to vector<8x1xf32>
    %269 = vector.broadcast %268 : vector<8x1xf32> to vector<8x128xf32>
    %270 = arith.subf %266, %269 : vector<8x128xf32>
    %271 = math.exp %270 : vector<8x128xf32>
    %cst_255 = arith.constant dense<0.000000e+00> : vector<8xf32>
    %272 = vector.multi_reduction <add>, %271, %cst_255 [1] : vector<8x128xf32> to vector<8xf32>
    %273 = vector.shape_cast %272 : vector<8xf32> to vector<8x1xf32>
    %274 = math.log %273 : vector<8x1xf32>
    %275 = vector.broadcast %274 : vector<8x1xf32> to vector<8x128xf32>
    %276 = arith.subf %270, %275 : vector<8x128xf32>
    %c0_256 = arith.constant 0 : index
    %c0_257 = arith.constant 0 : index
    %277 = vector.load %arg8[%c0_256, %c0_257] : memref<8x128xf32, #tpu.memory_space<vmem>>, vector<8x128xf32>
    tpu.vector_store %arg8[%c0_256, %c0_257], %276 {strides = array<i32>} : memref<8x128xf32, #tpu.memory_space<vmem>>, vector<8x128xf32>,
    return
  }
  func.func @transform_0(%arg0: i32) -> (i32, i32, i32) {
    %c0_i32 = arith.constant 0 : i32
    %c0_i32_0 = arith.constant 0 : i32
    %c0_i32_1 = arith.constant 0 : i32
    return %c0_i32, %arg0, %c0_i32_0 : i32, i32, i32
  }
  func.func @transform_1(%arg0: i32) -> (i32, i32) {
    %c0_i32 = arith.constant 0 : i32
    %c0_i32_0 = arith.constant 0 : i32
    %c0_i32_1 = arith.constant 0 : i32
    return %c0_i32, %c0_i32_0 : i32, i32
  }
  func.func @transform_2(%arg0: i32) -> (i32, i32) {
    %c0_i32 = arith.constant 0 : i32
    %c0_i32_0 = arith.constant 0 : i32
    %c0_i32_1 = arith.constant 0 : i32
    return %c0_i32, %c0_i32_0 : i32, i32
  }
  func.func @transform_3(%arg0: i32) -> (i32, i32, i32) {
    %c0_i32 = arith.constant 0 : i32
    %c0_i32_0 = arith.constant 0 : i32
    %c0_i32_1 = arith.constant 0 : i32
    %c0_i32_2 = arith.constant 0 : i32
    return %c0_i32, %c0_i32_0, %c0_i32_1 : i32, i32, i32
  }
  func.func @transform_4(%arg0: i32) -> (i32, i32) {
    %c0_i32 = arith.constant 0 : i32
    %c0_i32_0 = arith.constant 0 : i32
    %c0_i32_1 = arith.constant 0 : i32
    return %c0_i32, %c0_i32_0 : i32, i32
  }
  func.func @transform_5(%arg0: i32) -> (i32, i32) {
    %c0_i32 = arith.constant 0 : i32
    %c0_i32_0 = arith.constant 0 : i32
    %c0_i32_1 = arith.constant 0 : i32
    return %c0_i32, %c0_i32_0 : i32, i32
  }
  func.func @transform_6(%arg0: i32) -> (i32, i32) {
    %c0_i32 = arith.constant 0 : i32
    %c0_i32_0 = arith.constant 0 : i32
    %c0_i32_1 = arith.constant 0 : i32
    return %c0_i32, %c0_i32_0 : i32, i32
  }
  func.func @transform_7(%arg0: i32) -> (i32, i32) {
    %c0_i32 = arith.constant 0 : i32
    %c0_i32_0 = arith.constant 0 : i32
    return %arg0, %c0_i32 : i32, i32
  }
}

</mosaic_0001>

<llo_original>
// kernel: net_forward.1
$region0: #{net_forward.1}
  #allocation0 [shape = 'u32[]', space=smem, size = 0x4, offset = 0x4, fixed_abs, tag = 'smem constant byte address 0x4 - core index']
  #allocation1 [shape = 'u32[72,128]{1,0:T(1,128)}', space=vmem, size = 0x9000, scoped, tag = 'internal scratch']
  #allocation2 [shape = 'bf16[4,56,640]{2,1,0:T(8,128)(2,1)}', space=vmem, size = 0x46000, scoped, tag = 'scratch operand']
  #allocation3 [shape = 'bf16[2,40,640]{2,1,0:T(8,128)(2,1)}', space=vmem, size = 0x19000, scoped, tag = 'scratch operand']
  #allocation4 [shape = 'bf16[2,56,128]{2,1,0:T(8,128)(2,1)}', space=vmem, size = 0x7000, scoped, tag = 'scratch operand']
  %s0 = inlined_call_operand.vmem [shape: bf16[8,224,128], index: 0, kind: input, shape index: {}]
  %s1 = inlined_call_operand.vmem [shape: bf16[640,168], index: 1, kind: input, shape index: {}]
  %s2 = inlined_call_operand.vmem [shape: bf16[640,160], index: 2, kind: input, shape index: {}]
  %s3 = inlined_call_operand.vmem [shape: bf16[5,80,120], index: 3, kind: input, shape index: {}]
  %s4 = inlined_call_operand.vmem [shape: bf16[120,84], index: 4, kind: input, shape index: {}]
  %s5 = inlined_call_operand.vmem [shape: bf16[84,128], index: 5, kind: input, shape index: {}]
  %s6 = inlined_call_operand.vmem [shape: f32[8,128], index: 6, kind: input, shape index: {}]
  %s7 = inlined_call_operand.vmem [shape: f32[32,128], index: 7, kind: output, shape index: {}]
  %s8 = sld [smem:[#allocation0]]
  $region102: #{net_forward.1} parent=0
    _
  %s10 = ssub.s32 1, %s8
  %s11 = scalar_select 0, %s10, %s8
  $region1: #{net_forward.1} parent=0
    #allocation5 [shape = 'u8[229376]{0}', space=vmem, size = 0x38000, scoped, tag = 'input window, operand 0']
    loop: start=0, step=1, limit=6
    $region2: #{net_forward.1} parent=1 // loop_pre_header
      _
    $region3: #{net_forward.1} parent=1 // loop_header
      %s13 = sphi 0, %s17
      %p14 = scmp.ge.s32.totalorder %s13, 6
      %s23 = sphi 0, %s25
      %s26 = sphi 0, %s23
      %s27 = sphi 0, %s26
      %s43 = sphi 0, %s27
      %s47 = sphi 0, %s47
      %s49 = sphi 0, %s47
      %s50 = sphi 0, %s49
      %s64 = sphi 0, %s50
      %s68 = sphi 0, %s68
      %s70 = sphi 0, %s68
      %s71 = sphi 0, %s70
      %s85 = sphi 0, %s71
      %s89 = sphi 0, %s89
      %s91 = sphi 0, %s89
      %s92 = sphi 0, %s91
      %s106 = sphi 0, %s92
      %s110 = sphi 0, %s110
      %s112 = sphi 0, %s110
      %s113 = sphi 0, %s112
      %s127 = sphi 0, %s113
      %s131 = sphi 0, %s131
      %s133 = sphi 0, %s131
      %s134 = sphi 0, %s133
      %s148 = sphi 0, %s134
      %s152 = sphi 0, %s152
      %s154 = sphi 0, %s152
      %s155 = sphi 0, %s154
      %s169 = sphi 0, %s155
      %s175 = sphi 0, %s177
      %s178 = sphi 0, %s175
      %s179 = sphi 0, %s178
      %s195 = sphi 0, %s179
    $region4: #{net_forward.1} parent=1 // loop_header_branch
      %16 = sbr.rel (%p14) target = $region8
    $region5: #{net_forward.1} parent=1 // loop_body
      %s18 = ssub.s32 %s13, 1
      %s19 = ssub.s32 %s13, 2
      %s20 = sadd.s32 %s13, 1
      %s21 = ssub.s32 %s13, %s20
      %p22 = scmp.eq.s32.totalorder %s21, 0
      %s24 = sadd.s32 %s23, 1
      %s25 = scalar_select %p22, %s23, %s24
      %p28 = pneg %p22
      %p29 = scmp.eq.s32.totalorder %s13, 3
      %p30 = por %p28, %p29
      %p31 = scmp.ne.s32.totalorder %s23, %s26
      %p32 = scmp.eq.s32.totalorder %s13, 0
      %p33 = por %p31, %p32
      %p34 = scmp.ne.s32.totalorder %s23, %s26
      %p35 = scmp.eq.s32.totalorder %s18, 3
      %p36 = por %p34, %p35
      %p37 = scmp.ne.s32.totalorder %s26, %s27
      %p38 = scmp.eq.s32.totalorder %s18, 0
      %p39 = por %p37, %p38
      %p40 = scmp.ne.s32.totalorder %s26, %s27
      %p41 = scmp.eq.s32.totalorder %s19, 3
      %p42 = por %p40, %p41
      %p44 = scmp.ne.s32.totalorder %s27, %s43
      %p45 = scmp.eq.s32.totalorder %s19, 0
      %p46 = por %p44, %p45
      %s48 = sadd.s32 %s47, 1
      %p51 = scmp.eq.s32.totalorder %s13, 3
      %p52 = scmp.ne.s32.totalorder %s47, %s49
      %p53 = scmp.eq.s32.totalorder %s13, 0
      %p54 = por %p52, %p53
      %p55 = scmp.ne.s32.totalorder %s47, %s49
      %p56 = scmp.eq.s32.totalorder %s18, 3
      %p57 = por %p55, %p56
      %p58 = scmp.ne.s32.totalorder %s49, %s50
      %p59 = scmp.eq.s32.totalorder %s18, 0
      %p60 = por %p58, %p59
      %p61 = scmp.ne.s32.totalorder %s49, %s50
      %p62 = scmp.eq.s32.totalorder %s19, 3
      %p63 = por %p61, %p62
      %p65 = scmp.ne.s32.totalorder %s50, %s64
      %p66 = scmp.eq.s32.totalorder %s19, 0
      %p67 = por %p65, %p66
      %s69 = sadd.s32 %s68, 1
      %p72 = scmp.eq.s32.totalorder %s13, 3
      %p73 = scmp.ne.s32.totalorder %s68, %s70
      %p74 = scmp.eq.s32.totalorder %s13, 0
      %p75 = por %p73, %p74
      %p76 = scmp.ne.s32.totalorder %s68, %s70
      %p77 = scmp.eq.s32.totalorder %s18, 3
      %p78 = por %p76, %p77
      %p79 = scmp.ne.s32.totalorder %s70, %s71
      %p80 = scmp.eq.s32.totalorder %s18, 0
      %p81 = por %p79, %p80
      %p82 = scmp.ne.s32.totalorder %s70, %s71
      %p83 = scmp.eq.s32.totalorder %s19, 3
      %p84 = por %p82, %p83
      %p86 = scmp.ne.s32.totalorder %s71, %s85
      %p87 = scmp.eq.s32.totalorder %s19, 0
      %p88 = por %p86, %p87
      %s90 = sadd.s32 %s89, 1
      %p93 = scmp.eq.s32.totalorder %s13, 3
      %p94 = scmp.ne.s32.totalorder %s89, %s91
      %p95 = scmp.eq.s32.totalorder %s13, 0
      %p96 = por %p94, %p95
      %p97 = scmp.ne.s32.totalorder %s89, %s91
      %p98 = scmp.eq.s32.totalorder %s18, 3
      %p99 = por %p97, %p98
      %p100 = scmp.ne.s32.totalorder %s91, %s92
      %p101 = scmp.eq.s32.totalorder %s18, 0
      %p102 = por %p100, %p101
      %p103 = scmp.ne.s32.totalorder %s91, %s92
      %p104 = scmp.eq.s32.totalorder %s19, 3
      %p105 = por %p103, %p104
      %p107 = scmp.ne.s32.totalorder %s92, %s106
      %p108 = scmp.eq.s32.totalorder %s19, 0
      %p109 = por %p107, %p108
      %s111 = sadd.s32 %s110, 1
      %p114 = scmp.eq.s32.totalorder %s13, 3
      %p115 = scmp.ne.s32.totalorder %s110, %s112
      %p116 = scmp.eq.s32.totalorder %s13, 0
      %p117 = por %p115, %p116
      %p118 = scmp.ne.s32.totalorder %s110, %s112
      %p119 = scmp.eq.s32.totalorder %s18, 3
      %p120 = por %p118, %p119
      %p121 = scmp.ne.s32.totalorder %s112, %s113
      %p122 = scmp.eq.s32.totalorder %s18, 0
      %p123 = por %p121, %p122
      %p124 = scmp.ne.s32.totalorder %s112, %s113
      %p125 = scmp.eq.s32.totalorder %s19, 3
      %p126 = por %p124, %p125
      %p128 = scmp.ne.s32.totalorder %s113, %s127
      %p129 = scmp.eq.s32.totalorder %s19, 0
      %p130 = por %p128, %p129
      %s132 = sadd.s32 %s131, 1
      %p135 = scmp.eq.s32.totalorder %s13, 3
      %p136 = scmp.ne.s32.totalorder %s131, %s133
      %p137 = scmp.eq.s32.totalorder %s13, 0
      %p138 = por %p136, %p137
      %p139 = scmp.ne.s32.totalorder %s131, %s133
      %p140 = scmp.eq.s32.totalorder %s18, 3
      %p141 = por %p139, %p140
      %p142 = scmp.ne.s32.totalorder %s133, %s134
      %p143 = scmp.eq.s32.totalorder %s18, 0
      %p144 = por %p142, %p143
      %p145 = scmp.ne.s32.totalorder %s133, %s134
      %p146 = scmp.eq.s32.totalorder %s19, 3
      %p147 = por %p145, %p146
      %p149 = scmp.ne.s32.totalorder %s134, %s148
      %p150 = scmp.eq.s32.totalorder %s19, 0
      %p151 = por %p149, %p150
      %s153 = sadd.s32 %s152, 1
      %p156 = scmp.eq.s32.totalorder %s13, 3
      %p157 = scmp.ne.s32.totalorder %s152, %s154
      %p158 = scmp.eq.s32.totalorder %s13, 0
      %p159 = por %p157, %p158
      %p160 = scmp.ne.s32.totalorder %s152, %s154
      %p161 = scmp.eq.s32.totalorder %s18, 3
      %p162 = por %p160, %p161
      %p163 = scmp.ne.s32.totalorder %s154, %s155
      %p164 = scmp.eq.s32.totalorder %s18, 0
      %p165 = por %p163, %p164
      %p166 = scmp.ne.s32.totalorder %s154, %s155
      %p167 = scmp.eq.s32.totalorder %s19, 3
      %p168 = por %p166, %p167
      %p170 = scmp.ne.s32.totalorder %s155, %s169
      %p171 = scmp.eq.s32.totalorder %s19, 0
      %p172 = por %p170, %p171
      %s173 = ssub.s32 %s13, %s20
      %p174 = scmp.eq.s32.totalorder %s173, 0
      %s176 = sadd.s32 %s175, 1
      %s177 = scalar_select %p174, %s175, %s176
      %p180 = pneg %p174
      %p181 = scmp.eq.s32.totalorder %s13, 3
      %p182 = por %p180, %p181
      %p183 = scmp.ne.s32.totalorder %s175, %s178
      %p184 = scmp.eq.s32.totalorder %s13, 0
      %p185 = por %p183, %p184
      %p186 = scmp.ne.s32.totalorder %s175, %s178
      %p187 = scmp.eq.s32.totalorder %s18, 3
      %p188 = por %p186, %p187
      %p189 = scmp.ne.s32.totalorder %s178, %s179
      %p190 = scmp.eq.s32.totalorder %s18, 0
      %p191 = por %p189, %p190
      %p192 = scmp.ne.s32.totalorder %s178, %s179
      %p193 = scmp.eq.s32.totalorder %s19, 3
      %p194 = por %p192, %p193
      %p196 = scmp.ne.s32.totalorder %s179, %s195
      %p197 = scmp.eq.s32.totalorder %s19, 0
      %p198 = por %p196, %p197
      %p199 = scmp.le.s32.totalorder 1, %s13
      %p200 = scmp.lt.s32.totalorder %s13, 5
      %p201 = pnand %p199, %p200
      %p202 = pneg %p201
      // Predicated region
      $region9: #{net_forward.1} parent=5 // pred_check
        _
      $region10: #{net_forward.1} parent=5 // pred_check_branch
        %204 = sbr.rel (%p201) target = $region12
      $region11: #{net_forward.1} parent=5 // pred_region
        %s205 = ssub.s32 %s13, 1
        // Predicated region
        $region13: #{net_forward.1} parent=11 // pred_check
          %p206 = pneg %p60
        $region14: #{net_forward.1} parent=11 // pred_check_branch
          %208 = sbr.rel (%p206) target = $region16
        $region15: #{net_forward.1} parent=11 // pred_region
          _
        $region16: #{net_forward.1} parent=11 // pred_fallthru
          _
        // Predicated region
        $region17: #{net_forward.1} parent=11 // pred_check
          %p209 = pneg %p81
        $region18: #{net_forward.1} parent=11 // pred_check_branch
          %211 = sbr.rel (%p209) target = $region20
        $region19: #{net_forward.1} parent=11 // pred_region
          _
        $region20: #{net_forward.1} parent=11 // pred_fallthru
          _
        // Predicated region
        $region21: #{net_forward.1} parent=11 // pred_check
          %p212 = pneg %p102
        $region22: #{net_forward.1} parent=11 // pred_check_branch
          %214 = sbr.rel (%p212) target = $region24
        $region23: #{net_forward.1} parent=11 // pred_region
          _
        $region24: #{net_forward.1} parent=11 // pred_fallthru
          _
        // Predicated region
        $region25: #{net_forward.1} parent=11 // pred_check
          %p215 = pneg %p123
        $region26: #{net_forward.1} parent=11 // pred_check_branch
          %217 = sbr.rel (%p215) target = $region28
        $region27: #{net_forward.1} parent=11 // pred_region
          _
        $region28: #{net_forward.1} parent=11 // pred_fallthru
          _
        // Predicated region
        $region29: #{net_forward.1} parent=11 // pred_check
          %p218 = pneg %p144
        $region30: #{net_forward.1} parent=11 // pred_check_branch
          %220 = sbr.rel (%p218) target = $region32
        $region31: #{net_forward.1} parent=11 // pred_region
          _
        $region32: #{net_forward.1} parent=11 // pred_fallthru
          _
        // Predicated region
        $region33: #{net_forward.1} parent=11 // pred_check
          %p221 = pneg %p165
        $region34: #{net_forward.1} parent=11 // pred_check_branch
          %223 = sbr.rel (%p221) target = $region36
        $region35: #{net_forward.1} parent=11 // pred_region
          _
        $region36: #{net_forward.1} parent=11 // pred_fallthru
          _
      $region12: #{net_forward.1} parent=5 // pred_fallthru
        _
      %p224 = scmp.lt.s32.totalorder %s13, 4
      // Predicated region
      $region37: #{net_forward.1} parent=5 // pred_check
        %p225 = pneg %p224
      $region38: #{net_forward.1} parent=5 // pred_check_branch
        %227 = sbr.rel (%p225) target = $region40
      $region39: #{net_forward.1} parent=5 // pred_region
        // Predicated region
        $region41: #{net_forward.1} parent=39 // pred_check
          %p228 = pneg %p33
        $region42: #{net_forward.1} parent=39 // pred_check_branch
          %230 = sbr.rel (%p228) target = $region44
        $region43: #{net_forward.1} parent=39 // pred_region
          %s231 = sand.u32 %s23, 1
          %s232 = sand.u32 %s23, 1
          %s233 = smul.addr %s232, 224
          %s234 = scalar_lea.vmem [#allocation5], %s233
          %s235 = smul.u32 7, %s13
          %s236 = smul.addr %s235, 4
          %s237 = scalar_lea.vmem %s0, %s236
          // Predicated region
          $region45: #{net_forward.1} parent=43 // pred_check
            _
          $region46: #{net_forward.1} parent=43 // pred_check_branch
            %239 = sbr.rel (0) target = $region48
          $region47: #{net_forward.1} parent=43 // pred_region
            // Predicated region
            $region49: #{net_forward.1} parent=47 // pred_check
              _
            $region50: #{net_forward.1} parent=47 // pred_check_branch
              %241 = sbr.rel target = $region52
            $region51: #{net_forward.1} parent=47 // pred_region
              // Predicated region
              $region64: #{net_forward.1} parent=51 // pred_check
                _
              $region65: #{net_forward.1} parent=51 // pred_check_branch
                %367 = sbr.rel (0) target = $region67
              $region66: #{net_forward.1} parent=51 // pred_region
                loop: start=0, step=1, limit=1
                $region68: #{net_forward.1} parent=66 // loop_pre_header
                  _
                $region69: #{net_forward.1} parent=66 // loop_header
                  %s369 = sphi 0, %s373
                  %p370 = scmp.ge.s32.totalorder %s369, 1
                  %s374 = sphi %s237, %s237
                  %s375 = sphi %s234, %s234
                $region70: #{net_forward.1} parent=66 // loop_header_branch
                  %372 = sbr.rel (%p370) target = $region74
                $region71: #{net_forward.1} parent=66 // loop_body
                  _
                $region72: #{net_forward.1} parent=66 // loop_footer
                  %s373 = sadd.s32 1, %s369
                $region73: #{net_forward.1} parent=66 // loop_footer_branch
                  %368 = sbr.rel target = $region69
                $region74: #{net_forward.1} parent=66 // loop_exit
                  _
                %s377 = ssub.s32 16, 1
                loop: start=0, step=1, limit=1
                $region75: #{net_forward.1} parent=66 // loop_pre_header
                  _
                $region76: #{net_forward.1} parent=66 // loop_header
                  %s379 = sphi 0, %s383
                  %p380 = scmp.ge.s32.totalorder %s379, 1
                  %s384 = sphi %s237, %s237
                  %s385 = sphi %s234, %s234
                $region77: #{net_forward.1} parent=66 // loop_header_branch
                  %382 = sbr.rel (%p380) target = $region81
                $region78: #{net_forward.1} parent=66 // loop_body
                  %v386 = vld [vmem:[%s384] sm:%s377]
                  %387 = vst [vmem:[%s385] sm:%s377] %v386
                  %v388 = vld [vmem:[%s384 + $0x4] sm:%s377]
                  %389 = vst [vmem:[%s385 + $0x4] sm:%s377] %v388
                  %v390 = vld [vmem:[%s384 + $0x8] sm:%s377]
                  %391 = vst [vmem:[%s385 + $0x8] sm:%s377] %v390
                  %v392 = vld [vmem:[%s384 + $0xc] sm:%s377]
                  %393 = vst [vmem:[%s385 + $0xc] sm:%s377] %v392
                  %v394 = vld [vmem:[%s384 + $0x10] sm:%s377]
                  %395 = vst [vmem:[%s385 + $0x10] sm:%s377] %v394
                  %v396 = vld [vmem:[%s384 + $0x14] sm:%s377]
                  %397 = vst [vmem:[%s385 + $0x14] sm:%s377] %v396
                  %v398 = vld [vmem:[%s384 + $0x18] sm:%s377]
                  %399 = vst [vmem:[%s385 + $0x18] sm:%s377] %v398
                  %v400 = vld [vmem:[%s384 + $0x70] sm:%s377]
                  %401 = vst [vmem:[%s385 + $0x1c] sm:%s377] %v400
                  %v402 = vld [vmem:[%s384 + $0x74] sm:%s377]
                  %403 = vst [vmem:[%s385 + $0x20] sm:%s377] %v402
                  %v404 = vld [vmem:[%s384 + $0x78] sm:%s377]
                  %405 = vst [vmem:[%s385 + $0x24] sm:%s377] %v404
                  %v406 = vld [vmem:[%s384 + $0x7c] sm:%s377]
                  %407 = vst [vmem:[%s385 + $0x28] sm:%s377] %v406
                  %v408 = vld [vmem:[%s384 + $0x80] sm:%s377]
                  %409 = vst [vmem:[%s385 + $0x2c] sm:%s377] %v408
                  %v410 = vld [vmem:[%s384 + $0x84] sm:%s377]
                  %411 = vst [vmem:[%s385 + $0x30] sm:%s377] %v410
                  %v412 = vld [vmem:[%s384 + $0x88] sm:%s377]
                  %413 = vst [vmem:[%s385 + $0x34] sm:%s377] %v412
                  %v414 = vld [vmem:[%s384 + $0xe0] sm:%s377]
                  %415 = vst [vmem:[%s385 + $0x38] sm:%s377] %v414
                  %v416 = vld [vmem:[%s384 + $0xe4] sm:%s377]
                  %417 = vst [vmem:[%s385 + $0x3c] sm:%s377] %v416
                  %v418 = vld [vmem:[%s384 + $0xe8] sm:%s377]
                  %419 = vst [vmem:[%s385 + $0x40] sm:%s377] %v418
                  %v420 = vld [vmem:[%s384 + $0xec] sm:%s377]
                  %421 = vst [vmem:[%s385 + $0x44] sm:%s377] %v420
                  %v422 = vld [vmem:[%s384 + $0xf0] sm:%s377]
                  %423 = vst [vmem:[%s385 + $0x48] sm:%s377] %v422
                  %v424 = vld [vmem:[%s384 + $0xf4] sm:%s377]
                  %425 = vst [vmem:[%s385 + $0x4c] sm:%s377] %v424
                  %v426 = vld [vmem:[%s384 + $0xf8] sm:%s377]
                  %427 = vst [vmem:[%s385 + $0x50] sm:%s377] %v426
                  %v428 = vld [vmem:[%s384 + $0x150] sm:%s377]
                  %429 = vst [vmem:[%s385 + $0x54] sm:%s377] %v428
                  %v430 = vld [vmem:[%s384 + $0x154] sm:%s377]
                  %431 = vst [vmem:[%s385 + $0x58] sm:%s377] %v430
                  %v432 = vld [vmem:[%s384 + $0x158] sm:%s377]
                  %433 = vst [vmem:[%s385 + $0x5c] sm:%s377] %v432
                  %v434 = vld [vmem:[%s384 + $0x15c] sm:%s377]
                  %435 = vst [vmem:[%s385 + $0x60] sm:%s377] %v434
                  %v436 = vld [vmem:[%s384 + $0x160] sm:%s377]
                  %437 = vst [vmem:[%s385 + $0x64] sm:%s377] %v436
                  %v438 = vld [vmem:[%s384 + $0x164] sm:%s377]
                  %439 = vst [vmem:[%s385 + $0x68] sm:%s377] %v438
                  %v440 = vld [vmem:[%s384 + $0x168] sm:%s377]
                  %441 = vst [vmem:[%s385 + $0x6c] sm:%s377] %v440
                  %v442 = vld [vmem:[%s384 + $0x1c0] sm:%s377]
                  %443 = vst [vmem:[%s385 + $0x70] sm:%s377] %v442
                  %v444 = vld [vmem:[%s384 + $0x1c4] sm:%s377]
                  %445 = vst [vmem:[%s385 + $0x74] sm:%s377] %v444
                  %v446 = vld [vmem:[%s384 + $0x1c8] sm:%s377]
                  %447 = vst [vmem:[%s385 + $0x78] sm:%s377] %v446
                  %v448 = vld [vmem:[%s384 + $0x1cc] sm:%s377]
                  %449 = vst [vmem:[%s385 + $0x7c] sm:%s377] %v448
                  %v450 = vld [vmem:[%s384 + $0x1d0] sm:%s377]
                  %451 = vst [vmem:[%s385 + $0x80] sm:%s377] %v450
                  %v452 = vld [vmem:[%s384 + $0x1d4] sm:%s377]
                  %453 = vst [vmem:[%s385 + $0x84] sm:%s377] %v452
                  %v454 = vld [vmem:[%s384 + $0x1d8] sm:%s377]
                  %455 = vst [vmem:[%s385 + $0x88] sm:%s377] %v454
                  %v456 = vld [vmem:[%s384 + $0x230] sm:%s377]
                  %457 = vst [vmem:[%s385 + $0x8c] sm:%s377] %v456
                  %v458 = vld [vmem:[%s384 + $0x234] sm:%s377]
                  %459 = vst [vmem:[%s385 + $0x90] sm:%s377] %v458
                  %v460 = vld [vmem:[%s384 + $0x238] sm:%s377]
                  %461 = vst [vmem:[%s385 + $0x94] sm:%s377] %v460
                  %v462 = vld [vmem:[%s384 + $0x23c] sm:%s377]
                  %463 = vst [vmem:[%s385 + $0x98] sm:%s377] %v462
                  %v464 = vld [vmem:[%s384 + $0x240] sm:%s377]
                  %465 = vst [vmem:[%s385 + $0x9c] sm:%s377] %v464
                  %v466 = vld [vmem:[%s384 + $0x244] sm:%s377]
                  %467 = vst [vmem:[%s385 + $0xa0] sm:%s377] %v466
                  %v468 = vld [vmem:[%s384 + $0x248] sm:%s377]
                  %469 = vst [vmem:[%s385 + $0xa4] sm:%s377] %v468
                  %v470 = vld [vmem:[%s384 + $0x2a0] sm:%s377]
                  %471 = vst [vmem:[%s385 + $0xa8] sm:%s377] %v470
                  %v472 = vld [vmem:[%s384 + $0x2a4] sm:%s377]
                  %473 = vst [vmem:[%s385 + $0xac] sm:%s377] %v472
                  %v474 = vld [vmem:[%s384 + $0x2a8] sm:%s377]
                  %475 = vst [vmem:[%s385 + $0xb0] sm:%s377] %v474
                  %v476 = vld [vmem:[%s384 + $0x2ac] sm:%s377]
                  %477 = vst [vmem:[%s385 + $0xb4] sm:%s377] %v476
                  %v478 = vld [vmem:[%s384 + $0x2b0] sm:%s377]
                  %479 = vst [vmem:[%s385 + $0xb8] sm:%s377] %v478
                  %v480 = vld [vmem:[%s384 + $0x2b4] sm:%s377]
                  %481 = vst [vmem:[%s385 + $0xbc] sm:%s377] %v480
                  %v482 = vld [vmem:[%s384 + $0x2b8] sm:%s377]
                  %483 = vst [vmem:[%s385 + $0xc0] sm:%s377] %v482
                  %v484 = vld [vmem:[%s384 + $0x310] sm:%s377]
                  %485 = vst [vmem:[%s385 + $0xc4] sm:%s377] %v484
                  %v486 = vld [vmem:[%s384 + $0x314] sm:%s377]
                  %487 = vst [vmem:[%s385 + $0xc8] sm:%s377] %v486
                  %v488 = vld [vmem:[%s384 + $0x318] sm:%s377]
                  %489 = vst [vmem:[%s385 + $0xcc] sm:%s377] %v488
                  %v490 = vld [vmem:[%s384 + $0x31c] sm:%s377]
                  %491 = vst [vmem:[%s385 + $0xd0] sm:%s377] %v490
                  %v492 = vld [vmem:[%s384 + $0x320] sm:%s377]
                  %493 = vst [vmem:[%s385 + $0xd4] sm:%s377] %v492
                  %v494 = vld [vmem:[%s384 + $0x324] sm:%s377]
                  %495 = vst [vmem:[%s385 + $0xd8] sm:%s377] %v494
                  %v496 = vld [vmem:[%s384 + $0x328] sm:%s377]
                  %497 = vst [vmem:[%s385 + $0xdc] sm:%s377] %v496
                $region79: #{net_forward.1} parent=66 // loop_footer
                  %s383 = sadd.s32 1, %s379
                $region80: #{net_forward.1} parent=66 // loop_footer_branch
                  %378 = sbr.rel target = $region76
                $region81: #{net_forward.1} parent=66 // loop_exit
                  _
              $region67: #{net_forward.1} parent=51 // pred_fallthru
                _
            $region52: #{net_forward.1} parent=47 // pred_fallthru
              _
            // Predicated region
            $region53: #{net_forward.1} parent=47 // pred_check
              _
            $region54: #{net_forward.1} parent=47 // pred_check_branch
              %243 = sbr.rel (0) target = $region56
            $region55: #{net_forward.1} parent=47 // pred_region
              %s245 = ssub.s32 16, 1
              loop: start=0, step=1, limit=1
              $region57: #{net_forward.1} parent=55 // loop_pre_header
                _
              $region58: #{net_forward.1} parent=55 // loop_header
                %s247 = sphi 0, %s251
                %p248 = scmp.ge.s32.totalorder %s247, 1
                %s252 = sphi %s237, %s237
                %s253 = sphi %s234, %s234
              $region59: #{net_forward.1} parent=55 // loop_header_branch
                %250 = sbr.rel (%p248) target = $region63
              $region60: #{net_forward.1} parent=55 // loop_body
                %v254 = vld [vmem:[%s252] sm:%s245]
                %255 = vst [vmem:[%s253] sm:%s245] %v254
                %v256 = vld [vmem:[%s252 + $0x4] sm:%s245]
                %257 = vst [vmem:[%s253 + $0x4] sm:%s245] %v256
                %v258 = vld [vmem:[%s252 + $0x8] sm:%s245]
                %259 = vst [vmem:[%s253 + $0x8] sm:%s245] %v258
                %v260 = vld [vmem:[%s252 + $0xc] sm:%s245]
                %261 = vst [vmem:[%s253 + $0xc] sm:%s245] %v260
                %v262 = vld [vmem:[%s252 + $0x10] sm:%s245]
                %263 = vst [vmem:[%s253 + $0x10] sm:%s245] %v262
                %v264 = vld [vmem:[%s252 + $0x14] sm:%s245]
                %265 = vst [vmem:[%s253 + $0x14] sm:%s245] %v264
                %v266 = vld [vmem:[%s252 + $0x18] sm:%s245]
                %267 = vst [vmem:[%s253 + $0x18] sm:%s245] %v266
                %v268 = vld [vmem:[%s252 + $0x70] sm:%s245]
                %269 = vst [vmem:[%s253 + $0x1c] sm:%s245] %v268
                %v270 = vld [vmem:[%s252 + $0x74] sm:%s245]
                %271 = vst [vmem:[%s253 + $0x20] sm:%s245] %v270
                %v272 = vld [vmem:[%s252 + $0x78] sm:%s245]
                %273 = vst [vmem:[%s253 + $0x24] sm:%s245] %v272
                %v274 = vld [vmem:[%s252 + $0x7c] sm:%s245]
                %275 = vst [vmem:[%s253 + $0x28] sm:%s245] %v274
                %v276 = vld [vmem:[%s252 + $0x80] sm:%s245]
                %277 = vst [vmem:[%s253 + $0x2c] sm:%s245] %v276
                %v278 = vld [vmem:[%s252 + $0x84] sm:%s245]
                %279 = vst [vmem:[%s253 + $0x30] sm:%s245] %v278
                %v280 = vld [vmem:[%s252 + $0x88] sm:%s245]
                %281 = vst [vmem:[%s253 + $0x34] sm:%s245] %v280
                %v282 = vld [vmem:[%s252 + $0xe0] sm:%s245]
                %283 = vst [vmem:[%s253 + $0x38] sm:%s245] %v282
                %v284 = vld [vmem:[%s252 + $0xe4] sm:%s245]
                %285 = vst [vmem:[%s253 + $0x3c] sm:%s245] %v284
                %v286 = vld [vmem:[%s252 + $0xe8] sm:%s245]
                %287 = vst [vmem:[%s253 + $0x40] sm:%s245] %v286
                %v288 = vld [vmem:[%s252 + $0xec] sm:%s245]
                %289 = vst [vmem:[%s253 + $0x44] sm:%s245] %v288
                %v290 = vld [vmem:[%s252 + $0xf0] sm:%s245]
                %291 = vst [vmem:[%s253 + $0x48] sm:%s245] %v290
                %v292 = vld [vmem:[%s252 + $0xf4] sm:%s245]
                %293 = vst [vmem:[%s253 + $0x4c] sm:%s245] %v292
                %v294 = vld [vmem:[%s252 + $0xf8] sm:%s245]
                %295 = vst [vmem:[%s253 + $0x50] sm:%s245] %v294
                %v296 = vld [vmem:[%s252 + $0x150] sm:%s245]
                %297 = vst [vmem:[%s253 + $0x54] sm:%s245] %v296
                %v298 = vld [vmem:[%s252 + $0x154] sm:%s245]
                %299 = vst [vmem:[%s253 + $0x58] sm:%s245] %v298
                %v300 = vld [vmem:[%s252 + $0x158] sm:%s245]
                %301 = vst [vmem:[%s253 + $0x5c] sm:%s245] %v300
                %v302 = vld [vmem:[%s252 + $0x15c] sm:%s245]
                %303 = vst [vmem:[%s253 + $0x60] sm:%s245] %v302
                %v304 = vld [vmem:[%s252 + $0x160] sm:%s245]
                %305 = vst [vmem:[%s253 + $0x64] sm:%s245] %v304
                %v306 = vld [vmem:[%s252 + $0x164] sm:%s245]
                %307 = vst [vmem:[%s253 + $0x68] sm:%s245] %v306
                %v308 = vld [vmem:[%s252 + $0x168] sm:%s245]
                %309 = vst [vmem:[%s253 + $0x6c] sm:%s245] %v308
                %v310 = vld [vmem:[%s252 + $0x1c0] sm:%s245]
                %311 = vst [vmem:[%s253 + $0x70] sm:%s245] %v310
                %v312 = vld [vmem:[%s252 + $0x1c4] sm:%s245]
                %313 = vst [vmem:[%s253 + $0x74] sm:%s245] %v312
                %v314 = vld [vmem:[%s252 + $0x1c8] sm:%s245]
                %315 = vst [vmem:[%s253 + $0x78] sm:%s245] %v314
                %v316 = vld [vmem:[%s252 + $0x1cc] sm:%s245]
                %317 = vst [vmem:[%s253 + $0x7c] sm:%s245] %v316
                %v318 = vld [vmem:[%s252 + $0x1d0] sm:%s245]
                %319 = vst [vmem:[%s253 + $0x80] sm:%s245] %v318
                %v320 = vld [vmem:[%s252 + $0x1d4] sm:%s245]
                %321 = vst [vmem:[%s253 + $0x84] sm:%s245] %v320
                %v322 = vld [vmem:[%s252 + $0x1d8] sm:%s245]
                %323 = vst [vmem:[%s253 + $0x88] sm:%s245] %v322
                %v324 = vld [vmem:[%s252 + $0x230] sm:%s245]
                %325 = vst [vmem:[%s253 + $0x8c] sm:%s245] %v324
                %v326 = vld [vmem:[%s252 + $0x234] sm:%s245]
                %327 = vst [vmem:[%s253 + $0x90] sm:%s245] %v326
                %v328 = vld [vmem:[%s252 + $0x238] sm:%s245]
                %329 = vst [vmem:[%s253 + $0x94] sm:%s245] %v328
                %v330 = vld [vmem:[%s252 + $0x23c] sm:%s245]
                %331 = vst [vmem:[%s253 + $0x98] sm:%s245] %v330
                %v332 = vld [vmem:[%s252 + $0x240] sm:%s245]
                %333 = vst [vmem:[%s253 + $0x9c] sm:%s245] %v332
                %v334 = vld [vmem:[%s252 + $0x244] sm:%s245]
                %335 = vst [vmem:[%s253 + $0xa0] sm:%s245] %v334
                %v336 = vld [vmem:[%s252 + $0x248] sm:%s245]
                %337 = vst [vmem:[%s253 + $0xa4] sm:%s245] %v336
                %v338 = vld [vmem:[%s252 + $0x2a0] sm:%s245]
                %339 = vst [vmem:[%s253 + $0xa8] sm:%s245] %v338
                %v340 = vld [vmem:[%s252 + $0x2a4] sm:%s245]
                %341 = vst [vmem:[%s253 + $0xac] sm:%s245] %v340
                %v342 = vld [vmem:[%s252 + $0x2a8] sm:%s245]
                %343 = vst [vmem:[%s253 + $0xb0] sm:%s245] %v342
                %v344 = vld [vmem:[%s252 + $0x2ac] sm:%s245]
                %345 = vst [vmem:[%s253 + $0xb4] sm:%s245] %v344
                %v346 = vld [vmem:[%s252 + $0x2b0] sm:%s245]
                %347 = vst [vmem:[%s253 + $0xb8] sm:%s245] %v346
                %v348 = vld [vmem:[%s252 + $0x2b4] sm:%s245]
                %349 = vst [vmem:[%s253 + $0xbc] sm:%s245] %v348
                %v350 = vld [vmem:[%s252 + $0x2b8] sm:%s245]
                %351 = vst [vmem:[%s253 + $0xc0] sm:%s245] %v350
                %v352 = vld [vmem:[%s252 + $0x310] sm:%s245]
                %353 = vst [vmem:[%s253 + $0xc4] sm:%s245] %v352
                %v354 = vld [vmem:[%s252 + $0x314] sm:%s245]
                %355 = vst [vmem:[%s253 + $0xc8] sm:%s245] %v354
                %v356 = vld [vmem:[%s252 + $0x318] sm:%s245]
                %357 = vst [vmem:[%s253 + $0xcc] sm:%s245] %v356
                %v358 = vld [vmem:[%s252 + $0x31c] sm:%s245]
                %359 = vst [vmem:[%s253 + $0xd0] sm:%s245] %v358
                %v360 = vld [vmem:[%s252 + $0x320] sm:%s245]
                %361 = vst [vmem:[%s253 + $0xd4] sm:%s245] %v360
                %v362 = vld [vmem:[%s252 + $0x324] sm:%s245]
                %363 = vst [vmem:[%s253 + $0xd8] sm:%s245] %v362
                %v364 = vld [vmem:[%s252 + $0x328] sm:%s245]
                %365 = vst [vmem:[%s253 + $0xdc] sm:%s245] %v364
              $region61: #{net_forward.1} parent=55 // loop_footer
                %s251 = sadd.s32 1, %s247
              $region62: #{net_forward.1} parent=55 // loop_footer_branch
                %246 = sbr.rel target = $region58
              $region63: #{net_forward.1} parent=55 // loop_exit
                _
            $region56: #{net_forward.1} parent=47 // pred_fallthru
              _
          $region48: #{net_forward.1} parent=43 // pred_fallthru
            _
          %498 = vnop
        $region44: #{net_forward.1} parent=39 // pred_fallthru
          _
      $region40: #{net_forward.1} parent=5 // pred_fallthru
        _
      %p499 = scmp.le.s32.totalorder 1, %s13
      %p500 = scmp.lt.s32.totalorder %s13, 5
      %p501 = pnand %p499, %p500
      %p502 = pneg %p501
      // Predicated region
      $region82: #{net_forward.1} parent=5 // pred_check
        _
      $region83: #{net_forward.1} parent=5 // pred_check_branch
        %504 = sbr.rel (%p501) target = $region85
      $region84: #{net_forward.1} parent=5 // pred_region
        %s505 = ssub.s32 %s13, 1
        %s506 = sand.u32 %s26, 1
        %s507 = sand.u32 %s26, 1
        %s508 = smul.addr %s507, 224
        %s509 = scalar_lea.vmem [#allocation5], %s508
        // Predicated region
        $region86: #{net_forward.1} parent=84 // pred_check
          %p510 = pneg %p39
        $region87: #{net_forward.1} parent=84 // pred_check_branch
          %512 = sbr.rel (%p510) target = $region89
        $region88: #{net_forward.1} parent=84 // pred_region
          _
        $region89: #{net_forward.1} parent=84 // pred_fallthru
          _
        %s513 = sand.u32 %s26, 1
        %s514 = sand.u32 %s26, 1
        %s515 = smul.addr %s514, 224
        %s516 = scalar_lea.vmem [#allocation5], %s515
        %p517 = pneg %p39
        %p518 = pneg %p36
        %p519 = pneg %p60
        %p520 = pneg %p57
        %p521 = pneg %p81
        %p522 = pneg %p78
        %p523 = pneg %p102
        %p524 = pneg %p99
        %p525 = pneg %p123
        %p526 = pneg %p120
        %p527 = pneg %p144
        %p528 = pneg %p141
        %p529 = pneg %p165
        %p530 = pneg %p162
        %p531 = pneg %p191
        %p532 = pneg %p188
        %p533 = scmp.lt.s32.totalorder %s18, 3
        %s534 = scalar_select %p533, %s18, 3
        %s535 = smul.addr %s534, 8
        %s536 = scalar_lea.vmem %s7, %s535
        %s537 = smul.u32 7, %s18
        %p538 = scmp.lt.s32.totalorder %s18, 3
        %s539 = scalar_select %p538, %s18, 3
        %s540 = smul.addr %s539, 8
        %s541 = scalar_lea.vmem %s7, %s540
        %v543 = vld [vmem:[%s6] sm:$0x1]
        %v544 = vld [vmem:[%s6 + $0x1] sm:$0x1]
        %v545 = vld [vmem:[%s6 + $0x2] sm:$0x1]
        %v546 = vld [vmem:[%s6 + $0x3] sm:$0x1]
        %v547 = vld [vmem:[%s6 + $0x4] sm:$0x1]
        %vm548 = vcmask 1044128
        %549 = vst.msk [vmem:[#allocation4] sm:$0xf] %vm548, 0
        %550 = vst.msk [vmem:[#allocation4 + $0x4] sm:$0xf] %vm548, 0
        %551 = vst.msk [vmem:[#allocation4 + $0x8] sm:$0xf] %vm548, 0
        %552 = vst.msk [vmem:[#allocation4 + $0xc] sm:$0xf] %vm548, 0
        %553 = vst.msk [vmem:[#allocation4 + $0x10] sm:$0xf] %vm548, 0
        %554 = vst.msk [vmem:[#allocation4 + $0x14] sm:$0xf] %vm548, 0
        %555 = vst.msk [vmem:[#allocation4 + $0x18] sm:$0xf] %vm548, 0
        %556 = vst.msk [vmem:[#allocation4 + $0x1c] sm:$0xf] %vm548, 0
        %557 = vst.msk [vmem:[#allocation4 + $0x20] sm:$0xf] %vm548, 0
        %558 = vst.msk [vmem:[#allocation4 + $0x24] sm:$0xf] %vm548, 0
        %559 = vst.msk [vmem:[#allocation4 + $0x28] sm:$0xf] %vm548, 0
        %560 = vst.msk [vmem:[#allocation4 + $0x2c] sm:$0xf] %vm548, 0
        %561 = vst.msk [vmem:[#allocation4 + $0x30] sm:$0xf] %vm548, 0
        %562 = vst.msk [vmem:[#allocation4 + $0x34] sm:$0xf] %vm548, 0
        %v563 = vld [vmem:[%s509] sm:$0xf]
        %v564 = vld [vmem:[%s509 + $0x4] sm:$0xf]
        %v565 = vld [vmem:[%s509 + $0x8] sm:$0xf]
        %v566 = vld [vmem:[%s509 + $0xc] sm:$0xf]
        %v567 = vld [vmem:[%s509 + $0x10] sm:$0xf]
        %v568 = vld [vmem:[%s509 + $0x14] sm:$0xf]
        %v569 = vld [vmem:[%s509 + $0x18] sm:$0xf]
        %570 = vst [vmem:[#allocation2] sm:$0xf] %v563
        %571 = vst [vmem:[#allocation2 + $0x14] sm:$0xf] %v564
        %572 = vst [vmem:[#allocation2 + $0x28] sm:$0xf] %v565
        %573 = vst [vmem:[#allocation2 + $0x3c] sm:$0xf] %v566
        %574 = vst [vmem:[#allocation2 + $0x50] sm:$0xf] %v567
        %575 = vst [vmem:[#allocation2 + $0x64] sm:$0xf] %v568
        %576 = vst [vmem:[#allocation2 + $0x78] sm:$0xf] %v569
        %s577 = scalar_lea.vmem %s509, 28 [#allocation5]
        %v578 = vld [vmem:[%s577] sm:$0xf]
        %v579 = vld [vmem:[%s577 + $0x4] sm:$0xf]
        %v580 = vld [vmem:[%s577 + $0x8] sm:$0xf]
        %v581 = vld [vmem:[%s577 + $0xc] sm:$0xf]
        %v582 = vld [vmem:[%s577 + $0x10] sm:$0xf]
        %v583 = vld [vmem:[%s577 + $0x14] sm:$0xf]
        %v584 = vld [vmem:[%s577 + $0x18] sm:$0xf]
        %585 = vst [vmem:[#allocation2 + $0x4] sm:$0xf] %v578
        %586 = vst [vmem:[#allocation2 + $0x18] sm:$0xf] %v579
        %587 = vst [vmem:[#allocation2 + $0x2c] sm:$0xf] %v580
        %588 = vst [vmem:[#allocation2 + $0x40] sm:$0xf] %v581
        %589 = vst [vmem:[#allocation2 + $0x54] sm:$0xf] %v582
        %590 = vst [vmem:[#allocation2 + $0x68] sm:$0xf] %v583
        %591 = vst [vmem:[#allocation2 + $0x7c] sm:$0xf] %v584
        %s592 = scalar_lea.vmem %s509, 56 [#allocation5]
        %v593 = vld [vmem:[%s592] sm:$0xf]
        %v594 = vld [vmem:[%s592 + $0x4] sm:$0xf]
        %v595 = vld [vmem:[%s592 + $0x8] sm:$0xf]
        %v596 = vld [vmem:[%s592 + $0xc] sm:$0xf]
        %v597 = vld [vmem:[%s592 + $0x10] sm:$0xf]
        %v598 = vld [vmem:[%s592 + $0x14] sm:$0xf]
        %v599 = vld [vmem:[%s592 + $0x18] sm:$0xf]
        %600 = vst [vmem:[#allocation2 + $0x8] sm:$0xf] %v593
        %601 = vst [vmem:[#allocation2 + $0x1c] sm:$0xf] %v594
        %602 = vst [vmem:[#allocation2 + $0x30] sm:$0xf] %v595
        %603 = vst [vmem:[#allocation2 + $0x44] sm:$0xf] %v596
        %604 = vst [vmem:[#allocation2 + $0x58] sm:$0xf] %v597
        %605 = vst [vmem:[#allocation2 + $0x6c] sm:$0xf] %v598
        %606 = vst [vmem:[#allocation2 + $0x80] sm:$0xf] %v599
        %s607 = scalar_lea.vmem %s509, 84 [#allocation5]
        %v608 = vld [vmem:[%s607] sm:$0xf]
        %v609 = vld [vmem:[%s607 + $0x4] sm:$0xf]
        %v610 = vld [vmem:[%s607 + $0x8] sm:$0xf]
        %v611 = vld [vmem:[%s607 + $0xc] sm:$0xf]
        %v612 = vld [vmem:[%s607 + $0x10] sm:$0xf]
        %v613 = vld [vmem:[%s607 + $0x14] sm:$0xf]
        %v614 = vld [vmem:[%s607 + $0x18] sm:$0xf]
        %615 = vst [vmem:[#allocation2 + $0xc] sm:$0xf] %v608
        %616 = vst [vmem:[#allocation2 + $0x20] sm:$0xf] %v609
        %617 = vst [vmem:[#allocation2 + $0x34] sm:$0xf] %v610
        %618 = vst [vmem:[#allocation2 + $0x48] sm:$0xf] %v611
        %619 = vst [vmem:[#allocation2 + $0x5c] sm:$0xf] %v612
        %620 = vst [vmem:[#allocation2 + $0x70] sm:$0xf] %v613
        %621 = vst [vmem:[#allocation2 + $0x84] sm:$0xf] %v614
        %s622 = scalar_lea.vmem %s509, 112 [#allocation5]
        %v623 = vld [vmem:[%s622] sm:$0xf]
        %v624 = vld [vmem:[%s622 + $0x4] sm:$0xf]
        %v625 = vld [vmem:[%s622 + $0x8] sm:$0xf]
        %v626 = vld [vmem:[%s622 + $0xc] sm:$0xf]
        %v627 = vld [vmem:[%s622 + $0x10] sm:$0xf]
        %v628 = vld [vmem:[%s622 + $0x14] sm:$0xf]
        %v629 = vld [vmem:[%s622 + $0x18] sm:$0xf]
        %630 = vst [vmem:[#allocation2 + $0x10] sm:$0xf] %v623
        %631 = vst [vmem:[#allocation2 + $0x24] sm:$0xf] %v624
        %632 = vst [vmem:[#allocation2 + $0x38] sm:$0xf] %v625
        %633 = vst [vmem:[#allocation2 + $0x4c] sm:$0xf] %v626
        %634 = vst [vmem:[#allocation2 + $0x60] sm:$0xf] %v627
        %635 = vst [vmem:[#allocation2 + $0x74] sm:$0xf] %v628
        %636 = vst [vmem:[#allocation2 + $0x88] sm:$0xf] %v629
        %v637 = vld [vmem:[%s577] sm:$0xf]
        %v638 = vld [vmem:[%s577 + $0x4] sm:$0xf]
        %v639 = vld [vmem:[%s577 + $0x8] sm:$0xf]
        %v640 = vld [vmem:[%s577 + $0xc] sm:$0xf]
        %v641 = vld [vmem:[%s577 + $0x10] sm:$0xf]
        %v642 = vld [vmem:[%s577 + $0x14] sm:$0xf]
        %v643 = vld [vmem:[%s577 + $0x18] sm:$0xf]
        %s644 = scalar_lea.vmem [#allocation2], 140
        %645 = vst [vmem:[%s644] sm:$0xf] %v637
        %646 = vst [vmem:[%s644 + $0x14] sm:$0xf] %v638
        %647 = vst [vmem:[%s644 + $0x28] sm:$0xf] %v639
        %648 = vst [vmem:[%s644 + $0x3c] sm:$0xf] %v640
        %649 = vst [vmem:[%s644 + $0x50] sm:$0xf] %v641
        %650 = vst [vmem:[%s644 + $0x64] sm:$0xf] %v642
        %651 = vst [vmem:[%s644 + $0x78] sm:$0xf] %v643
        %v652 = vld [vmem:[%s592] sm:$0xf]
        %v653 = vld [vmem:[%s592 + $0x4] sm:$0xf]
        %v654 = vld [vmem:[%s592 + $0x8] sm:$0xf]
        %v655 = vld [vmem:[%s592 + $0xc] sm:$0xf]
        %v656 = vld [vmem:[%s592 + $0x10] sm:$0xf]
        %v657 = vld [vmem:[%s592 + $0x14] sm:$0xf]
        %v658 = vld [vmem:[%s592 + $0x18] sm:$0xf]
        %659 = vst [vmem:[%s644 + $0x4] sm:$0xf] %v652
        %660 = vst [vmem:[%s644 + $0x18] sm:$0xf] %v653
        %661 = vst [vmem:[%s644 + $0x2c] sm:$0xf] %v654
        %662 = vst [vmem:[%s644 + $0x40] sm:$0xf] %v655
        %663 = vst [vmem:[%s644 + $0x54] sm:$0xf] %v656
        %664 = vst [vmem:[%s644 + $0x68] sm:$0xf] %v657
        %665 = vst [vmem:[%s644 + $0x7c] sm:$0xf] %v658
        %v666 = vld [vmem:[%s607] sm:$0xf]
        %v667 = vld [vmem:[%s607 + $0x4] sm:$0xf]
        %v668 = vld [vmem:[%s607 + $0x8] sm:$0xf]
        %v669 = vld [vmem:[%s607 + $0xc] sm:$0xf]
        %v670 = vld [vmem:[%s607 + $0x10] sm:$0xf]
        %v671 = vld [vmem:[%s607 + $0x14] sm:$0xf]
        %v672 = vld [vmem:[%s607 + $0x18] sm:$0xf]
        %673 = vst [vmem:[%s644 + $0x8] sm:$0xf] %v666
        %674 = vst [vmem:[%s644 + $0x1c] sm:$0xf] %v667
        %675 = vst [vmem:[%s644 + $0x30] sm:$0xf] %v668
        %676 = vst [vmem:[%s644 + $0x44] sm:$0xf] %v669
        %677 = vst [vmem:[%s644 + $0x58] sm:$0xf] %v670
        %678 = vst [vmem:[%s644 + $0x6c] sm:$0xf] %v671
        %679 = vst [vmem:[%s644 + $0x80] sm:$0xf] %v672
        %v680 = vld [vmem:[%s622] sm:$0xf]
        %v681 = vld [vmem:[%s622 + $0x4] sm:$0xf]
        %v682 = vld [vmem:[%s622 + $0x8] sm:$0xf]
        %v683 = vld [vmem:[%s622 + $0xc] sm:$0xf]
        %v684 = vld [vmem:[%s622 + $0x10] sm:$0xf]
        %v685 = vld [vmem:[%s622 + $0x14] sm:$0xf]
        %v686 = vld [vmem:[%s622 + $0x18] sm:$0xf]
        %687 = vst [vmem:[%s644 + $0xc] sm:$0xf] %v680
        %688 = vst [vmem:[%s644 + $0x20] sm:$0xf] %v681
        %689 = vst [vmem:[%s644 + $0x34] sm:$0xf] %v682
        %690 = vst [vmem:[%s644 + $0x48] sm:$0xf] %v683
        %691 = vst [vmem:[%s644 + $0x5c] sm:$0xf] %v684
        %692 = vst [vmem:[%s644 + $0x70] sm:$0xf] %v685
        %693 = vst [vmem:[%s644 + $0x84] sm:$0xf] %v686
        %s694 = scalar_lea.vmem %s509, 140 [#allocation5]
        %v695 = vld [vmem:[%s694] sm:$0xf]
        %v696 = vld [vmem:[%s694 + $0x4] sm:$0xf]
        %v697 = vld [vmem:[%s694 + $0x8] sm:$0xf]
        %v698 = vld [vmem:[%s694 + $0xc] sm:$0xf]
        %v699 = vld [vmem:[%s694 + $0x10] sm:$0xf]
        %v700 = vld [vmem:[%s694 + $0x14] sm:$0xf]
        %v701 = vld [vmem:[%s694 + $0x18] sm:$0xf]
        %702 = vst [vmem:[%s644 + $0x10] sm:$0xf] %v695
        %703 = vst [vmem:[%s644 + $0x24] sm:$0xf] %v696
        %704 = vst [vmem:[%s644 + $0x38] sm:$0xf] %v697
        %705 = vst [vmem:[%s644 + $0x4c] sm:$0xf] %v698
        %706 = vst [vmem:[%s644 + $0x60] sm:$0xf] %v699
        %707 = vst [vmem:[%s644 + $0x74] sm:$0xf] %v700
        %708 = vst [vmem:[%s644 + $0x88] sm:$0xf] %v701
        %v709 = vld [vmem:[#allocation2] sm:$0xff]
        %v710 = vld [vmem:[#allocation2 + $0x8] sm:$0xff]
        %v711 = vld [vmem:[#allocation2 + $0x10] sm:$0xf]
        %v712 = vld [vmem:[#allocation2 + $0x14] sm:$0xff]
        %v713 = vld [vmem:[#allocation2 + $0x1c] sm:$0xff]
        %v714 = vld [vmem:[#allocation2 + $0x24] sm:$0xf]
        %v715 = vld [vmem:[#allocation2 + $0x28] sm:$0xff]
        %v716 = vld [vmem:[#allocation2 + $0x30] sm:$0xff]
        %v717 = vld [vmem:[#allocation2 + $0x38] sm:$0xf]
        %v718 = vld [vmem:[#allocation2 + $0x3c] sm:$0xff]
        %v719 = vld [vmem:[#allocation2 + $0x44] sm:$0xff]
        %v720 = vld [vmem:[#allocation2 + $0x4c] sm:$0xf]
        %v721 = vld [vmem:[#allocation2 + $0x50] sm:$0xff]
        %v722 = vld [vmem:[#allocation2 + $0x58] sm:$0xff]
        %v723 = vld [vmem:[#allocation2 + $0x60] sm:$0xf]
        %v724 = vld [vmem:[#allocation2 + $0x64] sm:$0xff]
        %v725 = vld [vmem:[#allocation2 + $0x6c] sm:$0xff]
        %v726 = vld [vmem:[#allocation2 + $0x74] sm:$0xf]
        %v727 = vld [vmem:[#allocation2 + $0x78] sm:$0xff]
        %v728 = vld [vmem:[#allocation2 + $0x80] sm:$0xff]
        %v729 = vld [vmem:[#allocation2 + $0x88] sm:$0xf]
        %v730 = vld [vmem:[%s1] sm:$0xff]
        %v731 = vld [vmem:[%s1 + $0x8] sm:$0xff]
        %v732 = vld [vmem:[%s1 + $0x10] sm:$0xff]
        %v733 = vld [vmem:[%s1 + $0x18] sm:$0xff]
        %v734 = vld [vmem:[%s1 + $0x20] sm:$0xff]
        %v735 = vld [vmem:[%s1 + $0x28] sm:$0xff]
        %v736 = vld [vmem:[%s1 + $0x30] sm:$0xff]
        %v737 = vld [vmem:[%s1 + $0x38] sm:$0xff]
        %v738 = vld [vmem:[%s1 + $0x40] sm:$0xff]
        %v739 = vld [vmem:[%s1 + $0x48] sm:$0xff]
        %v740 = vld [vmem:[%s1 + $0x50] sm:$0xff]
        %v741 = vld [vmem:[%s1 + $0x58] sm:$0xff]
        %v742 = vld [vmem:[%s1 + $0x60] sm:$0xff]
        %v743 = vld [vmem:[%s1 + $0x68] sm:$0xff]
        %v744 = vld [vmem:[%s1 + $0x70] sm:$0xff]
        %v745 = vld [vmem:[%s1 + $0x78] sm:$0xff]
        %v746 = vld [vmem:[%s1 + $0x80] sm:$0xff]
        %v747 = vld [vmem:[%s1 + $0x88] sm:$0xff]
        %v748 = vld [vmem:[%s1 + $0x90] sm:$0xff]
        %v749 = vld [vmem:[%s1 + $0x98] sm:$0xff]
        %v750 = vld [vmem:[%s1 + $0xa0] sm:$0xff]
        %v751 = vld [vmem:[%s1 + $0xa8] sm:$0xff]
        %v752 = vld [vmem:[%s1 + $0xb0] sm:$0xff]
        %v753 = vld [vmem:[%s1 + $0xb8] sm:$0xff]
        %v754 = vld [vmem:[%s1 + $0xc0] sm:$0xff]
        %v755 = vld [vmem:[%s1 + $0xc8] sm:$0xff]
        %v756 = vld [vmem:[%s1 + $0xd0] sm:$0xff]
        %v757 = vld [vmem:[%s1 + $0xd8] sm:$0xff]
        %v758 = vld [vmem:[%s1 + $0xe0] sm:$0xff]
        %v759 = vld [vmem:[%s1 + $0xe8] sm:$0xff]
        %v760 = vld [vmem:[%s1 + $0xf0] sm:$0xff]
        %v761 = vld [vmem:[%s1 + $0xf8] sm:$0xff]
        %v762 = vld [vmem:[%s1 + $0x100] sm:$0xff]
        %v763 = vld [vmem:[%s1 + $0x108] sm:$0xff]
        %v764 = vld [vmem:[%s1 + $0x110] sm:$0xff]
        %v765 = vld [vmem:[%s1 + $0x118] sm:$0xff]
        %v766 = vld [vmem:[%s1 + $0x120] sm:$0xff]
        %v767 = vld [vmem:[%s1 + $0x128] sm:$0xff]
        %v768 = vld [vmem:[%s1 + $0x130] sm:$0xff]
        %v769 = vld [vmem:[%s1 + $0x138] sm:$0xff]
        %v770 = vld [vmem:[%s1 + $0x140] sm:$0xff]
        %v771 = vld [vmem:[%s1 + $0x148] sm:$0xff]
        %v772 = vld [vmem:[%s1 + $0x150] sm:$0xff]
        %v773 = vld [vmem:[%s1 + $0x158] sm:$0xff]
        %v774 = vld [vmem:[%s1 + $0x160] sm:$0xff]
        %v775 = vld [vmem:[%s1 + $0x168] sm:$0xff]
        %v776 = vld [vmem:[%s1 + $0x170] sm:$0xff]
        %v777 = vld [vmem:[%s1 + $0x178] sm:$0xff]
        %v778 = vld [vmem:[%s1 + $0x180] sm:$0xff]
        %v779 = vld [vmem:[%s1 + $0x188] sm:$0xff]
        %v780 = vld [vmem:[%s1 + $0x190] sm:$0xff]
        %v781 = vld [vmem:[%s1 + $0x198] sm:$0xff]
        %v782 = vld [vmem:[%s1 + $0x1a0] sm:$0xff]
        %v783 = vld [vmem:[%s1 + $0x1a8] sm:$0xff]
        %v784 = vld [vmem:[%s1 + $0x1b0] sm:$0xff]
        %v785 = vld [vmem:[%s1 + $0x1b8] sm:$0xff]
        %v786 = vld [vmem:[%s1 + $0x1c0] sm:$0xff]
        %v787 = vld [vmem:[%s1 + $0x1c8] sm:$0xff]
        %v788 = vld [vmem:[%s1 + $0x1d0] sm:$0xff]
        %v789 = vld [vmem:[%s1 + $0x1d8] sm:$0xff]
        %v790 = vld [vmem:[%s1 + $0x1e0] sm:$0xff]
        %v791 = vld [vmem:[%s1 + $0x1e8] sm:$0xff]
        %v792 = vld [vmem:[%s1 + $0x1f0] sm:$0xff]
        %v793 = vld [vmem:[%s1 + $0x1f8] sm:$0xff]
        %v794 = vld [vmem:[%s1 + $0x200] sm:$0xff]
        %v795 = vld [vmem:[%s1 + $0x208] sm:$0xff]
        %v796 = vld [vmem:[%s1 + $0x210] sm:$0xff]
        %v797 = vld [vmem:[%s1 + $0x218] sm:$0xff]
        %v798 = vld [vmem:[%s1 + $0x220] sm:$0xff]
        %v799 = vld [vmem:[%s1 + $0x228] sm:$0xff]
        %v800 = vld [vmem:[%s1 + $0x230] sm:$0xff]
        %v801 = vld [vmem:[%s1 + $0x238] sm:$0xff]
        %v802 = vld [vmem:[%s1 + $0x240] sm:$0xff]
        %v803 = vld [vmem:[%s1 + $0x248] sm:$0xff]
        %v804 = vld [vmem:[%s1 + $0x250] sm:$0xff]
        %v805 = vld [vmem:[%s1 + $0x258] sm:$0xff]
        %v806 = vld [vmem:[%s1 + $0x260] sm:$0xff]
        %v807 = vld [vmem:[%s1 + $0x268] sm:$0xff]
        %v808 = vld [vmem:[%s1 + $0x270] sm:$0xff]
        %v809 = vld [vmem:[%s1 + $0x278] sm:$0xff]
        %v831 = vunpack.c.l.b16 %v709
        %v832 = vunpack.c.h.b16 %v709
        %v833 = vunpack.c.l.b16 %v710
        %v834 = vunpack.c.h.b16 %v710
        %v835 = vunpack.c.l.b16 %v711
        %v836 = vunpack.c.l.b16 %v712
        %v837 = vunpack.c.h.b16 %v712
        %v838 = vunpack.c.l.b16 %v713
        %v839 = vunpack.c.h.b16 %v713
        %v840 = vunpack.c.l.b16 %v714
        %v841 = vunpack.c.l.b16 %v715
        %v842 = vunpack.c.h.b16 %v715
        %v843 = vunpack.c.l.b16 %v716
        %v844 = vunpack.c.h.b16 %v716
        %v845 = vunpack.c.l.b16 %v717
        %v846 = vunpack.c.l.b16 %v718
        %v847 = vunpack.c.h.b16 %v718
        %v848 = vunpack.c.l.b16 %v719
        %v849 = vunpack.c.h.b16 %v719
        %v850 = vunpack.c.l.b16 %v720
        %v851 = vunpack.c.l.b16 %v721
        %v852 = vunpack.c.h.b16 %v721
        %v853 = vunpack.c.l.b16 %v722
        %v854 = vunpack.c.h.b16 %v722
        %v855 = vunpack.c.l.b16 %v723
        %v856 = vunpack.c.l.b16 %v724
        %v857 = vunpack.c.h.b16 %v724
        %v858 = vunpack.c.l.b16 %v725
        %v859 = vunpack.c.h.b16 %v725
        %v860 = vunpack.c.l.b16 %v726
        %v861 = vunpack.c.l.b16 %v727
        %v862 = vunpack.c.h.b16 %v727
        %v863 = vunpack.c.l.b16 %v728
        %v864 = vunpack.c.h.b16 %v728
        %v865 = vunpack.c.l.b16 %v729
        %v866 = vpack.c.b16 %v836, %v831
        %v867 = vpack.c.b16 %v837, %v832
        %v868 = vpack.c.b16 %v838, %v833
        %v869 = vpack.c.b16 %v839, %v834
        %v870 = vpack.c.b16 %v840, %v835
        %v871 = vpack.c.b16 %v846, %v841
        %v872 = vpack.c.b16 %v847, %v842
        %v873 = vpack.c.b16 %v848, %v843
        %v874 = vpack.c.b16 %v849, %v844
        %v875 = vpack.c.b16 %v850, %v845
        %v876 = vpack.c.b16 %v856, %v851
        %v877 = vpack.c.b16 %v857, %v852
        %v878 = vpack.c.b16 %v858, %v853
        %v879 = vpack.c.b16 %v859, %v854
        %v880 = vpack.c.b16 %v860, %v855
        %v881 = vpack.c.b16 %v861, %v861
        %v882 = vpack.c.b16 %v862, %v862
        %v883 = vpack.c.b16 %v863, %v863
        %v884 = vpack.c.b16 %v864, %v864
        %v885 = vpack.c.b16 %v865, %v865
        %v986 = vunpack.c.l.b16 %v730
        %v987 = vunpack.c.h.b16 %v730
        %v988 = vunpack.c.l.b16 %v731
        %v989 = vunpack.c.h.b16 %v731
        %v990 = vunpack.c.l.b16 %v732
        %v991 = vunpack.c.h.b16 %v732
        %v992 = vunpack.c.l.b16 %v733
        %v993 = vunpack.c.h.b16 %v733
        %v994 = vunpack.c.l.b16 %v734
        %v995 = vunpack.c.h.b16 %v734
        %v996 = vunpack.c.l.b16 %v735
        %v997 = vunpack.c.h.b16 %v735
        %v998 = vunpack.c.l.b16 %v736
        %v999 = vunpack.c.h.b16 %v736
        %v1000 = vunpack.c.l.b16 %v737
        %v1001 = vunpack.c.h.b16 %v737
        %v1002 = vunpack.c.l.b16 %v738
        %v1003 = vunpack.c.h.b16 %v738
        %v1004 = vunpack.c.l.b16 %v739
        %v1005 = vunpack.c.h.b16 %v739
        %v1006 = vunpack.c.l.b16 %v740
        %v1007 = vunpack.c.h.b16 %v740
        %v1008 = vunpack.c.l.b16 %v741
        %v1009 = vunpack.c.h.b16 %v741
        %v1010 = vunpack.c.l.b16 %v742
        %v1011 = vunpack.c.h.b16 %v742
        %v1012 = vunpack.c.l.b16 %v743
        %v1013 = vunpack.c.h.b16 %v743
        %v1014 = vunpack.c.l.b16 %v744
        %v1015 = vunpack.c.h.b16 %v744
        %v1016 = vunpack.c.l.b16 %v745
        %v1017 = vunpack.c.h.b16 %v745
        %v1018 = vunpack.c.l.b16 %v746
        %v1019 = vunpack.c.h.b16 %v746
        %v1020 = vunpack.c.l.b16 %v747
        %v1021 = vunpack.c.h.b16 %v747
        %v1022 = vunpack.c.l.b16 %v748
        %v1023 = vunpack.c.h.b16 %v748
        %v1024 = vunpack.c.l.b16 %v749
        %v1025 = vunpack.c.h.b16 %v749
        %v1026 = vunpack.c.l.b16 %v750
        %v1027 = vunpack.c.h.b16 %v750
        %v1028 = vunpack.c.l.b16 %v751
        %v1029 = vunpack.c.h.b16 %v751
        %v1030 = vunpack.c.l.b16 %v752
        %v1031 = vunpack.c.h.b16 %v752
        %v1032 = vunpack.c.l.b16 %v753
        %v1033 = vunpack.c.h.b16 %v753
        %v1034 = vunpack.c.l.b16 %v754
        %v1035 = vunpack.c.h.b16 %v754
        %v1036 = vunpack.c.l.b16 %v755
        %v1037 = vunpack.c.h.b16 %v755
        %v1038 = vunpack.c.l.b16 %v756
        %v1039 = vunpack.c.h.b16 %v756
        %v1040 = vunpack.c.l.b16 %v757
        %v1041 = vunpack.c.h.b16 %v757
        %v1042 = vunpack.c.l.b16 %v758
        %v1043 = vunpack.c.h.b16 %v758
        %v1044 = vunpack.c.l.b16 %v759
        %v1045 = vunpack.c.h.b16 %v759
        %v1046 = vunpack.c.l.b16 %v760
        %v1047 = vunpack.c.h.b16 %v760
        %v1048 = vunpack.c.l.b16 %v761
        %v1049 = vunpack.c.h.b16 %v761
        %v1050 = vunpack.c.l.b16 %v762
        %v1051 = vunpack.c.h.b16 %v762
        %v1052 = vunpack.c.l.b16 %v763
        %v1053 = vunpack.c.h.b16 %v763
        %v1054 = vunpack.c.l.b16 %v764
        %v1055 = vunpack.c.h.b16 %v764
        %v1056 = vunpack.c.l.b16 %v765
        %v1057 = vunpack.c.h.b16 %v765
        %v1058 = vunpack.c.l.b16 %v766
        %v1059 = vunpack.c.h.b16 %v766
        %v1060 = vunpack.c.l.b16 %v767
        %v1061 = vunpack.c.h.b16 %v767
        %v1062 = vunpack.c.l.b16 %v768
        %v1063 = vunpack.c.h.b16 %v768
        %v1064 = vunpack.c.l.b16 %v769
        %v1065 = vunpack.c.h.b16 %v769
        %v1066 = vunpack.c.l.b16 %v770
        %v1067 = vunpack.c.h.b16 %v770
        %v1068 = vunpack.c.l.b16 %v771
        %v1069 = vunpack.c.h.b16 %v771
        %v1070 = vunpack.c.l.b16 %v772
        %v1071 = vunpack.c.h.b16 %v772
        %v1072 = vunpack.c.l.b16 %v773
        %v1073 = vunpack.c.h.b16 %v773
        %v1074 = vunpack.c.l.b16 %v774
        %v1075 = vunpack.c.h.b16 %v774
        %v1076 = vunpack.c.l.b16 %v775
        %v1077 = vunpack.c.h.b16 %v775
        %v1078 = vunpack.c.l.b16 %v776
        %v1079 = vunpack.c.h.b16 %v776
        %v1080 = vunpack.c.l.b16 %v777
        %v1081 = vunpack.c.h.b16 %v777
        %v1082 = vunpack.c.l.b16 %v778
        %v1083 = vunpack.c.h.b16 %v778
        %v1084 = vunpack.c.l.b16 %v779
        %v1085 = vunpack.c.h.b16 %v779
        %v1086 = vunpack.c.l.b16 %v780
        %v1087 = vunpack.c.h.b16 %v780
        %v1088 = vunpack.c.l.b16 %v781
        %v1089 = vunpack.c.h.b16 %v781
        %v1090 = vunpack.c.l.b16 %v782
        %v1091 = vunpack.c.h.b16 %v782
        %v1092 = vunpack.c.l.b16 %v783
        %v1093 = vunpack.c.h.b16 %v783
        %v1094 = vunpack.c.l.b16 %v784
        %v1095 = vunpack.c.h.b16 %v784
        %v1096 = vunpack.c.l.b16 %v785
        %v1097 = vunpack.c.h.b16 %v785
        %v1098 = vunpack.c.l.b16 %v786
        %v1099 = vunpack.c.h.b16 %v786
        %v1100 = vunpack.c.l.b16 %v787
        %v1101 = vunpack.c.h.b16 %v787
        %v1102 = vunpack.c.l.b16 %v788
        %v1103 = vunpack.c.h.b16 %v788
        %v1104 = vunpack.c.l.b16 %v789
        %v1105 = vunpack.c.h.b16 %v789
        %v1106 = vunpack.c.l.b16 %v790
        %v1107 = vunpack.c.h.b16 %v790
        %v1108 = vunpack.c.l.b16 %v791
        %v1109 = vunpack.c.h.b16 %v791
        %v1110 = vunpack.c.l.b16 %v792
        %v1111 = vunpack.c.h.b16 %v792
        %v1112 = vunpack.c.l.b16 %v793
        %v1113 = vunpack.c.h.b16 %v793
        %v1114 = vunpack.c.l.b16 %v794
        %v1115 = vunpack.c.h.b16 %v794
        %v1116 = vunpack.c.l.b16 %v795
        %v1117 = vunpack.c.h.b16 %v795
        %v1118 = vunpack.c.l.b16 %v796
        %v1119 = vunpack.c.h.b16 %v796
        %v1120 = vunpack.c.l.b16 %v797
        %v1121 = vunpack.c.h.b16 %v797
        %v1122 = vunpack.c.l.b16 %v798
        %v1123 = vunpack.c.h.b16 %v798
        %v1124 = vunpack.c.l.b16 %v799
        %v1125 = vunpack.c.h.b16 %v799
        %v1126 = vunpack.c.l.b16 %v800
        %v1127 = vunpack.c.h.b16 %v800
        %v1128 = vunpack.c.l.b16 %v801
        %v1129 = vunpack.c.h.b16 %v801
        %v1130 = vunpack.c.l.b16 %v802
        %v1131 = vunpack.c.h.b16 %v802
        %v1132 = vunpack.c.l.b16 %v803
        %v1133 = vunpack.c.h.b16 %v803
        %v1134 = vunpack.c.l.b16 %v804
        %v1135 = vunpack.c.h.b16 %v804
        %v1136 = vunpack.c.l.b16 %v805
        %v1137 = vunpack.c.h.b16 %v805
        %v1138 = vunpack.c.l.b16 %v806
        %v1139 = vunpack.c.h.b16 %v806
        %v1140 = vunpack.c.l.b16 %v807
        %v1141 = vunpack.c.h.b16 %v807
        %v1142 = vunpack.c.l.b16 %v808
        %v1143 = vunpack.c.h.b16 %v808
        %v1144 = vunpack.c.l.b16 %v809
        %v1145 = vunpack.c.h.b16 %v809
        %v1146 = vpack.c.b16 %v988, %v986
        %v1147 = vpack.c.b16 %v989, %v987
        %v1148 = vpack.c.b16 %v992, %v990
        %v1149 = vpack.c.b16 %v993, %v991
        %v1150 = vpack.c.b16 %v996, %v994
        %v1151 = vpack.c.b16 %v997, %v995
        %v1152 = vpack.c.b16 %v1000, %v998
        %v1153 = vpack.c.b16 %v1001, %v999
        %v1154 = vpack.c.b16 %v1004, %v1002
        %v1155 = vpack.c.b16 %v1005, %v1003
        %v1156 = vpack.c.b16 %v1008, %v1006
        %v1157 = vpack.c.b16 %v1009, %v1007
        %v1158 = vpack.c.b16 %v1012, %v1010
        %v1159 = vpack.c.b16 %v1013, %v1011
        %v1160 = vpack.c.b16 %v1016, %v1014
        %v1161 = vpack.c.b16 %v1017, %v1015
        %v1162 = vpack.c.b16 %v1020, %v1018
        %v1163 = vpack.c.b16 %v1021, %v1019
        %v1164 = vpack.c.b16 %v1024, %v1022
        %v1165 = vpack.c.b16 %v1025, %v1023
        %v1166 = vpack.c.b16 %v1028, %v1026
        %v1167 = vpack.c.b16 %v1029, %v1027
        %v1168 = vpack.c.b16 %v1032, %v1030
        %v1169 = vpack.c.b16 %v1033, %v1031
        %v1170 = vpack.c.b16 %v1036, %v1034
        %v1171 = vpack.c.b16 %v1037, %v1035
        %v1172 = vpack.c.b16 %v1040, %v1038
        %v1173 = vpack.c.b16 %v1041, %v1039
        %v1174 = vpack.c.b16 %v1044, %v1042
        %v1175 = vpack.c.b16 %v1045, %v1043
        %v1176 = vpack.c.b16 %v1048, %v1046
        %v1177 = vpack.c.b16 %v1049, %v1047
        %v1178 = vpack.c.b16 %v1052, %v1050
        %v1179 = vpack.c.b16 %v1053, %v1051
        %v1180 = vpack.c.b16 %v1056, %v1054
        %v1181 = vpack.c.b16 %v1057, %v1055
        %v1182 = vpack.c.b16 %v1060, %v1058
        %v1183 = vpack.c.b16 %v1061, %v1059
        %v1184 = vpack.c.b16 %v1064, %v1062
        %v1185 = vpack.c.b16 %v1065, %v1063
        %v1186 = vpack.c.b16 %v1068, %v1066
        %v1187 = vpack.c.b16 %v1069, %v1067
        %v1188 = vpack.c.b16 %v1072, %v1070
        %v1189 = vpack.c.b16 %v1073, %v1071
        %v1190 = vpack.c.b16 %v1076, %v1074
        %v1191 = vpack.c.b16 %v1077, %v1075
        %v1192 = vpack.c.b16 %v1080, %v1078
        %v1193 = vpack.c.b16 %v1081, %v1079
        %v1194 = vpack.c.b16 %v1084, %v1082
        %v1195 = vpack.c.b16 %v1085, %v1083
        %v1196 = vpack.c.b16 %v1088, %v1086
        %v1197 = vpack.c.b16 %v1089, %v1087
        %v1198 = vpack.c.b16 %v1092, %v1090
        %v1199 = vpack.c.b16 %v1093, %v1091
        %v1200 = vpack.c.b16 %v1096, %v1094
        %v1201 = vpack.c.b16 %v1097, %v1095
        %v1202 = vpack.c.b16 %v1100, %v1098
        %v1203 = vpack.c.b16 %v1101, %v1099
        %v1204 = vpack.c.b16 %v1104, %v1102
        %v1205 = vpack.c.b16 %v1105, %v1103
        %v1206 = vpack.c.b16 %v1108, %v1106
        %v1207 = vpack.c.b16 %v1109, %v1107
        %v1208 = vpack.c.b16 %v1112, %v1110
        %v1209 = vpack.c.b16 %v1113, %v1111
        %v1210 = vpack.c.b16 %v1116, %v1114
        %v1211 = vpack.c.b16 %v1117, %v1115
        %v1212 = vpack.c.b16 %v1120, %v1118
        %v1213 = vpack.c.b16 %v1121, %v1119
        %v1214 = vpack.c.b16 %v1124, %v1122
        %v1215 = vpack.c.b16 %v1125, %v1123
        %v1216 = vpack.c.b16 %v1128, %v1126
        %v1217 = vpack.c.b16 %v1129, %v1127
        %v1218 = vpack.c.b16 %v1132, %v1130
        %v1219 = vpack.c.b16 %v1133, %v1131
        %v1220 = vpack.c.b16 %v1136, %v1134
        %v1221 = vpack.c.b16 %v1137, %v1135
        %v1222 = vpack.c.b16 %v1140, %v1138
        %v1223 = vpack.c.b16 %v1141, %v1139
        %v1224 = vpack.c.b16 %v1144, %v1142
        %v1225 = vpack.c.b16 %v1145, %v1143
        %1306 = vmatpush.bf16.msra.mxu0 %v1160
        %1307 = vmatpush.bf16.msra.mxu0 %v1158
        %1308 = vmatpush.bf16.msra.mxu0 %v1156
        %1309 = vmatpush.bf16.msra.mxu0 %v1154
        %1310 = vmatpush.bf16.msra.mxu0 %v1152
        %1311 = vmatpush.bf16.msra.mxu0 %v1150
        %1312 = vmatpush.bf16.msra.mxu0 %v1148
        %1313 = vmatpush.bf16.msra.mxu0 %v1146
        %1314 = vmatmul.bf16.gmra.mxu0 %v866
        %v1315 = vpop.f32.mrf.mxu0
        %v1316 = vadd.f32 0.0, %v1315
        %v1317 = vpop.f32.mrf.mxu0
        %v1318 = vadd.f32 0.0, %v1317
        %1319 = vmatmul.bf16.gmra.mxu0 %v871
        %v1320 = vpop.f32.mrf.mxu0
        %v1321 = vadd.f32 0.0, %v1320
        %v1322 = vpop.f32.mrf.mxu0
        %v1323 = vadd.f32 0.0, %v1322
        %1324 = vmatmul.bf16.gmra.mxu0 %v876
        %v1325 = vpop.f32.mrf.mxu0
        %v1326 = vadd.f32 0.0, %v1325
        %v1327 = vpop.f32.mrf.mxu0
        %v1328 = vadd.f32 0.0, %v1327
        %1329 = vmatmul.bf16.gmra.mxu0 %v881
        %v1330 = vpop.f32.mrf.mxu0
        %v1331 = vadd.f32 0.0, %v1330
        %v1332 = vpop.f32.mrf.mxu0
        %1333 = vdwg.mxu0
        %1334 = vmatpush.bf16.msra.mxu0 %v1176
        %1335 = vmatpush.bf16.msra.mxu0 %v1174
        %1336 = vmatpush.bf16.msra.mxu0 %v1172
        %1337 = vmatpush.bf16.msra.mxu0 %v1170
        %1338 = vmatpush.bf16.msra.mxu0 %v1168
        %1339 = vmatpush.bf16.msra.mxu0 %v1166
        %1340 = vmatpush.bf16.msra.mxu0 %v1164
        %1341 = vmatpush.bf16.msra.mxu0 %v1162
        %1342 = vmatmul.bf16.gmra.mxu0 %v867
        %v1343 = vpop.f32.mrf.mxu0
        %v1344 = vadd.f32 %v1316, %v1343
        %v1345 = vpop.f32.mrf.mxu0
        %v1346 = vadd.f32 %v1318, %v1345
        %1347 = vmatmul.bf16.gmra.mxu0 %v872
        %v1348 = vpop.f32.mrf.mxu0
        %v1349 = vadd.f32 %v1321, %v1348
        %v1350 = vpop.f32.mrf.mxu0
        %v1351 = vadd.f32 %v1323, %v1350
        %1352 = vmatmul.bf16.gmra.mxu0 %v877
        %v1353 = vpop.f32.mrf.mxu0
        %v1354 = vadd.f32 %v1326, %v1353
        %v1355 = vpop.f32.mrf.mxu0
        %v1356 = vadd.f32 %v1328, %v1355
        %1357 = vmatmul.bf16.gmra.mxu0 %v882
        %v1358 = vpop.f32.mrf.mxu0
        %v1359 = vadd.f32 %v1331, %v1358
        %v1360 = vpop.f32.mrf.mxu0
        %1361 = vdwg.mxu0
        %1362 = vmatpush.bf16.msra.mxu0 %v1192
        %1363 = vmatpush.bf16.msra.mxu0 %v1190
        %1364 = vmatpush.bf16.msra.mxu0 %v1188
        %1365 = vmatpush.bf16.msra.mxu0 %v1186
        %1366 = vmatpush.bf16.msra.mxu0 %v1184
        %1367 = vmatpush.bf16.msra.mxu0 %v1182
        %1368 = vmatpush.bf16.msra.mxu0 %v1180
        %1369 = vmatpush.bf16.msra.mxu0 %v1178
        %1370 = vmatmul.bf16.gmra.mxu0 %v868
        %v1371 = vpop.f32.mrf.mxu0
        %v1372 = vadd.f32 %v1344, %v1371
        %v1373 = vpop.f32.mrf.mxu0
        %v1374 = vadd.f32 %v1346, %v1373
        %1375 = vmatmul.bf16.gmra.mxu0 %v873
        %v1376 = vpop.f32.mrf.mxu0
        %v1377 = vadd.f32 %v1349, %v1376
        %v1378 = vpop.f32.mrf.mxu0
        %v1379 = vadd.f32 %v1351, %v1378
        %1380 = vmatmul.bf16.gmra.mxu0 %v878
        %v1381 = vpop.f32.mrf.mxu0
        %v1382 = vadd.f32 %v1354, %v1381
        %v1383 = vpop.f32.mrf.mxu0
        %v1384 = vadd.f32 %v1356, %v1383
        %1385 = vmatmul.bf16.gmra.mxu0 %v883
        %v1386 = vpop.f32.mrf.mxu0
        %v1387 = vadd.f32 %v1359, %v1386
        %v1388 = vpop.f32.mrf.mxu0
        %1389 = vdwg.mxu0
        %1390 = vmatpush.bf16.msra.mxu0 %v1208
        %1391 = vmatpush.bf16.msra.mxu0 %v1206
        %1392 = vmatpush.bf16.msra.mxu0 %v1204
        %1393 = vmatpush.bf16.msra.mxu0 %v1202
        %1394 = vmatpush.bf16.msra.mxu0 %v1200
        %1395 = vmatpush.bf16.msra.mxu0 %v1198
        %1396 = vmatpush.bf16.msra.mxu0 %v1196
        %1397 = vmatpush.bf16.msra.mxu0 %v1194
        %1398 = vmatmul.bf16.gmra.mxu0 %v869
        %v1399 = vpop.f32.mrf.mxu0
        %v1400 = vadd.f32 %v1372, %v1399
        %v1401 = vpop.f32.mrf.mxu0
        %v1402 = vadd.f32 %v1374, %v1401
        %1403 = vmatmul.bf16.gmra.mxu0 %v874
        %v1404 = vpop.f32.mrf.mxu0
        %v1405 = vadd.f32 %v1377, %v1404
        %v1406 = vpop.f32.mrf.mxu0
        %v1407 = vadd.f32 %v1379, %v1406
        %1408 = vmatmul.bf16.gmra.mxu0 %v879
        %v1409 = vpop.f32.mrf.mxu0
        %v1410 = vadd.f32 %v1382, %v1409
        %v1411 = vpop.f32.mrf.mxu0
        %v1412 = vadd.f32 %v1384, %v1411
        %1413 = vmatmul.bf16.gmra.mxu0 %v884
        %v1414 = vpop.f32.mrf.mxu0
        %v1415 = vadd.f32 %v1387, %v1414
        %v1416 = vpop.f32.mrf.mxu0
        %1417 = vdwg.mxu0
        %1418 = vmatpush.bf16.msra.mxu0 %v1224
        %1419 = vmatpush.bf16.msra.mxu0 %v1222
        %1420 = vmatpush.bf16.msra.mxu0 %v1220
        %1421 = vmatpush.bf16.msra.mxu0 %v1218
        %1422 = vmatpush.bf16.msra.mxu0 %v1216
        %1423 = vmatpush.bf16.msra.mxu0 %v1214
        %1424 = vmatpush.bf16.msra.mxu0 %v1212
        %1425 = vmatpush.bf16.msra.mxu0 %v1210
        %1426 = vmatmul.bf16.gmra.mxu0 %v870
        %v1427 = vpop.f32.mrf.mxu0
        %v1428 = vadd.f32 %v1400, %v1427
        %v1429 = vpop.f32.mrf.mxu0
        %v1430 = vadd.f32 %v1402, %v1429
        %1431 = vmatmul.bf16.gmra.mxu0 %v875
        %v1432 = vpop.f32.mrf.mxu0
        %v1433 = vadd.f32 %v1405, %v1432
        %v1434 = vpop.f32.mrf.mxu0
        %v1435 = vadd.f32 %v1407, %v1434
        %1436 = vmatmul.bf16.gmra.mxu0 %v880
        %v1437 = vpop.f32.mrf.mxu0
        %v1438 = vadd.f32 %v1410, %v1437
        %v1439 = vpop.f32.mrf.mxu0
        %v1440 = vadd.f32 %v1412, %v1439
        %1441 = vmatmul.bf16.gmra.mxu0 %v885
        %v1442 = vpop.f32.mrf.mxu0
        %v1443 = vadd.f32 %v1415, %v1442
        %v1444 = vpop.f32.mrf.mxu0
        %1445 = vdwg.mxu0
        %1446 = vmatpush.bf16.msra.mxu0 %v1161
        %1447 = vmatpush.bf16.msra.mxu0 %v1159
        %1448 = vmatpush.bf16.msra.mxu0 %v1157
        %1449 = vmatpush.bf16.msra.mxu0 %v1155
        %1450 = vmatpush.bf16.msra.mxu0 %v1153
        %1451 = vmatpush.bf16.msra.mxu0 %v1151
        %1452 = vmatpush.bf16.msra.mxu0 %v1149
        %1453 = vmatpush.bf16.msra.mxu0 %v1147
        %1454 = vmatmul.bf16.gmra.mxu0 %v866
        %v1455 = vpop.f32.mrf.mxu0
        %v1456 = vadd.f32 0.0, %v1455
        %v1457 = vpop.f32.mrf.mxu0
        %v1458 = vadd.f32 0.0, %v1457
        %1459 = vmatmul.bf16.gmra.mxu0 %v871
        %v1460 = vpop.f32.mrf.mxu0
        %v1461 = vadd.f32 0.0, %v1460
        %v1462 = vpop.f32.mrf.mxu0
        %v1463 = vadd.f32 0.0, %v1462
        %1464 = vmatmul.bf16.gmra.mxu0 %v876
        %v1465 = vpop.f32.mrf.mxu0
        %v1466 = vadd.f32 0.0, %v1465
        %v1467 = vpop.f32.mrf.mxu0
        %v1468 = vadd.f32 0.0, %v1467
        %1469 = vmatmul.bf16.gmra.mxu0 %v881
        %v1470 = vpop.f32.mrf.mxu0
        %v1471 = vadd.f32 0.0, %v1470
        %v1472 = vpop.f32.mrf.mxu0
        %1473 = vdwg.mxu0
        %1474 = vmatpush.bf16.msra.mxu0 %v1177
        %1475 = vmatpush.bf16.msra.mxu0 %v1175
        %1476 = vmatpush.bf16.msra.mxu0 %v1173
        %1477 = vmatpush.bf16.msra.mxu0 %v1171
        %1478 = vmatpush.bf16.msra.mxu0 %v1169
        %1479 = vmatpush.bf16.msra.mxu0 %v1167
        %1480 = vmatpush.bf16.msra.mxu0 %v1165
        %1481 = vmatpush.bf16.msra.mxu0 %v1163
        %1482 = vmatmul.bf16.gmra.mxu0 %v867
        %v1483 = vpop.f32.mrf.mxu0
        %v1484 = vadd.f32 %v1456, %v1483
        %v1485 = vpop.f32.mrf.mxu0
        %v1486 = vadd.f32 %v1458, %v1485
        %1487 = vmatmul.bf16.gmra.mxu0 %v872
        %v1488 = vpop.f32.mrf.mxu0
        %v1489 = vadd.f32 %v1461, %v1488
        %v1490 = vpop.f32.mrf.mxu0
        %v1491 = vadd.f32 %v1463, %v1490
        %1492 = vmatmul.bf16.gmra.mxu0 %v877
        %v1493 = vpop.f32.mrf.mxu0
        %v1494 = vadd.f32 %v1466, %v1493
        %v1495 = vpop.f32.mrf.mxu0
        %v1496 = vadd.f32 %v1468, %v1495
        %1497 = vmatmul.bf16.gmra.mxu0 %v882
        %v1498 = vpop.f32.mrf.mxu0
        %v1499 = vadd.f32 %v1471, %v1498
        %v1500 = vpop.f32.mrf.mxu0
        %1501 = vdwg.mxu0
        %1502 = vmatpush.bf16.msra.mxu0 %v1193
        %1503 = vmatpush.bf16.msra.mxu0 %v1191
        %1504 = vmatpush.bf16.msra.mxu0 %v1189
        %1505 = vmatpush.bf16.msra.mxu0 %v1187
        %1506 = vmatpush.bf16.msra.mxu0 %v1185
        %1507 = vmatpush.bf16.msra.mxu0 %v1183
        %1508 = vmatpush.bf16.msra.mxu0 %v1181
        %1509 = vmatpush.bf16.msra.mxu0 %v1179
        %1510 = vmatmul.bf16.gmra.mxu0 %v868
        %v1511 = vpop.f32.mrf.mxu0
        %v1512 = vadd.f32 %v1484, %v1511
        %v1513 = vpop.f32.mrf.mxu0
        %v1514 = vadd.f32 %v1486, %v1513
        %1515 = vmatmul.bf16.gmra.mxu0 %v873
        %v1516 = vpop.f32.mrf.mxu0
        %v1517 = vadd.f32 %v1489, %v1516
        %v1518 = vpop.f32.mrf.mxu0
        %v1519 = vadd.f32 %v1491, %v1518
        %1520 = vmatmul.bf16.gmra.mxu0 %v878
        %v1521 = vpop.f32.mrf.mxu0
        %v1522 = vadd.f32 %v1494, %v1521
        %v1523 = vpop.f32.mrf.mxu0
        %v1524 = vadd.f32 %v1496, %v1523
        %1525 = vmatmul.bf16.gmra.mxu0 %v883
        %v1526 = vpop.f32.mrf.mxu0
        %v1527 = vadd.f32 %v1499, %v1526
        %v1528 = vpop.f32.mrf.mxu0
        %1529 = vdwg.mxu0
        %1530 = vmatpush.bf16.msra.mxu0 %v1209
        %1531 = vmatpush.bf16.msra.mxu0 %v1207
        %1532 = vmatpush.bf16.msra.mxu0 %v1205
        %1533 = vmatpush.bf16.msra.mxu0 %v1203
        %1534 = vmatpush.bf16.msra.mxu0 %v1201
        %1535 = vmatpush.bf16.msra.mxu0 %v1199
        %1536 = vmatpush.bf16.msra.mxu0 %v1197
        %1537 = vmatpush.bf16.msra.mxu0 %v1195
        %1538 = vmatmul.bf16.gmra.mxu0 %v869
        %v1539 = vpop.f32.mrf.mxu0
        %v1540 = vadd.f32 %v1512, %v1539
        %v1541 = vpop.f32.mrf.mxu0
        %v1542 = vadd.f32 %v1514, %v1541
        %1543 = vmatmul.bf16.gmra.mxu0 %v874
        %v1544 = vpop.f32.mrf.mxu0
        %v1545 = vadd.f32 %v1517, %v1544
        %v1546 = vpop.f32.mrf.mxu0
        %v1547 = vadd.f32 %v1519, %v1546
        %1548 = vmatmul.bf16.gmra.mxu0 %v879
        %v1549 = vpop.f32.mrf.mxu0
        %v1550 = vadd.f32 %v1522, %v1549
        %v1551 = vpop.f32.mrf.mxu0
        %v1552 = vadd.f32 %v1524, %v1551
        %1553 = vmatmul.bf16.gmra.mxu0 %v884
        %v1554 = vpop.f32.mrf.mxu0
        %v1555 = vadd.f32 %v1527, %v1554
        %v1556 = vpop.f32.mrf.mxu0
        %1557 = vdwg.mxu0
        %1558 = vmatpush.bf16.msra.mxu0 %v1225
        %1559 = vmatpush.bf16.msra.mxu0 %v1223
        %1560 = vmatpush.bf16.msra.mxu0 %v1221
        %1561 = vmatpush.bf16.msra.mxu0 %v1219
        %1562 = vmatpush.bf16.msra.mxu0 %v1217
        %1563 = vmatpush.bf16.msra.mxu0 %v1215
        %1564 = vmatpush.bf16.msra.mxu0 %v1213
        %1565 = vmatpush.bf16.msra.mxu0 %v1211
        %1566 = vmatmul.bf16.gmra.mxu0 %v870
        %v1567 = vpop.f32.mrf.mxu0
        %v1568 = vadd.f32 %v1540, %v1567
        %v1569 = vpop.f32.mrf.mxu0
        %v1570 = vadd.f32 %v1542, %v1569
        %1571 = vmatmul.bf16.gmra.mxu0 %v875
        %v1572 = vpop.f32.mrf.mxu0
        %v1573 = vadd.f32 %v1545, %v1572
        %v1574 = vpop.f32.mrf.mxu0
        %v1575 = vadd.f32 %v1547, %v1574
        %1576 = vmatmul.bf16.gmra.mxu0 %v880
        %v1577 = vpop.f32.mrf.mxu0
        %v1578 = vadd.f32 %v1550, %v1577
        %v1579 = vpop.f32.mrf.mxu0
        %v1580 = vadd.f32 %v1552, %v1579
        %1581 = vmatmul.bf16.gmra.mxu0 %v885
        %v1582 = vpop.f32.mrf.mxu0
        %v1583 = vadd.f32 %v1555, %v1582
        %v1584 = vpop.f32.mrf.mxu0
        %1585 = vdwg.mxu0
        %v1586 = vld [vmem:[%s644] sm:$0xff]
        %v1587 = vld [vmem:[%s644 + $0x8] sm:$0xff]
        %v1588 = vld [vmem:[%s644 + $0x10] sm:$0xf]
        %v1589 = vld [vmem:[%s644 + $0x14] sm:$0xff]
        %v1590 = vld [vmem:[%s644 + $0x1c] sm:$0xff]
        %v1591 = vld [vmem:[%s644 + $0x24] sm:$0xf]
        %v1592 = vld [vmem:[%s644 + $0x28] sm:$0xff]
        %v1593 = vld [vmem:[%s644 + $0x30] sm:$0xff]
        %v1594 = vld [vmem:[%s644 + $0x38] sm:$0xf]
        %v1595 = vld [vmem:[%s644 + $0x3c] sm:$0xff]
        %v1596 = vld [vmem:[%s644 + $0x44] sm:$0xff]
        %v1597 = vld [vmem:[%s644 + $0x4c] sm:$0xf]
        %v1598 = vld [vmem:[%s644 + $0x50] sm:$0xff]
        %v1599 = vld [vmem:[%s644 + $0x58] sm:$0xff]
        %v1600 = vld [vmem:[%s644 + $0x60] sm:$0xf]
        %v1601 = vld [vmem:[%s644 + $0x64] sm:$0xff]
        %v1602 = vld [vmem:[%s644 + $0x6c] sm:$0xff]
        %v1603 = vld [vmem:[%s644 + $0x74] sm:$0xf]
        %v1604 = vld [vmem:[%s644 + $0x78] sm:$0xff]
        %v1605 = vld [vmem:[%s644 + $0x80] sm:$0xff]
        %v1606 = vld [vmem:[%s644 + $0x88] sm:$0xf]
        %v1628 = vunpack.c.l.b16 %v1586
        %v1629 = vunpack.c.h.b16 %v1586
        %v1630 = vunpack.c.l.b16 %v1587
        %v1631 = vunpack.c.h.b16 %v1587
        %v1632 = vunpack.c.l.b16 %v1588
        %v1633 = vunpack.c.l.b16 %v1589
        %v1634 = vunpack.c.h.b16 %v1589
        %v1635 = vunpack.c.l.b16 %v1590
        %v1636 = vunpack.c.h.b16 %v1590
        %v1637 = vunpack.c.l.b16 %v1591
        %v1638 = vunpack.c.l.b16 %v1592
        %v1639 = vunpack.c.h.b16 %v1592
        %v1640 = vunpack.c.l.b16 %v1593
        %v1641 = vunpack.c.h.b16 %v1593
        %v1642 = vunpack.c.l.b16 %v1594
        %v1643 = vunpack.c.l.b16 %v1595
        %v1644 = vunpack.c.h.b16 %v1595
        %v1645 = vunpack.c.l.b16 %v1596
        %v1646 = vunpack.c.h.b16 %v1596
        %v1647 = vunpack.c.l.b16 %v1597
        %v1648 = vunpack.c.l.b16 %v1598
        %v1649 = vunpack.c.h.b16 %v1598
        %v1650 = vunpack.c.l.b16 %v1599
        %v1651 = vunpack.c.h.b16 %v1599
        %v1652 = vunpack.c.l.b16 %v1600
        %v1653 = vunpack.c.l.b16 %v1601
        %v1654 = vunpack.c.h.b16 %v1601
        %v1655 = vunpack.c.l.b16 %v1602
        %v1656 = vunpack.c.h.b16 %v1602
        %v1657 = vunpack.c.l.b16 %v1603
        %v1658 = vunpack.c.l.b16 %v1604
        %v1659 = vunpack.c.h.b16 %v1604
        %v1660 = vunpack.c.l.b16 %v1605
        %v1661 = vunpack.c.h.b16 %v1605
        %v1662 = vunpack.c.l.b16 %v1606
        %v1663 = vpack.c.b16 %v1633, %v1628
        %v1664 = vpack.c.b16 %v1634, %v1629
        %v1665 = vpack.c.b16 %v1635, %v1630
        %v1666 = vpack.c.b16 %v1636, %v1631
        %v1667 = vpack.c.b16 %v1637, %v1632
        %v1668 = vpack.c.b16 %v1643, %v1638
        %v1669 = vpack.c.b16 %v1644, %v1639
        %v1670 = vpack.c.b16 %v1645, %v1640
        %v1671 = vpack.c.b16 %v1646, %v1641
        %v1672 = vpack.c.b16 %v1647, %v1642
        %v1673 = vpack.c.b16 %v1653, %v1648
        %v1674 = vpack.c.b16 %v1654, %v1649
        %v1675 = vpack.c.b16 %v1655, %v1650
        %v1676 = vpack.c.b16 %v1656, %v1651
        %v1677 = vpack.c.b16 %v1657, %v1652
        %v1678 = vpack.c.b16 %v1658, %v1658
        %v1679 = vpack.c.b16 %v1659, %v1659
        %v1680 = vpack.c.b16 %v1660, %v1660
        %v1681 = vpack.c.b16 %v1661, %v1661
        %v1682 = vpack.c.b16 %v1662, %v1662
        %1703 = vmatpush.bf16.msra.mxu0 %v1160
        %1704 = vmatpush.bf16.msra.mxu0 %v1158
        %1705 = vmatpush.bf16.msra.mxu0 %v1156
        %1706 = vmatpush.bf16.msra.mxu0 %v1154
        %1707 = vmatpush.bf16.msra.mxu0 %v1152
        %1708 = vmatpush.bf16.msra.mxu0 %v1150
        %1709 = vmatpush.bf16.msra.mxu0 %v1148
        %1710 = vmatpush.bf16.msra.mxu0 %v1146
        %1711 = vmatmul.bf16.gmra.mxu0 %v1663
        %v1712 = vpop.f32.mrf.mxu0
        %v1713 = vadd.f32 0.0, %v1712
        %v1714 = vpop.f32.mrf.mxu0
        %v1715 = vadd.f32 0.0, %v1714
        %1716 = vmatmul.bf16.gmra.mxu0 %v1668
        %v1717 = vpop.f32.mrf.mxu0
        %v1718 = vadd.f32 0.0, %v1717
        %v1719 = vpop.f32.mrf.mxu0
        %v1720 = vadd.f32 0.0, %v1719
        %1721 = vmatmul.bf16.gmra.mxu0 %v1673
        %v1722 = vpop.f32.mrf.mxu0
        %v1723 = vadd.f32 0.0, %v1722
        %v1724 = vpop.f32.mrf.mxu0
        %v1725 = vadd.f32 0.0, %v1724
        %1726 = vmatmul.bf16.gmra.mxu0 %v1678
        %v1727 = vpop.f32.mrf.mxu0
        %v1728 = vadd.f32 0.0, %v1727
        %v1729 = vpop.f32.mrf.mxu0
        %1730 = vdwg.mxu0
        %1731 = vmatpush.bf16.msra.mxu0 %v1176
        %1732 = vmatpush.bf16.msra.mxu0 %v1174
        %1733 = vmatpush.bf16.msra.mxu0 %v1172
        %1734 = vmatpush.bf16.msra.mxu0 %v1170
        %1735 = vmatpush.bf16.msra.mxu0 %v1168
        %1736 = vmatpush.bf16.msra.mxu0 %v1166
        %1737 = vmatpush.bf16.msra.mxu0 %v1164
        %1738 = vmatpush.bf16.msra.mxu0 %v1162
        %1739 = vmatmul.bf16.gmra.mxu0 %v1664
        %v1740 = vpop.f32.mrf.mxu0
        %v1741 = vadd.f32 %v1713, %v1740
        %v1742 = vpop.f32.mrf.mxu0
        %v1743 = vadd.f32 %v1715, %v1742
        %1744 = vmatmul.bf16.gmra.mxu0 %v1669
        %v1745 = vpop.f32.mrf.mxu0
        %v1746 = vadd.f32 %v1718, %v1745
        %v1747 = vpop.f32.mrf.mxu0
        %v1748 = vadd.f32 %v1720, %v1747
        %1749 = vmatmul.bf16.gmra.mxu0 %v1674
        %v1750 = vpop.f32.mrf.mxu0
        %v1751 = vadd.f32 %v1723, %v1750
        %v1752 = vpop.f32.mrf.mxu0
        %v1753 = vadd.f32 %v1725, %v1752
        %1754 = vmatmul.bf16.gmra.mxu0 %v1679
        %v1755 = vpop.f32.mrf.mxu0
        %v1756 = vadd.f32 %v1728, %v1755
        %v1757 = vpop.f32.mrf.mxu0
        %1758 = vdwg.mxu0
        %1759 = vmatpush.bf16.msra.mxu0 %v1192
        %1760 = vmatpush.bf16.msra.mxu0 %v1190
        %1761 = vmatpush.bf16.msra.mxu0 %v1188
        %1762 = vmatpush.bf16.msra.mxu0 %v1186
        %1763 = vmatpush.bf16.msra.mxu0 %v1184
        %1764 = vmatpush.bf16.msra.mxu0 %v1182
        %1765 = vmatpush.bf16.msra.mxu0 %v1180
        %1766 = vmatpush.bf16.msra.mxu0 %v1178
        %1767 = vmatmul.bf16.gmra.mxu0 %v1665
        %v1768 = vpop.f32.mrf.mxu0
        %v1769 = vadd.f32 %v1741, %v1768
        %v1770 = vpop.f32.mrf.mxu0
        %v1771 = vadd.f32 %v1743, %v1770
        %1772 = vmatmul.bf16.gmra.mxu0 %v1670
        %v1773 = vpop.f32.mrf.mxu0
        %v1774 = vadd.f32 %v1746, %v1773
        %v1775 = vpop.f32.mrf.mxu0
        %v1776 = vadd.f32 %v1748, %v1775
        %1777 = vmatmul.bf16.gmra.mxu0 %v1675
        %v1778 = vpop.f32.mrf.mxu0
        %v1779 = vadd.f32 %v1751, %v1778
        %v1780 = vpop.f32.mrf.mxu0
        %v1781 = vadd.f32 %v1753, %v1780
        %1782 = vmatmul.bf16.gmra.mxu0 %v1680
        %v1783 = vpop.f32.mrf.mxu0
        %v1784 = vadd.f32 %v1756, %v1783
        %v1785 = vpop.f32.mrf.mxu0
        %1786 = vdwg.mxu0
        %1787 = vmatpush.bf16.msra.mxu0 %v1208
        %1788 = vmatpush.bf16.msra.mxu0 %v1206
        %1789 = vmatpush.bf16.msra.mxu0 %v1204
        %1790 = vmatpush.bf16.msra.mxu0 %v1202
        %1791 = vmatpush.bf16.msra.mxu0 %v1200
        %1792 = vmatpush.bf16.msra.mxu0 %v1198
        %1793 = vmatpush.bf16.msra.mxu0 %v1196
        %1794 = vmatpush.bf16.msra.mxu0 %v1194
        %1795 = vmatmul.bf16.gmra.mxu0 %v1666
        %v1796 = vpop.f32.mrf.mxu0
        %v1797 = vadd.f32 %v1769, %v1796
        %v1798 = vpop.f32.mrf.mxu0
        %v1799 = vadd.f32 %v1771, %v1798
        %1800 = vmatmul.bf16.gmra.mxu0 %v1671
        %v1801 = vpop.f32.mrf.mxu0
        %v1802 = vadd.f32 %v1774, %v1801
        %v1803 = vpop.f32.mrf.mxu0
        %v1804 = vadd.f32 %v1776, %v1803
        %1805 = vmatmul.bf16.gmra.mxu0 %v1676
        %v1806 = vpop.f32.mrf.mxu0
        %v1807 = vadd.f32 %v1779, %v1806
        %v1808 = vpop.f32.mrf.mxu0
        %v1809 = vadd.f32 %v1781, %v1808
        %1810 = vmatmul.bf16.gmra.mxu0 %v1681
        %v1811 = vpop.f32.mrf.mxu0
        %v1812 = vadd.f32 %v1784, %v1811
        %v1813 = vpop.f32.mrf.mxu0
        %1814 = vdwg.mxu0
        %1815 = vmatpush.bf16.msra.mxu0 %v1224
        %1816 = vmatpush.bf16.msra.mxu0 %v1222
        %1817 = vmatpush.bf16.msra.mxu0 %v1220
        %1818 = vmatpush.bf16.msra.mxu0 %v1218
        %1819 = vmatpush.bf16.msra.mxu0 %v1216
        %1820 = vmatpush.bf16.msra.mxu0 %v1214
        %1821 = vmatpush.bf16.msra.mxu0 %v1212
        %1822 = vmatpush.bf16.msra.mxu0 %v1210
        %1823 = vmatmul.bf16.gmra.mxu0 %v1667
        %v1824 = vpop.f32.mrf.mxu0
        %v1825 = vadd.f32 %v1797, %v1824
        %v1826 = vpop.f32.mrf.mxu0
        %v1827 = vadd.f32 %v1799, %v1826
        %1828 = vmatmul.bf16.gmra.mxu0 %v1672
        %v1829 = vpop.f32.mrf.mxu0
        %v1830 = vadd.f32 %v1802, %v1829
        %v1831 = vpop.f32.mrf.mxu0
        %v1832 = vadd.f32 %v1804, %v1831
        %1833 = vmatmul.bf16.gmra.mxu0 %v1677
        %v1834 = vpop.f32.mrf.mxu0
        %v1835 = vadd.f32 %v1807, %v1834
        %v1836 = vpop.f32.mrf.mxu0
        %v1837 = vadd.f32 %v1809, %v1836
        %1838 = vmatmul.bf16.gmra.mxu0 %v1682
        %v1839 = vpop.f32.mrf.mxu0
        %v1840 = vadd.f32 %v1812, %v1839
        %v1841 = vpop.f32.mrf.mxu0
        %1842 = vdwg.mxu0
        %1843 = vmatpush.bf16.msra.mxu0 %v1161
        %1844 = vmatpush.bf16.msra.mxu0 %v1159
        %1845 = vmatpush.bf16.msra.mxu0 %v1157
        %1846 = vmatpush.bf16.msra.mxu0 %v1155
        %1847 = vmatpush.bf16.msra.mxu0 %v1153
        %1848 = vmatpush.bf16.msra.mxu0 %v1151
        %1849 = vmatpush.bf16.msra.mxu0 %v1149
        %1850 = vmatpush.bf16.msra.mxu0 %v1147
        %1851 = vmatmul.bf16.gmra.mxu0 %v1663
        %v1852 = vpop.f32.mrf.mxu0
        %v1853 = vadd.f32 0.0, %v1852
        %v1854 = vpop.f32.mrf.mxu0
        %v1855 = vadd.f32 0.0, %v1854
        %1856 = vmatmul.bf16.gmra.mxu0 %v1668
        %v1857 = vpop.f32.mrf.mxu0
        %v1858 = vadd.f32 0.0, %v1857
        %v1859 = vpop.f32.mrf.mxu0
        %v1860 = vadd.f32 0.0, %v1859
        %1861 = vmatmul.bf16.gmra.mxu0 %v1673
        %v1862 = vpop.f32.mrf.mxu0
        %v1863 = vadd.f32 0.0, %v1862
        %v1864 = vpop.f32.mrf.mxu0
        %v1865 = vadd.f32 0.0, %v1864
        %1866 = vmatmul.bf16.gmra.mxu0 %v1678
        %v1867 = vpop.f32.mrf.mxu0
        %v1868 = vadd.f32 0.0, %v1867
        %v1869 = vpop.f32.mrf.mxu0
        %1870 = vdwg.mxu0
        %1871 = vmatpush.bf16.msra.mxu0 %v1177
        %1872 = vmatpush.bf16.msra.mxu0 %v1175
        %1873 = vmatpush.bf16.msra.mxu0 %v1173
        %1874 = vmatpush.bf16.msra.mxu0 %v1171
        %1875 = vmatpush.bf16.msra.mxu0 %v1169
        %1876 = vmatpush.bf16.msra.mxu0 %v1167
        %1877 = vmatpush.bf16.msra.mxu0 %v1165
        %1878 = vmatpush.bf16.msra.mxu0 %v1163
        %1879 = vmatmul.bf16.gmra.mxu0 %v1664
        %v1880 = vpop.f32.mrf.mxu0
        %v1881 = vadd.f32 %v1853, %v1880
        %v1882 = vpop.f32.mrf.mxu0
        %v1883 = vadd.f32 %v1855, %v1882
        %1884 = vmatmul.bf16.gmra.mxu0 %v1669
        %v1885 = vpop.f32.mrf.mxu0
        %v1886 = vadd.f32 %v1858, %v1885
        %v1887 = vpop.f32.mrf.mxu0
        %v1888 = vadd.f32 %v1860, %v1887
        %1889 = vmatmul.bf16.gmra.mxu0 %v1674
        %v1890 = vpop.f32.mrf.mxu0
        %v1891 = vadd.f32 %v1863, %v1890
        %v1892 = vpop.f32.mrf.mxu0
        %v1893 = vadd.f32 %v1865, %v1892
        %1894 = vmatmul.bf16.gmra.mxu0 %v1679
        %v1895 = vpop.f32.mrf.mxu0
        %v1896 = vadd.f32 %v1868, %v1895
        %v1897 = vpop.f32.mrf.mxu0
        %1898 = vdwg.mxu0
        %1899 = vmatpush.bf16.msra.mxu0 %v1193
        %1900 = vmatpush.bf16.msra.mxu0 %v1191
        %1901 = vmatpush.bf16.msra.mxu0 %v1189
        %1902 = vmatpush.bf16.msra.mxu0 %v1187
        %1903 = vmatpush.bf16.msra.mxu0 %v1185
        %1904 = vmatpush.bf16.msra.mxu0 %v1183
        %1905 = vmatpush.bf16.msra.mxu0 %v1181
        %1906 = vmatpush.bf16.msra.mxu0 %v1179
        %1907 = vmatmul.bf16.gmra.mxu0 %v1665
        %v1908 = vpop.f32.mrf.mxu0
        %v1909 = vadd.f32 %v1881, %v1908
        %v1910 = vpop.f32.mrf.mxu0
        %v1911 = vadd.f32 %v1883, %v1910
        %1912 = vmatmul.bf16.gmra.mxu0 %v1670
        %v1913 = vpop.f32.mrf.mxu0
        %v1914 = vadd.f32 %v1886, %v1913
        %v1915 = vpop.f32.mrf.mxu0
        %v1916 = vadd.f32 %v1888, %v1915
        %1917 = vmatmul.bf16.gmra.mxu0 %v1675
        %v1918 = vpop.f32.mrf.mxu0
        %v1919 = vadd.f32 %v1891, %v1918
        %v1920 = vpop.f32.mrf.mxu0
        %v1921 = vadd.f32 %v1893, %v1920
        %1922 = vmatmul.bf16.gmra.mxu0 %v1680
        %v1923 = vpop.f32.mrf.mxu0
        %v1924 = vadd.f32 %v1896, %v1923
        %v1925 = vpop.f32.mrf.mxu0
        %1926 = vdwg.mxu0
        %1927 = vmatpush.bf16.msra.mxu0 %v1209
        %1928 = vmatpush.bf16.msra.mxu0 %v1207
        %1929 = vmatpush.bf16.msra.mxu0 %v1205
        %1930 = vmatpush.bf16.msra.mxu0 %v1203
        %1931 = vmatpush.bf16.msra.mxu0 %v1201
        %1932 = vmatpush.bf16.msra.mxu0 %v1199
        %1933 = vmatpush.bf16.msra.mxu0 %v1197
        %1934 = vmatpush.bf16.msra.mxu0 %v1195
        %1935 = vmatmul.bf16.gmra.mxu0 %v1666
        %v1936 = vpop.f32.mrf.mxu0
        %v1937 = vadd.f32 %v1909, %v1936
        %v1938 = vpop.f32.mrf.mxu0
        %v1939 = vadd.f32 %v1911, %v1938
        %1940 = vmatmul.bf16.gmra.mxu0 %v1671
        %v1941 = vpop.f32.mrf.mxu0
        %v1942 = vadd.f32 %v1914, %v1941
        %v1943 = vpop.f32.mrf.mxu0
        %v1944 = vadd.f32 %v1916, %v1943
        %1945 = vmatmul.bf16.gmra.mxu0 %v1676
        %v1946 = vpop.f32.mrf.mxu0
        %v1947 = vadd.f32 %v1919, %v1946
        %v1948 = vpop.f32.mrf.mxu0
        %v1949 = vadd.f32 %v1921, %v1948
        %1950 = vmatmul.bf16.gmra.mxu0 %v1681
        %v1951 = vpop.f32.mrf.mxu0
        %v1952 = vadd.f32 %v1924, %v1951
        %v1953 = vpop.f32.mrf.mxu0
        %1954 = vdwg.mxu0
        %1955 = vmatpush.bf16.msra.mxu0 %v1225
        %1956 = vmatpush.bf16.msra.mxu0 %v1223
        %1957 = vmatpush.bf16.msra.mxu0 %v1221
        %1958 = vmatpush.bf16.msra.mxu0 %v1219
        %1959 = vmatpush.bf16.msra.mxu0 %v1217
        %1960 = vmatpush.bf16.msra.mxu0 %v1215
        %1961 = vmatpush.bf16.msra.mxu0 %v1213
        %1962 = vmatpush.bf16.msra.mxu0 %v1211
        %1963 = vmatmul.bf16.gmra.mxu0 %v1667
        %v1964 = vpop.f32.mrf.mxu0
        %v1965 = vadd.f32 %v1937, %v1964
        %v1966 = vpop.f32.mrf.mxu0
        %v1967 = vadd.f32 %v1939, %v1966
        %1968 = vmatmul.bf16.gmra.mxu0 %v1672
        %v1969 = vpop.f32.mrf.mxu0
        %v1970 = vadd.f32 %v1942, %v1969
        %v1971 = vpop.f32.mrf.mxu0
        %v1972 = vadd.f32 %v1944, %v1971
        %1973 = vmatmul.bf16.gmra.mxu0 %v1677
        %v1974 = vpop.f32.mrf.mxu0
        %v1975 = vadd.f32 %v1947, %v1974
        %v1976 = vpop.f32.mrf.mxu0
        %v1977 = vadd.f32 %v1949, %v1976
        %1978 = vmatmul.bf16.gmra.mxu0 %v1682
        %v1979 = vpop.f32.mrf.mxu0
        %v1980 = vadd.f32 %v1952, %v1979
        %v1981 = vpop.f32.mrf.mxu0
        %1982 = vdwg.mxu0
        %v1983 = vmax.f32 %v1428, %v1825
        %v1984 = vmax.f32 %v1568, %v1965
        %v1985 = vmax.f32 %v1430, %v1827
        %v1986 = vmax.f32 %v1570, %v1967
        %v1987 = vmax.f32 %v1433, %v1830
        %v1988 = vmax.f32 %v1573, %v1970
        %v1989 = vmax.f32 %v1435, %v1832
        %v1990 = vmax.f32 %v1575, %v1972
        %v1991 = vmax.f32 %v1438, %v1835
        %v1992 = vmax.f32 %v1578, %v1975
        %v1993 = vmax.f32 %v1440, %v1837
        %v1994 = vmax.f32 %v1580, %v1977
        %v1995 = vmax.f32 %v1443, %v1840
        %v1996 = vmax.f32 %v1583, %v1980
        %2011 = vrot.lane.b32.xlu0 %v1983, 44
        %v2012 = vpop.permute.xlu0 %2011
        %2013 = vrot.lane.b32.xlu0 %v1984, 44
        %v2014 = vpop.permute.xlu0 %2013
        %2015 = vrot.lane.b32.xlu0 %v1985, 44
        %v2016 = vpop.permute.xlu0 %2015
        %2017 = vrot.lane.b32.xlu0 %v1986, 44
        %v2018 = vpop.permute.xlu0 %2017
        %2019 = vrot.lane.b32.xlu0 %v1987, 44
        %v2020 = vpop.permute.xlu0 %2019
        %2021 = vrot.lane.b32.xlu0 %v1988, 44
        %v2022 = vpop.permute.xlu0 %2021
        %2023 = vrot.lane.b32.xlu0 %v1989, 44
        %v2024 = vpop.permute.xlu0 %2023
        %2025 = vrot.lane.b32.xlu0 %v1990, 44
        %v2026 = vpop.permute.xlu0 %2025
        %2027 = vrot.lane.b32.xlu0 %v1991, 44
        %v2028 = vpop.permute.xlu0 %2027
        %2029 = vrot.lane.b32.xlu0 %v1992, 44
        %v2030 = vpop.permute.xlu0 %2029
        %2031 = vrot.lane.b32.xlu0 %v1993, 44
        %v2032 = vpop.permute.xlu0 %2031
        %2033 = vrot.lane.b32.xlu0 %v1994, 44
        %v2034 = vpop.permute.xlu0 %2033
        %2035 = vrot.lane.b32.xlu0 %v1995, 44
        %v2036 = vpop.permute.xlu0 %2035
        %2037 = vrot.lane.b32.xlu0 %v1996, 44
        %v2038 = vpop.permute.xlu0 %2037
        %vm2039 = vcmask 359424
        %v2040 = vsel %vm2039, %v2012, %v2014
        %v2041 = vsel %vm2039, %v2016, %v2018
        %v2042 = vsel %vm2039, %v2020, %v2022
        %v2043 = vsel %vm2039, %v2024, %v2026
        %v2044 = vsel %vm2039, %v2028, %v2030
        %v2045 = vsel %vm2039, %v2032, %v2034
        %v2046 = vsel %vm2039, %v2036, %v2038
        %v2054 = vmax.f32 %v1983, %v2040
        %v2055 = vmax.f32 %v1985, %v2041
        %v2056 = vmax.f32 %v1987, %v2042
        %v2057 = vmax.f32 %v1989, %v2043
        %v2058 = vmax.f32 %v1991, %v2044
        %v2059 = vmax.f32 %v1993, %v2045
        %v2060 = vmax.f32 %v1995, %v2046
        %v2061 = vperm.slane %v543, 0
        %v2062 = vadd.f32 %v2054, %v2061
        %v2063 = vadd.f32 %v2055, %v2061
        %v2064 = vadd.f32 %v2056, %v2061
        %v2065 = vadd.f32 %v2057, %v2061
        %v2066 = vadd.f32 %v2058, %v2061
        %v2067 = vadd.f32 %v2059, %v2061
        %v2068 = vadd.f32 %v2060, %v2061
        %v2069 = vmax.f32 %v2062, 0.0
        %v2070 = vmax.f32 %v2063, 0.0
        %v2071 = vmax.f32 %v2064, 0.0
        %v2072 = vmax.f32 %v2065, 0.0
        %v2073 = vmax.f32 %v2066, 0.0
        %v2074 = vmax.f32 %v2067, 0.0
        %v2075 = vmax.f32 %v2068, 0.0
        %v2076 = vpack.c.bf16 %v2069, %v2069
        %v2077 = vpack.c.bf16 %v2070, %v2070
        %v2078 = vpack.c.bf16 %v2071, %v2071
        %v2079 = vpack.c.bf16 %v2072, %v2072
        %v2080 = vpack.c.bf16 %v2073, %v2073
        %v2081 = vpack.c.bf16 %v2074, %v2074
        %v2082 = vpack.c.bf16 %v2075, %v2075
        %vm2083 = vcmask 683008
        %2084 = vst.msk [vmem:[#allocation4] sm:$0xf] %vm2083, %v2076
        %2085 = vst.msk [vmem:[#allocation4 + $0x4] sm:$0xf] %vm2083, %v2077
        %2086 = vst.msk [vmem:[#allocation4 + $0x8] sm:$0xf] %vm2083, %v2078
        %2087 = vst.msk [vmem:[#allocation4 + $0xc] sm:$0xf] %vm2083, %v2079
        %2088 = vst.msk [vmem:[#allocation4 + $0x10] sm:$0xf] %vm2083, %v2080
        %2089 = vst.msk [vmem:[#allocation4 + $0x14] sm:$0xf] %vm2083, %v2081
        %2090 = vst.msk [vmem:[#allocation4 + $0x18] sm:$0xf] %vm2083, %v2082
        %v2091 = vld [vmem:[%s592] sm:$0xf]
        %v2092 = vld [vmem:[%s592 + $0x4] sm:$0xf]
        %v2093 = vld [vmem:[%s592 + $0x8] sm:$0xf]
        %v2094 = vld [vmem:[%s592 + $0xc] sm:$0xf]
        %v2095 = vld [vmem:[%s592 + $0x10] sm:$0xf]
        %v2096 = vld [vmem:[%s592 + $0x14] sm:$0xf]
        %v2097 = vld [vmem:[%s592 + $0x18] sm:$0xf]
        %s2098 = scalar_lea.vmem [#allocation2], 280
        %2099 = vst [vmem:[%s2098] sm:$0xf] %v2091
        %2100 = vst [vmem:[%s2098 + $0x14] sm:$0xf] %v2092
        %2101 = vst [vmem:[%s2098 + $0x28] sm:$0xf] %v2093
        %2102 = vst [vmem:[%s2098 + $0x3c] sm:$0xf] %v2094
        %2103 = vst [vmem:[%s2098 + $0x50] sm:$0xf] %v2095
        %2104 = vst [vmem:[%s2098 + $0x64] sm:$0xf] %v2096
        %2105 = vst [vmem:[%s2098 + $0x78] sm:$0xf] %v2097
        %v2106 = vld [vmem:[%s607] sm:$0xf]
        %v2107 = vld [vmem:[%s607 + $0x4] sm:$0xf]
        %v2108 = vld [vmem:[%s607 + $0x8] sm:$0xf]
        %v2109 = vld [vmem:[%s607 + $0xc] sm:$0xf]
        %v2110 = vld [vmem:[%s607 + $0x10] sm:$0xf]
        %v2111 = vld [vmem:[%s607 + $0x14] sm:$0xf]
        %v2112 = vld [vmem:[%s607 + $0x18] sm:$0xf]
        %2113 = vst [vmem:[%s2098 + $0x4] sm:$0xf] %v2106
        %2114 = vst [vmem:[%s2098 + $0x18] sm:$0xf] %v2107
        %2115 = vst [vmem:[%s2098 + $0x2c] sm:$0xf] %v2108
        %2116 = vst [vmem:[%s2098 + $0x40] sm:$0xf] %v2109
        %2117 = vst [vmem:[%s2098 + $0x54] sm:$0xf] %v2110
        %2118 = vst [vmem:[%s2098 + $0x68] sm:$0xf] %v2111
        %2119 = vst [vmem:[%s2098 + $0x7c] sm:$0xf] %v2112
        %v2120 = vld [vmem:[%s622] sm:$0xf]
        %v2121 = vld [vmem:[%s622 + $0x4] sm:$0xf]
        %v2122 = vld [vmem:[%s622 + $0x8] sm:$0xf]
        %v2123 = vld [vmem:[%s622 + $0xc] sm:$0xf]
        %v2124 = vld [vmem:[%s622 + $0x10] sm:$0xf]
        %v2125 = vld [vmem:[%s622 + $0x14] sm:$0xf]
        %v2126 = vld [vmem:[%s622 + $0x18] sm:$0xf]
        %2127 = vst [vmem:[%s2098 + $0x8] sm:$0xf] %v2120
        %2128 = vst [vmem:[%s2098 + $0x1c] sm:$0xf] %v2121
        %2129 = vst [vmem:[%s2098 + $0x30] sm:$0xf] %v2122
        %2130 = vst [vmem:[%s2098 + $0x44] sm:$0xf] %v2123
        %2131 = vst [vmem:[%s2098 + $0x58] sm:$0xf] %v2124
        %2132 = vst [vmem:[%s2098 + $0x6c] sm:$0xf] %v2125
        %2133 = vst [vmem:[%s2098 + $0x80] sm:$0xf] %v2126
        %v2134 = vld [vmem:[%s694] sm:$0xf]
        %v2135 = vld [vmem:[%s694 + $0x4] sm:$0xf]
        %v2136 = vld [vmem:[%s694 + $0x8] sm:$0xf]
        %v2137 = vld [vmem:[%s694 + $0xc] sm:$0xf]
        %v2138 = vld [vmem:[%s694 + $0x10] sm:$0xf]
        %v2139 = vld [vmem:[%s694 + $0x14] sm:$0xf]
        %v2140 = vld [vmem:[%s694 + $0x18] sm:$0xf]
        %2141 = vst [vmem:[%s2098 + $0xc] sm:$0xf] %v2134
        %2142 = vst [vmem:[%s2098 + $0x20] sm:$0xf] %v2135
        %2143 = vst [vmem:[%s2098 + $0x34] sm:$0xf] %v2136
        %2144 = vst [vmem:[%s2098 + $0x48] sm:$0xf] %v2137
        %2145 = vst [vmem:[%s2098 + $0x5c] sm:$0xf] %v2138
        %2146 = vst [vmem:[%s2098 + $0x70] sm:$0xf] %v2139
        %2147 = vst [vmem:[%s2098 + $0x84] sm:$0xf] %v2140
        %s2148 = scalar_lea.vmem %s509, 168 [#allocation5]
        %v2149 = vld [vmem:[%s2148] sm:$0xf]
        %v2150 = vld [vmem:[%s2148 + $0x4] sm:$0xf]
        %v2151 = vld [vmem:[%s2148 + $0x8] sm:$0xf]
        %v2152 = vld [vmem:[%s2148 + $0xc] sm:$0xf]
        %v2153 = vld [vmem:[%s2148 + $0x10] sm:$0xf]
        %v2154 = vld [vmem:[%s2148 + $0x14] sm:$0xf]
        %v2155 = vld [vmem:[%s2148 + $0x18] sm:$0xf]
        %2156 = vst [vmem:[%s2098 + $0x10] sm:$0xf] %v2149
        %2157 = vst [vmem:[%s2098 + $0x24] sm:$0xf] %v2150
        %2158 = vst [vmem:[%s2098 + $0x38] sm:$0xf] %v2151
        %2159 = vst [vmem:[%s2098 + $0x4c] sm:$0xf] %v2152
        %2160 = vst [vmem:[%s2098 + $0x60] sm:$0xf] %v2153
        %2161 = vst [vmem:[%s2098 + $0x74] sm:$0xf] %v2154
        %2162 = vst [vmem:[%s2098 + $0x88] sm:$0xf] %v2155
        %v2163 = vld [vmem:[%s607] sm:$0xf]
        %v2164 = vld [vmem:[%s607 + $0x4] sm:$0xf]
        %v2165 = vld [vmem:[%s607 + $0x8] sm:$0xf]
        %v2166 = vld [vmem:[%s607 + $0xc] sm:$0xf]
        %v2167 = vld [vmem:[%s607 + $0x10] sm:$0xf]
        %v2168 = vld [vmem:[%s607 + $0x14] sm:$0xf]
        %v2169 = vld [vmem:[%s607 + $0x18] sm:$0xf]
        %s2170 = scalar_lea.vmem [#allocation2], 420
        %2171 = vst [vmem:[%s2170] sm:$0xf] %v2163
        %2172 = vst [vmem:[%s2170 + $0x14] sm:$0xf] %v2164
        %2173 = vst [vmem:[%s2170 + $0x28] sm:$0xf] %v2165
        %2174 = vst [vmem:[%s2170 + $0x3c] sm:$0xf] %v2166
        %2175 = vst [vmem:[%s2170 + $0x50] sm:$0xf] %v2167
        %2176 = vst [vmem:[%s2170 + $0x64] sm:$0xf] %v2168
        %2177 = vst [vmem:[%s2170 + $0x78] sm:$0xf] %v2169
        %v2178 = vld [vmem:[%s622] sm:$0xf]
        %v2179 = vld [vmem:[%s622 + $0x4] sm:$0xf]
        %v2180 = vld [vmem:[%s622 + $0x8] sm:$0xf]
        %v2181 = vld [vmem:[%s622 + $0xc] sm:$0xf]
        %v2182 = vld [vmem:[%s622 + $0x10] sm:$0xf]
        %v2183 = vld [vmem:[%s622 + $0x14] sm:$0xf]
        %v2184 = vld [vmem:[%s622 + $0x18] sm:$0xf]
        %2185 = vst [vmem:[%s2170 + $0x4] sm:$0xf] %v2178
        %2186 = vst [vmem:[%s2170 + $0x18] sm:$0xf] %v2179
        %2187 = vst [vmem:[%s2170 + $0x2c] sm:$0xf] %v2180
        %2188 = vst [vmem:[%s2170 + $0x40] sm:$0xf] %v2181
        %2189 = vst [vmem:[%s2170 + $0x54] sm:$0xf] %v2182
        %2190 = vst [vmem:[%s2170 + $0x68] sm:$0xf] %v2183
        %2191 = vst [vmem:[%s2170 + $0x7c] sm:$0xf] %v2184
        %v2192 = vld [vmem:[%s694] sm:$0xf]
        %v2193 = vld [vmem:[%s694 + $0x4] sm:$0xf]
        %v2194 = vld [vmem:[%s694 + $0x8] sm:$0xf]
        %v2195 = vld [vmem:[%s694 + $0xc] sm:$0xf]
        %v2196 = vld [vmem:[%s694 + $0x10] sm:$0xf]
        %v2197 = vld [vmem:[%s694 + $0x14] sm:$0xf]
        %v2198 = vld [vmem:[%s694 + $0x18] sm:$0xf]
        %2199 = vst [vmem:[%s2170 + $0x8] sm:$0xf] %v2192
        %2200 = vst [vmem:[%s2170 + $0x1c] sm:$0xf] %v2193
        %2201 = vst [vmem:[%s2170 + $0x30] sm:$0xf] %v2194
        %2202 = vst [vmem:[%s2170 + $0x44] sm:$0xf] %v2195
        %2203 = vst [vmem:[%s2170 + $0x58] sm:$0xf] %v2196
        %2204 = vst [vmem:[%s2170 + $0x6c] sm:$0xf] %v2197
        %2205 = vst [vmem:[%s2170 + $0x80] sm:$0xf] %v2198
        %v2206 = vld [vmem:[%s2148] sm:$0xf]
        %v2207 = vld [vmem:[%s2148 + $0x4] sm:$0xf]
        %v2208 = vld [vmem:[%s2148 + $0x8] sm:$0xf]
        %v2209 = vld [vmem:[%s2148 + $0xc] sm:$0xf]
        %v2210 = vld [vmem:[%s2148 + $0x10] sm:$0xf]
        %v2211 = vld [vmem:[%s2148 + $0x14] sm:$0xf]
        %v2212 = vld [vmem:[%s2148 + $0x18] sm:$0xf]
        %2213 = vst [vmem:[%s2170 + $0xc] sm:$0xf] %v2206
        %2214 = vst [vmem:[%s2170 + $0x20] sm:$0xf] %v2207
        %2215 = vst [vmem:[%s2170 + $0x34] sm:$0xf] %v2208
        %2216 = vst [vmem:[%s2170 + $0x48] sm:$0xf] %v2209
        %2217 = vst [vmem:[%s2170 + $0x5c] sm:$0xf] %v2210
        %2218 = vst [vmem:[%s2170 + $0x70] sm:$0xf] %v2211
        %2219 = vst [vmem:[%s2170 + $0x84] sm:$0xf] %v2212
        %s2220 = scalar_lea.vmem %s509, 196 [#allocation5]
        %v2221 = vld [vmem:[%s2220] sm:$0xf]
        %v2222 = vld [vmem:[%s2220 + $0x4] sm:$0xf]
        %v2223 = vld [vmem:[%s2220 + $0x8] sm:$0xf]
        %v2224 = vld [vmem:[%s2220 + $0xc] sm:$0xf]
        %v2225 = vld [vmem:[%s2220 + $0x10] sm:$0xf]
        %v2226 = vld [vmem:[%s2220 + $0x14] sm:$0xf]
        %v2227 = vld [vmem:[%s2220 + $0x18] sm:$0xf]
        %2228 = vst [vmem:[%s2170 + $0x10] sm:$0xf] %v2221
        %2229 = vst [vmem:[%s2170 + $0x24] sm:$0xf] %v2222
        %2230 = vst [vmem:[%s2170 + $0x38] sm:$0xf] %v2223
        %2231 = vst [vmem:[%s2170 + $0x4c] sm:$0xf] %v2224
        %2232 = vst [vmem:[%s2170 + $0x60] sm:$0xf] %v2225
        %2233 = vst [vmem:[%s2170 + $0x74] sm:$0xf] %v2226
        %2234 = vst [vmem:[%s2170 + $0x88] sm:$0xf] %v2227
        %v2235 = vld [vmem:[%s2098] sm:$0xff]
        %v2236 = vld [vmem:[%s2098 + $0x8] sm:$0xff]
        %v2237 = vld [vmem:[%s2098 + $0x10] sm:$0xf]
        %v2238 = vld [vmem:[%s2098 + $0x14] sm:$0xff]
        %v2239 = vld [vmem:[%s2098 + $0x1c] sm:$0xff]
        %v2240 = vld [vmem:[%s2098 + $0x24] sm:$0xf]
        %v2241 = vld [vmem:[%s2098 + $0x28] sm:$0xff]
        %v2242 = vld [vmem:[%s2098 + $0x30] sm:$0xff]
        %v2243 = vld [vmem:[%s2098 + $0x38] sm:$0xf]
        %v2244 = vld [vmem:[%s2098 + $0x3c] sm:$0xff]
        %v2245 = vld [vmem:[%s2098 + $0x44] sm:$0xff]
        %v2246 = vld [vmem:[%s2098 + $0x4c] sm:$0xf]
        %v2247 = vld [vmem:[%s2098 + $0x50] sm:$0xff]
        %v2248 = vld [vmem:[%s2098 + $0x58] sm:$0xff]
        %v2249 = vld [vmem:[%s2098 + $0x60] sm:$0xf]
        %v2250 = vld [vmem:[%s2098 + $0x64] sm:$0xff]
        %v2251 = vld [vmem:[%s2098 + $0x6c] sm:$0xff]
        %v2252 = vld [vmem:[%s2098 + $0x74] sm:$0xf]
        %v2253 = vld [vmem:[%s2098 + $0x78] sm:$0xff]
        %v2254 = vld [vmem:[%s2098 + $0x80] sm:$0xff]
        %v2255 = vld [vmem:[%s2098 + $0x88] sm:$0xf]
        %v2256 = vld [vmem:[%s1] sm:$0xff]
        %v2257 = vld [vmem:[%s1 + $0x8] sm:$0xff]
        %v2258 = vld [vmem:[%s1 + $0x10] sm:$0xff]
        %v2259 = vld [vmem:[%s1 + $0x18] sm:$0xff]
        %v2260 = vld [vmem:[%s1 + $0x20] sm:$0xff]
        %v2261 = vld [vmem:[%s1 + $0x28] sm:$0xff]
        %v2262 = vld [vmem:[%s1 + $0x30] sm:$0xff]
        %v2263 = vld [vmem:[%s1 + $0x38] sm:$0xff]
        %v2264 = vld [vmem:[%s1 + $0x40] sm:$0xff]
        %v2265 = vld [vmem:[%s1 + $0x48] sm:$0xff]
        %v2266 = vld [vmem:[%s1 + $0x50] sm:$0xff]
        %v2267 = vld [vmem:[%s1 + $0x58] sm:$0xff]
        %v2268 = vld [vmem:[%s1 + $0x60] sm:$0xff]
        %v2269 = vld [vmem:[%s1 + $0x68] sm:$0xff]
        %v2270 = vld [vmem:[%s1 + $0x70] sm:$0xff]
        %v2271 = vld [vmem:[%s1 + $0x78] sm:$0xff]
        %v2272 = vld [vmem:[%s1 + $0x80] sm:$0xff]
        %v2273 = vld [vmem:[%s1 + $0x88] sm:$0xff]
        %v2274 = vld [vmem:[%s1 + $0x90] sm:$0xff]
        %v2275 = vld [vmem:[%s1 + $0x98] sm:$0xff]
        %v2276 = vld [vmem:[%s1 + $0xa0] sm:$0xff]
        %v2277 = vld [vmem:[%s1 + $0xa8] sm:$0xff]
        %v2278 = vld [vmem:[%s1 + $0xb0] sm:$0xff]
        %v2279 = vld [vmem:[%s1 + $0xb8] sm:$0xff]
        %v2280 = vld [vmem:[%s1 + $0xc0] sm:$0xff]
        %v2281 = vld [vmem:[%s1 + $0xc8] sm:$0xff]
        %v2282 = vld [vmem:[%s1 + $0xd0] sm:$0xff]
        %v2283 = vld [vmem:[%s1 + $0xd8] sm:$0xff]
        %v2284 = vld [vmem:[%s1 + $0xe0] sm:$0xff]
        %v2285 = vld [vmem:[%s1 + $0xe8] sm:$0xff]
        %v2286 = vld [vmem:[%s1 + $0xf0] sm:$0xff]
        %v2287 = vld [vmem:[%s1 + $0xf8] sm:$0xff]
        %v2288 = vld [vmem:[%s1 + $0x100] sm:$0xff]
        %v2289 = vld [vmem:[%s1 + $0x108] sm:$0xff]
        %v2290 = vld [vmem:[%s1 + $0x110] sm:$0xff]
        %v2291 = vld [vmem:[%s1 + $0x118] sm:$0xff]
        %v2292 = vld [vmem:[%s1 + $0x120] sm:$0xff]
        %v2293 = vld [vmem:[%s1 + $0x128] sm:$0xff]
        %v2294 = vld [vmem:[%s1 + $0x130] sm:$0xff]
        %v2295 = vld [vmem:[%s1 + $0x138] sm:$0xff]
        %v2296 = vld [vmem:[%s1 + $0x140] sm:$0xff]
        %v2297 = vld [vmem:[%s1 + $0x148] sm:$0xff]
        %v2298 = vld [vmem:[%s1 + $0x150] sm:$0xff]
        %v2299 = vld [vmem:[%s1 + $0x158] sm:$0xff]
        %v2300 = vld [vmem:[%s1 + $0x160] sm:$0xff]
        %v2301 = vld [vmem:[%s1 + $0x168] sm:$0xff]
        %v2302 = vld [vmem:[%s1 + $0x170] sm:$0xff]
        %v2303 = vld [vmem:[%s1 + $0x178] sm:$0xff]
        %v2304 = vld [vmem:[%s1 + $0x180] sm:$0xff]
        %v2305 = vld [vmem:[%s1 + $0x188] sm:$0xff]
        %v2306 = vld [vmem:[%s1 + $0x190] sm:$0xff]
        %v2307 = vld [vmem:[%s1 + $0x198] sm:$0xff]
        %v2308 = vld [vmem:[%s1 + $0x1a0] sm:$0xff]
        %v2309 = vld [vmem:[%s1 + $0x1a8] sm:$0xff]
        %v2310 = vld [vmem:[%s1 + $0x1b0] sm:$0xff]
        %v2311 = vld [vmem:[%s1 + $0x1b8] sm:$0xff]
        %v2312 = vld [vmem:[%s1 + $0x1c0] sm:$0xff]
        %v2313 = vld [vmem:[%s1 + $0x1c8] sm:$0xff]
        %v2314 = vld [vmem:[%s1 + $0x1d0] sm:$0xff]
        %v2315 = vld [vmem:[%s1 + $0x1d8] sm:$0xff]
        %v2316 = vld [vmem:[%s1 + $0x1e0] sm:$0xff]
        %v2317 = vld [vmem:[%s1 + $0x1e8] sm:$0xff]
        %v2318 = vld [vmem:[%s1 + $0x1f0] sm:$0xff]
        %v2319 = vld [vmem:[%s1 + $0x1f8] sm:$0xff]
        %v2320 = vld [vmem:[%s1 + $0x200] sm:$0xff]
        %v2321 = vld [vmem:[%s1 + $0x208] sm:$0xff]
        %v2322 = vld [vmem:[%s1 + $0x210] sm:$0xff]
        %v2323 = vld [vmem:[%s1 + $0x218] sm:$0xff]
        %v2324 = vld [vmem:[%s1 + $0x220] sm:$0xff]
        %v2325 = vld [vmem:[%s1 + $0x228] sm:$0xff]
        %v2326 = vld [vmem:[%s1 + $0x230] sm:$0xff]
        %v2327 = vld [vmem:[%s1 + $0x238] sm:$0xff]
        %v2328 = vld [vmem:[%s1 + $0x240] sm:$0xff]
        %v2329 = vld [vmem:[%s1 + $0x248] sm:$0xff]
        %v2330 = vld [vmem:[%s1 + $0x250] sm:$0xff]
        %v2331 = vld [vmem:[%s1 + $0x258] sm:$0xff]
        %v2332 = vld [vmem:[%s1 + $0x260] sm:$0xff]
        %v2333 = vld [vmem:[%s1 + $0x268] sm:$0xff]
        %v2334 = vld [vmem:[%s1 + $0x270] sm:$0xff]
        %v2335 = vld [vmem:[%s1 + $0x278] sm:$0xff]
        %v2357 = vunpack.c.l.b16 %v2235
        %v2358 = vunpack.c.h.b16 %v2235
        %v2359 = vunpack.c.l.b16 %v2236
        %v2360 = vunpack.c.h.b16 %v2236
        %v2361 = vunpack.c.l.b16 %v2237
        %v2362 = vunpack.c.l.b16 %v2238
        %v2363 = vunpack.c.h.b16 %v2238
        %v2364 = vunpack.c.l.b16 %v2239
        %v2365 = vunpack.c.h.b16 %v2239
        %v2366 = vunpack.c.l.b16 %v2240
        %v2367 = vunpack.c.l.b16 %v2241
        %v2368 = vunpack.c.h.b16 %v2241
        %v2369 = vunpack.c.l.b16 %v2242
        %v2370 = vunpack.c.h.b16 %v2242
        %v2371 = vunpack.c.l.b16 %v2243
        %v2372 = vunpack.c.l.b16 %v2244
        %v2373 = vunpack.c.h.b16 %v2244
        %v2374 = vunpack.c.l.b16 %v2245
        %v2375 = vunpack.c.h.b16 %v2245
        %v2376 = vunpack.c.l.b16 %v2246
        %v2377 = vunpack.c.l.b16 %v2247
        %v2378 = vunpack.c.h.b16 %v2247
        %v2379 = vunpack.c.l.b16 %v2248
        %v2380 = vunpack.c.h.b16 %v2248
        %v2381 = vunpack.c.l.b16 %v2249
        %v2382 = vunpack.c.l.b16 %v2250
        %v2383 = vunpack.c.h.b16 %v2250
        %v2384 = vunpack.c.l.b16 %v2251
        %v2385 = vunpack.c.h.b16 %v2251
        %v2386 = vunpack.c.l.b16 %v2252
        %v2387 = vunpack.c.l.b16 %v2253
        %v2388 = vunpack.c.h.b16 %v2253
        %v2389 = vunpack.c.l.b16 %v2254
        %v2390 = vunpack.c.h.b16 %v2254
        %v2391 = vunpack.c.l.b16 %v2255
        %v2392 = vpack.c.b16 %v2362, %v2357
        %v2393 = vpack.c.b16 %v2363, %v2358
        %v2394 = vpack.c.b16 %v2364, %v2359
        %v2395 = vpack.c.b16 %v2365, %v2360
        %v2396 = vpack.c.b16 %v2366, %v2361
        %v2397 = vpack.c.b16 %v2372, %v2367
        %v2398 = vpack.c.b16 %v2373, %v2368
        %v2399 = vpack.c.b16 %v2374, %v2369
        %v2400 = vpack.c.b16 %v2375, %v2370
        %v2401 = vpack.c.b16 %v2376, %v2371
        %v2402 = vpack.c.b16 %v2382, %v2377
        %v2403 = vpack.c.b16 %v2383, %v2378
        %v2404 = vpack.c.b16 %v2384, %v2379
        %v2405 = vpack.c.b16 %v2385, %v2380
        %v2406 = vpack.c.b16 %v2386, %v2381
        %v2407 = vpack.c.b16 %v2387, %v2387
        %v2408 = vpack.c.b16 %v2388, %v2388
        %v2409 = vpack.c.b16 %v2389, %v2389
        %v2410 = vpack.c.b16 %v2390, %v2390
        %v2411 = vpack.c.b16 %v2391, %v2391
        %v2512 = vunpack.c.l.b16 %v2256
        %v2513 = vunpack.c.h.b16 %v2256
        %v2514 = vunpack.c.l.b16 %v2257
        %v2515 = vunpack.c.h.b16 %v2257
        %v2516 = vunpack.c.l.b16 %v2258
        %v2517 = vunpack.c.h.b16 %v2258
        %v2518 = vunpack.c.l.b16 %v2259
        %v2519 = vunpack.c.h.b16 %v2259
        %v2520 = vunpack.c.l.b16 %v2260
        %v2521 = vunpack.c.h.b16 %v2260
        %v2522 = vunpack.c.l.b16 %v2261
        %v2523 = vunpack.c.h.b16 %v2261
        %v2524 = vunpack.c.l.b16 %v2262
        %v2525 = vunpack.c.h.b16 %v2262
        %v2526 = vunpack.c.l.b16 %v2263
        %v2527 = vunpack.c.h.b16 %v2263
        %v2528 = vunpack.c.l.b16 %v2264
        %v2529 = vunpack.c.h.b16 %v2264
        %v2530 = vunpack.c.l.b16 %v2265
        %v2531 = vunpack.c.h.b16 %v2265
        %v2532 = vunpack.c.l.b16 %v2266
        %v2533 = vunpack.c.h.b16 %v2266
        %v2534 = vunpack.c.l.b16 %v2267
        %v2535 = vunpack.c.h.b16 %v2267
        %v2536 = vunpack.c.l.b16 %v2268
        %v2537 = vunpack.c.h.b16 %v2268
        %v2538 = vunpack.c.l.b16 %v2269
        %v2539 = vunpack.c.h.b16 %v2269
        %v2540 = vunpack.c.l.b16 %v2270
        %v2541 = vunpack.c.h.b16 %v2270
        %v2542 = vunpack.c.l.b16 %v2271
        %v2543 = vunpack.c.h.b16 %v2271
        %v2544 = vunpack.c.l.b16 %v2272
        %v2545 = vunpack.c.h.b16 %v2272
        %v2546 = vunpack.c.l.b16 %v2273
        %v2547 = vunpack.c.h.b16 %v2273
        %v2548 = vunpack.c.l.b16 %v2274
        %v2549 = vunpack.c.h.b16 %v2274
        %v2550 = vunpack.c.l.b16 %v2275
        %v2551 = vunpack.c.h.b16 %v2275
        %v2552 = vunpack.c.l.b16 %v2276
        %v2553 = vunpack.c.h.b16 %v2276
        %v2554 = vunpack.c.l.b16 %v2277
        %v2555 = vunpack.c.h.b16 %v2277
        %v2556 = vunpack.c.l.b16 %v2278
        %v2557 = vunpack.c.h.b16 %v2278
        %v2558 = vunpack.c.l.b16 %v2279
        %v2559 = vunpack.c.h.b16 %v2279
        %v2560 = vunpack.c.l.b16 %v2280
        %v2561 = vunpack.c.h.b16 %v2280
        %v2562 = vunpack.c.l.b16 %v2281
        %v2563 = vunpack.c.h.b16 %v2281
        %v2564 = vunpack.c.l.b16 %v2282
        %v2565 = vunpack.c.h.b16 %v2282
        %v2566 = vunpack.c.l.b16 %v2283
        %v2567 = vunpack.c.h.b16 %v2283
        %v2568 = vunpack.c.l.b16 %v2284
        %v2569 = vunpack.c.h.b16 %v2284
        %v2570 = vunpack.c.l.b16 %v2285
        %v2571 = vunpack.c.h.b16 %v2285
        %v2572 = vunpack.c.l.b16 %v2286
        %v2573 = vunpack.c.h.b16 %v2286
        %v2574 = vunpack.c.l.b16 %v2287
        %v2575 = vunpack.c.h.b16 %v2287
        %v2576 = vunpack.c.l.b16 %v2288
        %v2577 = vunpack.c.h.b16 %v2288
        %v2578 = vunpack.c.l.b16 %v2289
        %v2579 = vunpack.c.h.b16 %v2289
        %v2580 = vunpack.c.l.b16 %v2290
        %v2581 = vunpack.c.h.b16 %v2290
        %v2582 = vunpack.c.l.b16 %v2291
        %v2583 = vunpack.c.h.b16 %v2291
        %v2584 = vunpack.c.l.b16 %v2292
        %v2585 = vunpack.c.h.b16 %v2292
        %v2586 = vunpack.c.l.b16 %v2293
        %v2587 = vunpack.c.h.b16 %v2293
        %v2588 = vunpack.c.l.b16 %v2294
        %v2589 = vunpack.c.h.b16 %v2294
        %v2590 = vunpack.c.l.b16 %v2295
        %v2591 = vunpack.c.h.b16 %v2295
        %v2592 = vunpack.c.l.b16 %v2296
        %v2593 = vunpack.c.h.b16 %v2296
        %v2594 = vunpack.c.l.b16 %v2297
        %v2595 = vunpack.c.h.b16 %v2297
        %v2596 = vunpack.c.l.b16 %v2298
        %v2597 = vunpack.c.h.b16 %v2298
        %v2598 = vunpack.c.l.b16 %v2299
        %v2599 = vunpack.c.h.b16 %v2299
        %v2600 = vunpack.c.l.b16 %v2300
        %v2601 = vunpack.c.h.b16 %v2300
        %v2602 = vunpack.c.l.b16 %v2301
        %v2603 = vunpack.c.h.b16 %v2301
        %v2604 = vunpack.c.l.b16 %v2302
        %v2605 = vunpack.c.h.b16 %v2302
        %v2606 = vunpack.c.l.b16 %v2303
        %v2607 = vunpack.c.h.b16 %v2303
        %v2608 = vunpack.c.l.b16 %v2304
        %v2609 = vunpack.c.h.b16 %v2304
        %v2610 = vunpack.c.l.b16 %v2305
        %v2611 = vunpack.c.h.b16 %v2305
        %v2612 = vunpack.c.l.b16 %v2306
        %v2613 = vunpack.c.h.b16 %v2306
        %v2614 = vunpack.c.l.b16 %v2307
        %v2615 = vunpack.c.h.b16 %v2307
        %v2616 = vunpack.c.l.b16 %v2308
        %v2617 = vunpack.c.h.b16 %v2308
        %v2618 = vunpack.c.l.b16 %v2309
        %v2619 = vunpack.c.h.b16 %v2309
        %v2620 = vunpack.c.l.b16 %v2310
        %v2621 = vunpack.c.h.b16 %v2310
        %v2622 = vunpack.c.l.b16 %v2311
        %v2623 = vunpack.c.h.b16 %v2311
        %v2624 = vunpack.c.l.b16 %v2312
        %v2625 = vunpack.c.h.b16 %v2312
        %v2626 = vunpack.c.l.b16 %v2313
        %v2627 = vunpack.c.h.b16 %v2313
        %v2628 = vunpack.c.l.b16 %v2314
        %v2629 = vunpack.c.h.b16 %v2314
        %v2630 = vunpack.c.l.b16 %v2315
        %v2631 = vunpack.c.h.b16 %v2315
        %v2632 = vunpack.c.l.b16 %v2316
        %v2633 = vunpack.c.h.b16 %v2316
        %v2634 = vunpack.c.l.b16 %v2317
        %v2635 = vunpack.c.h.b16 %v2317
        %v2636 = vunpack.c.l.b16 %v2318
        %v2637 = vunpack.c.h.b16 %v2318
        %v2638 = vunpack.c.l.b16 %v2319
        %v2639 = vunpack.c.h.b16 %v2319
        %v2640 = vunpack.c.l.b16 %v2320
        %v2641 = vunpack.c.h.b16 %v2320
        %v2642 = vunpack.c.l.b16 %v2321
        %v2643 = vunpack.c.h.b16 %v2321
        %v2644 = vunpack.c.l.b16 %v2322
        %v2645 = vunpack.c.h.b16 %v2322
        %v2646 = vunpack.c.l.b16 %v2323
        %v2647 = vunpack.c.h.b16 %v2323
        %v2648 = vunpack.c.l.b16 %v2324
        %v2649 = vunpack.c.h.b16 %v2324
        %v2650 = vunpack.c.l.b16 %v2325
        %v2651 = vunpack.c.h.b16 %v2325
        %v2652 = vunpack.c.l.b16 %v2326
        %v2653 = vunpack.c.h.b16 %v2326
        %v2654 = vunpack.c.l.b16 %v2327
        %v2655 = vunpack.c.h.b16 %v2327
        %v2656 = vunpack.c.l.b16 %v2328
        %v2657 = vunpack.c.h.b16 %v2328
        %v2658 = vunpack.c.l.b16 %v2329
        %v2659 = vunpack.c.h.b16 %v2329
        %v2660 = vunpack.c.l.b16 %v2330
        %v2661 = vunpack.c.h.b16 %v2330
        %v2662 = vunpack.c.l.b16 %v2331
        %v2663 = vunpack.c.h.b16 %v2331
        %v2664 = vunpack.c.l.b16 %v2332
        %v2665 = vunpack.c.h.b16 %v2332
        %v2666 = vunpack.c.l.b16 %v2333
        %v2667 = vunpack.c.h.b16 %v2333
        %v2668 = vunpack.c.l.b16 %v2334
        %v2669 = vunpack.c.h.b16 %v2334
        %v2670 = vunpack.c.l.b16 %v2335
        %v2671 = vunpack.c.h.b16 %v2335
        %v2672 = vpack.c.b16 %v2514, %v2512
        %v2673 = vpack.c.b16 %v2515, %v2513
        %v2674 = vpack.c.b16 %v2518, %v2516
        %v2675 = vpack.c.b16 %v2519, %v2517
        %v2676 = vpack.c.b16 %v2522, %v2520
        %v2677 = vpack.c.b16 %v2523, %v2521
        %v2678 = vpack.c.b16 %v2526, %v2524
        %v2679 = vpack.c.b16 %v2527, %v2525
        %v2680 = vpack.c.b16 %v2530, %v2528
        %v2681 = vpack.c.b16 %v2531, %v2529
        %v2682 = vpack.c.b16 %v2534, %v2532
        %v2683 = vpack.c.b16 %v2535, %v2533
        %v2684 = vpack.c.b16 %v2538, %v2536
        %v2685 = vpack.c.b16 %v2539, %v2537
        %v2686 = vpack.c.b16 %v2542, %v2540
        %v2687 = vpack.c.b16 %v2543, %v2541
        %v2688 = vpack.c.b16 %v2546, %v2544
        %v2689 = vpack.c.b16 %v2547, %v2545
        %v2690 = vpack.c.b16 %v2550, %v2548
        %v2691 = vpack.c.b16 %v2551, %v2549
        %v2692 = vpack.c.b16 %v2554, %v2552
        %v2693 = vpack.c.b16 %v2555, %v2553
        %v2694 = vpack.c.b16 %v2558, %v2556
        %v2695 = vpack.c.b16 %v2559, %v2557
        %v2696 = vpack.c.b16 %v2562, %v2560
        %v2697 = vpack.c.b16 %v2563, %v2561
        %v2698 = vpack.c.b16 %v2566, %v2564
        %v2699 = vpack.c.b16 %v2567, %v2565
        %v2700 = vpack.c.b16 %v2570, %v2568
        %v2701 = vpack.c.b16 %v2571, %v2569
        %v2702 = vpack.c.b16 %v2574, %v2572
        %v2703 = vpack.c.b16 %v2575, %v2573
        %v2704 = vpack.c.b16 %v2578, %v2576
        %v2705 = vpack.c.b16 %v2579, %v2577
        %v2706 = vpack.c.b16 %v2582, %v2580
        %v2707 = vpack.c.b16 %v2583, %v2581
        %v2708 = vpack.c.b16 %v2586, %v2584
        %v2709 = vpack.c.b16 %v2587, %v2585
        %v2710 = vpack.c.b16 %v2590, %v2588
        %v2711 = vpack.c.b16 %v2591, %v2589
        %v2712 = vpack.c.b16 %v2594, %v2592
        %v2713 = vpack.c.b16 %v2595, %v2593
        %v2714 = vpack.c.b16 %v2598, %v2596
        %v2715 = vpack.c.b16 %v2599, %v2597
        %v2716 = vpack.c.b16 %v2602, %v2600
        %v2717 = vpack.c.b16 %v2603, %v2601
        %v2718 = vpack.c.b16 %v2606, %v2604
        %v2719 = vpack.c.b16 %v2607, %v2605
        %v2720 = vpack.c.b16 %v2610, %v2608
        %v2721 = vpack.c.b16 %v2611, %v2609
        %v2722 = vpack.c.b16 %v2614, %v2612
        %v2723 = vpack.c.b16 %v2615, %v2613
        %v2724 = vpack.c.b16 %v2618, %v2616
        %v2725 = vpack.c.b16 %v2619, %v2617
        %v2726 = vpack.c.b16 %v2622, %v2620
        %v2727 = vpack.c.b16 %v2623, %v2621
        %v2728 = vpack.c.b16 %v2626, %v2624
        %v2729 = vpack.c.b16 %v2627, %v2625
        %v2730 = vpack.c.b16 %v2630, %v2628
        %v2731 = vpack.c.b16 %v2631, %v2629
        %v2732 = vpack.c.b16 %v2634, %v2632
        %v2733 = vpack.c.b16 %v2635, %v2633
        %v2734 = vpack.c.b16 %v2638, %v2636
        %v2735 = vpack.c.b16 %v2639, %v2637
        %v2736 = vpack.c.b16 %v2642, %v2640
        %v2737 = vpack.c.b16 %v2643, %v2641
        %v2738 = vpack.c.b16 %v2646, %v2644
        %v2739 = vpack.c.b16 %v2647, %v2645
        %v2740 = vpack.c.b16 %v2650, %v2648
        %v2741 = vpack.c.b16 %v2651, %v2649
        %v2742 = vpack.c.b16 %v2654, %v2652
        %v2743 = vpack.c.b16 %v2655, %v2653
        %v2744 = vpack.c.b16 %v2658, %v2656
        %v2745 = vpack.c.b16 %v2659, %v2657
        %v2746 = vpack.c.b16 %v2662, %v2660
        %v2747 = vpack.c.b16 %v2663, %v2661
        %v2748 = vpack.c.b16 %v2666, %v2664
        %v2749 = vpack.c.b16 %v2667, %v2665
        %v2750 = vpack.c.b16 %v2670, %v2668
        %v2751 = vpack.c.b16 %v2671, %v2669
        %2832 = vmatpush.bf16.msra.mxu0 %v2686
        %2833 = vmatpush.bf16.msra.mxu0 %v2684
        %2834 = vmatpush.bf16.msra.mxu0 %v2682
        %2835 = vmatpush.bf16.msra.mxu0 %v2680
        %2836 = vmatpush.bf16.msra.mxu0 %v2678
        %2837 = vmatpush.bf16.msra.mxu0 %v2676
        %2838 = vmatpush.bf16.msra.mxu0 %v2674
        %2839 = vmatpush.bf16.msra.mxu0 %v2672
        %2840 = vmatmul.bf16.gmra.mxu0 %v2392
        %v2841 = vpop.f32.mrf.mxu0
        %v2842 = vadd.f32 0.0, %v2841
        %v2843 = vpop.f32.mrf.mxu0
        %v2844 = vadd.f32 0.0, %v2843
        %2845 = vmatmul.bf16.gmra.mxu0 %v2397
        %v2846 = vpop.f32.mrf.mxu0
        %v2847 = vadd.f32 0.0, %v2846
        %v2848 = vpop.f32.mrf.mxu0
        %v2849 = vadd.f32 0.0, %v2848
        %2850 = vmatmul.bf16.gmra.mxu0 %v2402
        %v2851 = vpop.f32.mrf.mxu0
        %v2852 = vadd.f32 0.0, %v2851
        %v2853 = vpop.f32.mrf.mxu0
        %v2854 = vadd.f32 0.0, %v2853
        %2855 = vmatmul.bf16.gmra.mxu0 %v2407
        %v2856 = vpop.f32.mrf.mxu0
        %v2857 = vadd.f32 0.0, %v2856
        %v2858 = vpop.f32.mrf.mxu0
        %2859 = vdwg.mxu0
        %2860 = vmatpush.bf16.msra.mxu0 %v2702
        %2861 = vmatpush.bf16.msra.mxu0 %v2700
        %2862 = vmatpush.bf16.msra.mxu0 %v2698
        %2863 = vmatpush.bf16.msra.mxu0 %v2696
        %2864 = vmatpush.bf16.msra.mxu0 %v2694
        %2865 = vmatpush.bf16.msra.mxu0 %v2692
        %2866 = vmatpush.bf16.msra.mxu0 %v2690
        %2867 = vmatpush.bf16.msra.mxu0 %v2688
        %2868 = vmatmul.bf16.gmra.mxu0 %v2393
        %v2869 = vpop.f32.mrf.mxu0
        %v2870 = vadd.f32 %v2842, %v2869
        %v2871 = vpop.f32.mrf.mxu0
        %v2872 = vadd.f32 %v2844, %v2871
        %2873 = vmatmul.bf16.gmra.mxu0 %v2398
        %v2874 = vpop.f32.mrf.mxu0
        %v2875 = vadd.f32 %v2847, %v2874
        %v2876 = vpop.f32.mrf.mxu0
        %v2877 = vadd.f32 %v2849, %v2876
        %2878 = vmatmul.bf16.gmra.mxu0 %v2403
        %v2879 = vpop.f32.mrf.mxu0
        %v2880 = vadd.f32 %v2852, %v2879
        %v2881 = vpop.f32.mrf.mxu0
        %v2882 = vadd.f32 %v2854, %v2881
        %2883 = vmatmul.bf16.gmra.mxu0 %v2408
        %v2884 = vpop.f32.mrf.mxu0
        %v2885 = vadd.f32 %v2857, %v2884
        %v2886 = vpop.f32.mrf.mxu0
        %2887 = vdwg.mxu0
        %2888 = vmatpush.bf16.msra.mxu0 %v2718
        %2889 = vmatpush.bf16.msra.mxu0 %v2716
        %2890 = vmatpush.bf16.msra.mxu0 %v2714
        %2891 = vmatpush.bf16.msra.mxu0 %v2712
        %2892 = vmatpush.bf16.msra.mxu0 %v2710
        %2893 = vmatpush.bf16.msra.mxu0 %v2708
        %2894 = vmatpush.bf16.msra.mxu0 %v2706
        %2895 = vmatpush.bf16.msra.mxu0 %v2704
        %2896 = vmatmul.bf16.gmra.mxu0 %v2394
        %v2897 = vpop.f32.mrf.mxu0
        %v2898 = vadd.f32 %v2870, %v2897
        %v2899 = vpop.f32.mrf.mxu0
        %v2900 = vadd.f32 %v2872, %v2899
        %2901 = vmatmul.bf16.gmra.mxu0 %v2399
        %v2902 = vpop.f32.mrf.mxu0
        %v2903 = vadd.f32 %v2875, %v2902
        %v2904 = vpop.f32.mrf.mxu0
        %v2905 = vadd.f32 %v2877, %v2904
        %2906 = vmatmul.bf16.gmra.mxu0 %v2404
        %v2907 = vpop.f32.mrf.mxu0
        %v2908 = vadd.f32 %v2880, %v2907
        %v2909 = vpop.f32.mrf.mxu0
        %v2910 = vadd.f32 %v2882, %v2909
        %2911 = vmatmul.bf16.gmra.mxu0 %v2409
        %v2912 = vpop.f32.mrf.mxu0
        %v2913 = vadd.f32 %v2885, %v2912
        %v2914 = vpop.f32.mrf.mxu0
        %2915 = vdwg.mxu0
        %2916 = vmatpush.bf16.msra.mxu0 %v2734
        %2917 = vmatpush.bf16.msra.mxu0 %v2732
        %2918 = vmatpush.bf16.msra.mxu0 %v2730
        %2919 = vmatpush.bf16.msra.mxu0 %v2728
        %2920 = vmatpush.bf16.msra.mxu0 %v2726
        %2921 = vmatpush.bf16.msra.mxu0 %v2724
        %2922 = vmatpush.bf16.msra.mxu0 %v2722
        %2923 = vmatpush.bf16.msra.mxu0 %v2720
        %2924 = vmatmul.bf16.gmra.mxu0 %v2395
        %v2925 = vpop.f32.mrf.mxu0
        %v2926 = vadd.f32 %v2898, %v2925
        %v2927 = vpop.f32.mrf.mxu0
        %v2928 = vadd.f32 %v2900, %v2927
        %2929 = vmatmul.bf16.gmra.mxu0 %v2400
        %v2930 = vpop.f32.mrf.mxu0
        %v2931 = vadd.f32 %v2903, %v2930
        %v2932 = vpop.f32.mrf.mxu0
        %v2933 = vadd.f32 %v2905, %v2932
        %2934 = vmatmul.bf16.gmra.mxu0 %v2405
        %v2935 = vpop.f32.mrf.mxu0
        %v2936 = vadd.f32 %v2908, %v2935
        %v2937 = vpop.f32.mrf.mxu0
        %v2938 = vadd.f32 %v2910, %v2937
        %2939 = vmatmul.bf16.gmra.mxu0 %v2410
        %v2940 = vpop.f32.mrf.mxu0
        %v2941 = vadd.f32 %v2913, %v2940
        %v2942 = vpop.f32.mrf.mxu0
        %2943 = vdwg.mxu0
        %2944 = vmatpush.bf16.msra.mxu0 %v2750
        %2945 = vmatpush.bf16.msra.mxu0 %v2748
        %2946 = vmatpush.bf16.msra.mxu0 %v2746
        %2947 = vmatpush.bf16.msra.mxu0 %v2744
        %2948 = vmatpush.bf16.msra.mxu0 %v2742
        %2949 = vmatpush.bf16.msra.mxu0 %v2740
        %2950 = vmatpush.bf16.msra.mxu0 %v2738
        %2951 = vmatpush.bf16.msra.mxu0 %v2736
        %2952 = vmatmul.bf16.gmra.mxu0 %v2396
        %v2953 = vpop.f32.mrf.mxu0
        %v2954 = vadd.f32 %v2926, %v2953
        %v2955 = vpop.f32.mrf.mxu0
        %v2956 = vadd.f32 %v2928, %v2955
        %2957 = vmatmul.bf16.gmra.mxu0 %v2401
        %v2958 = vpop.f32.mrf.mxu0
        %v2959 = vadd.f32 %v2931, %v2958
        %v2960 = vpop.f32.mrf.mxu0
        %v2961 = vadd.f32 %v2933, %v2960
        %2962 = vmatmul.bf16.gmra.mxu0 %v2406
        %v2963 = vpop.f32.mrf.mxu0
        %v2964 = vadd.f32 %v2936, %v2963
        %v2965 = vpop.f32.mrf.mxu0
        %v2966 = vadd.f32 %v2938, %v2965
        %2967 = vmatmul.bf16.gmra.mxu0 %v2411
        %v2968 = vpop.f32.mrf.mxu0
        %v2969 = vadd.f32 %v2941, %v2968
        %v2970 = vpop.f32.mrf.mxu0
        %2971 = vdwg.mxu0
        %2972 = vmatpush.bf16.msra.mxu0 %v2687
        %2973 = vmatpush.bf16.msra.mxu0 %v2685
        %2974 = vmatpush.bf16.msra.mxu0 %v2683
        %2975 = vmatpush.bf16.msra.mxu0 %v2681
        %2976 = vmatpush.bf16.msra.mxu0 %v2679
        %2977 = vmatpush.bf16.msra.mxu0 %v2677
        %2978 = vmatpush.bf16.msra.mxu0 %v2675
        %2979 = vmatpush.bf16.msra.mxu0 %v2673
        %2980 = vmatmul.bf16.gmra.mxu0 %v2392
        %v2981 = vpop.f32.mrf.mxu0
        %v2982 = vadd.f32 0.0, %v2981
        %v2983 = vpop.f32.mrf.mxu0
        %v2984 = vadd.f32 0.0, %v2983
        %2985 = vmatmul.bf16.gmra.mxu0 %v2397
        %v2986 = vpop.f32.mrf.mxu0
        %v2987 = vadd.f32 0.0, %v2986
        %v2988 = vpop.f32.mrf.mxu0
        %v2989 = vadd.f32 0.0, %v2988
        %2990 = vmatmul.bf16.gmra.mxu0 %v2402
        %v2991 = vpop.f32.mrf.mxu0
        %v2992 = vadd.f32 0.0, %v2991
        %v2993 = vpop.f32.mrf.mxu0
        %v2994 = vadd.f32 0.0, %v2993
        %2995 = vmatmul.bf16.gmra.mxu0 %v2407
        %v2996 = vpop.f32.mrf.mxu0
        %v2997 = vadd.f32 0.0, %v2996
        %v2998 = vpop.f32.mrf.mxu0
        %2999 = vdwg.mxu0
        %3000 = vmatpush.bf16.msra.mxu0 %v2703
        %3001 = vmatpush.bf16.msra.mxu0 %v2701
        %3002 = vmatpush.bf16.msra.mxu0 %v2699
        %3003 = vmatpush.bf16.msra.mxu0 %v2697
        %3004 = vmatpush.bf16.msra.mxu0 %v2695
        %3005 = vmatpush.bf16.msra.mxu0 %v2693
        %3006 = vmatpush.bf16.msra.mxu0 %v2691
        %3007 = vmatpush.bf16.msra.mxu0 %v2689
        %3008 = vmatmul.bf16.gmra.mxu0 %v2393
        %v3009 = vpop.f32.mrf.mxu0
        %v3010 = vadd.f32 %v2982, %v3009
        %v3011 = vpop.f32.mrf.mxu0
        %v3012 = vadd.f32 %v2984, %v3011
        %3013 = vmatmul.bf16.gmra.mxu0 %v2398
        %v3014 = vpop.f32.mrf.mxu0
        %v3015 = vadd.f32 %v2987, %v3014
        %v3016 = vpop.f32.mrf.mxu0
        %v3017 = vadd.f32 %v2989, %v3016
        %3018 = vmatmul.bf16.gmra.mxu0 %v2403
        %v3019 = vpop.f32.mrf.mxu0
        %v3020 = vadd.f32 %v2992, %v3019
        %v3021 = vpop.f32.mrf.mxu0
        %v3022 = vadd.f32 %v2994, %v3021
        %3023 = vmatmul.bf16.gmra.mxu0 %v2408
        %v3024 = vpop.f32.mrf.mxu0
        %v3025 = vadd.f32 %v2997, %v3024
        %v3026 = vpop.f32.mrf.mxu0
        %3027 = vdwg.mxu0
        %3028 = vmatpush.bf16.msra.mxu0 %v2719
        %3029 = vmatpush.bf16.msra.mxu0 %v2717
        %3030 = vmatpush.bf16.msra.mxu0 %v2715
        %3031 = vmatpush.bf16.msra.mxu0 %v2713
        %3032 = vmatpush.bf16.msra.mxu0 %v2711
        %3033 = vmatpush.bf16.msra.mxu0 %v2709
        %3034 = vmatpush.bf16.msra.mxu0 %v2707
        %3035 = vmatpush.bf16.msra.mxu0 %v2705
        %3036 = vmatmul.bf16.gmra.mxu0 %v2394
        %v3037 = vpop.f32.mrf.mxu0
        %v3038 = vadd.f32 %v3010, %v3037
        %v3039 = vpop.f32.mrf.mxu0
        %v3040 = vadd.f32 %v3012, %v3039
        %3041 = vmatmul.bf16.gmra.mxu0 %v2399
        %v3042 = vpop.f32.mrf.mxu0
        %v3043 = vadd.f32 %v3015, %v3042
        %v3044 = vpop.f32.mrf.mxu0
        %v3045 = vadd.f32 %v3017, %v3044
        %3046 = vmatmul.bf16.gmra.mxu0 %v2404
        %v3047 = vpop.f32.mrf.mxu0
        %v3048 = vadd.f32 %v3020, %v3047
        %v3049 = vpop.f32.mrf.mxu0
        %v3050 = vadd.f32 %v3022, %v3049
        %3051 = vmatmul.bf16.gmra.mxu0 %v2409
        %v3052 = vpop.f32.mrf.mxu0
        %v3053 = vadd.f32 %v3025, %v3052
        %v3054 = vpop.f32.mrf.mxu0
        %3055 = vdwg.mxu0
        %3056 = vmatpush.bf16.msra.mxu0 %v2735
        %3057 = vmatpush.bf16.msra.mxu0 %v2733
        %3058 = vmatpush.bf16.msra.mxu0 %v2731
        %3059 = vmatpush.bf16.msra.mxu0 %v2729
        %3060 = vmatpush.bf16.msra.mxu0 %v2727
        %3061 = vmatpush.bf16.msra.mxu0 %v2725
        %3062 = vmatpush.bf16.msra.mxu0 %v2723
        %3063 = vmatpush.bf16.msra.mxu0 %v2721
        %3064 = vmatmul.bf16.gmra.mxu0 %v2395
        %v3065 = vpop.f32.mrf.mxu0
        %v3066 = vadd.f32 %v3038, %v3065
        %v3067 = vpop.f32.mrf.mxu0
        %v3068 = vadd.f32 %v3040, %v3067
        %3069 = vmatmul.bf16.gmra.mxu0 %v2400
        %v3070 = vpop.f32.mrf.mxu0
        %v3071 = vadd.f32 %v3043, %v3070
        %v3072 = vpop.f32.mrf.mxu0
        %v3073 = vadd.f32 %v3045, %v3072
        %3074 = vmatmul.bf16.gmra.mxu0 %v2405
        %v3075 = vpop.f32.mrf.mxu0
        %v3076 = vadd.f32 %v3048, %v3075
        %v3077 = vpop.f32.mrf.mxu0
        %v3078 = vadd.f32 %v3050, %v3077
        %3079 = vmatmul.bf16.gmra.mxu0 %v2410
        %v3080 = vpop.f32.mrf.mxu0
        %v3081 = vadd.f32 %v3053, %v3080
        %v3082 = vpop.f32.mrf.mxu0
        %3083 = vdwg.mxu0
        %3084 = vmatpush.bf16.msra.mxu0 %v2751
        %3085 = vmatpush.bf16.msra.mxu0 %v2749
        %3086 = vmatpush.bf16.msra.mxu0 %v2747
        %3087 = vmatpush.bf16.msra.mxu0 %v2745
        %3088 = vmatpush.bf16.msra.mxu0 %v2743
        %3089 = vmatpush.bf16.msra.mxu0 %v2741
        %3090 = vmatpush.bf16.msra.mxu0 %v2739
        %3091 = vmatpush.bf16.msra.mxu0 %v2737
        %3092 = vmatmul.bf16.gmra.mxu0 %v2396
        %v3093 = vpop.f32.mrf.mxu0
        %v3094 = vadd.f32 %v3066, %v3093
        %v3095 = vpop.f32.mrf.mxu0
        %v3096 = vadd.f32 %v3068, %v3095
        %3097 = vmatmul.bf16.gmra.mxu0 %v2401
        %v3098 = vpop.f32.mrf.mxu0
        %v3099 = vadd.f32 %v3071, %v3098
        %v3100 = vpop.f32.mrf.mxu0
        %v3101 = vadd.f32 %v3073, %v3100
        %3102 = vmatmul.bf16.gmra.mxu0 %v2406
        %v3103 = vpop.f32.mrf.mxu0
        %v3104 = vadd.f32 %v3076, %v3103
        %v3105 = vpop.f32.mrf.mxu0
        %v3106 = vadd.f32 %v3078, %v3105
        %3107 = vmatmul.bf16.gmra.mxu0 %v2411
        %v3108 = vpop.f32.mrf.mxu0
        %v3109 = vadd.f32 %v3081, %v3108
        %v3110 = vpop.f32.mrf.mxu0
        %3111 = vdwg.mxu0
        %v3112 = vld [vmem:[%s2170] sm:$0xff]
        %v3113 = vld [vmem:[%s2170 + $0x8] sm:$0xff]
        %v3114 = vld [vmem:[%s2170 + $0x10] sm:$0xf]
        %v3115 = vld [vmem:[%s2170 + $0x14] sm:$0xff]
        %v3116 = vld [vmem:[%s2170 + $0x1c] sm:$0xff]
        %v3117 = vld [vmem:[%s2170 + $0x24] sm:$0xf]
        %v3118 = vld [vmem:[%s2170 + $0x28] sm:$0xff]
        %v3119 = vld [vmem:[%s2170 + $0x30] sm:$0xff]
        %v3120 = vld [vmem:[%s2170 + $0x38] sm:$0xf]
        %v3121 = vld [vmem:[%s2170 + $0x3c] sm:$0xff]
        %v3122 = vld [vmem:[%s2170 + $0x44] sm:$0xff]
        %v3123 = vld [vmem:[%s2170 + $0x4c] sm:$0xf]
        %v3124 = vld [vmem:[%s2170 + $0x50] sm:$0xff]
        %v3125 = vld [vmem:[%s2170 + $0x58] sm:$0xff]
        %v3126 = vld [vmem:[%s2170 + $0x60] sm:$0xf]
        %v3127 = vld [vmem:[%s2170 + $0x64] sm:$0xff]
        %v3128 = vld [vmem:[%s2170 + $0x6c] sm:$0xff]
        %v3129 = vld [vmem:[%s2170 + $0x74] sm:$0xf]
        %v3130 = vld [vmem:[%s2170 + $0x78] sm:$0xff]
        %v3131 = vld [vmem:[%s2170 + $0x80] sm:$0xff]
        %v3132 = vld [vmem:[%s2170 + $0x88] sm:$0xf]
        %v3154 = vunpack.c.l.b16 %v3112
        %v3155 = vunpack.c.h.b16 %v3112
        %v3156 = vunpack.c.l.b16 %v3113
        %v3157 = vunpack.c.h.b16 %v3113
        %v3158 = vunpack.c.l.b16 %v3114
        %v3159 = vunpack.c.l.b16 %v3115
        %v3160 = vunpack.c.h.b16 %v3115
        %v3161 = vunpack.c.l.b16 %v3116
        %v3162 = vunpack.c.h.b16 %v3116
        %v3163 = vunpack.c.l.b16 %v3117
        %v3164 = vunpack.c.l.b16 %v3118
        %v3165 = vunpack.c.h.b16 %v3118
        %v3166 = vunpack.c.l.b16 %v3119
        %v3167 = vunpack.c.h.b16 %v3119
        %v3168 = vunpack.c.l.b16 %v3120
        %v3169 = vunpack.c.l.b16 %v3121
        %v3170 = vunpack.c.h.b16 %v3121
        %v3171 = vunpack.c.l.b16 %v3122
        %v3172 = vunpack.c.h.b16 %v3122
        %v3173 = vunpack.c.l.b16 %v3123
        %v3174 = vunpack.c.l.b16 %v3124
        %v3175 = vunpack.c.h.b16 %v3124
        %v3176 = vunpack.c.l.b16 %v3125
        %v3177 = vunpack.c.h.b16 %v3125
        %v3178 = vunpack.c.l.b16 %v3126
        %v3179 = vunpack.c.l.b16 %v3127
        %v3180 = vunpack.c.h.b16 %v3127
        %v3181 = vunpack.c.l.b16 %v3128
        %v3182 = vunpack.c.h.b16 %v3128
        %v3183 = vunpack.c.l.b16 %v3129
        %v3184 = vunpack.c.l.b16 %v3130
        %v3185 = vunpack.c.h.b16 %v3130
        %v3186 = vunpack.c.l.b16 %v3131
        %v3187 = vunpack.c.h.b16 %v3131
        %v3188 = vunpack.c.l.b16 %v3132
        %v3189 = vpack.c.b16 %v3159, %v3154
        %v3190 = vpack.c.b16 %v3160, %v3155
        %v3191 = vpack.c.b16 %v3161, %v3156
        %v3192 = vpack.c.b16 %v3162, %v3157
        %v3193 = vpack.c.b16 %v3163, %v3158
        %v3194 = vpack.c.b16 %v3169, %v3164
        %v3195 = vpack.c.b16 %v3170, %v3165
        %v3196 = vpack.c.b16 %v3171, %v3166
        %v3197 = vpack.c.b16 %v3172, %v3167
        %v3198 = vpack.c.b16 %v3173, %v3168
        %v3199 = vpack.c.b16 %v3179, %v3174
        %v3200 = vpack.c.b16 %v3180, %v3175
        %v3201 = vpack.c.b16 %v3181, %v3176
        %v3202 = vpack.c.b16 %v3182, %v3177
        %v3203 = vpack.c.b16 %v3183, %v3178
        %v3204 = vpack.c.b16 %v3184, %v3184
        %v3205 = vpack.c.b16 %v3185, %v3185
        %v3206 = vpack.c.b16 %v3186, %v3186
        %v3207 = vpack.c.b16 %v3187, %v3187
        %v3208 = vpack.c.b16 %v3188, %v3188
        %3229 = vmatpush.bf16.msra.mxu0 %v2686
        %3230 = vmatpush.bf16.msra.mxu0 %v2684
        %3231 = vmatpush.bf16.msra.mxu0 %v2682
        %3232 = vmatpush.bf16.msra.mxu0 %v2680
        %3233 = vmatpush.bf16.msra.mxu0 %v2678
        %3234 = vmatpush.bf16.msra.mxu0 %v2676
        %3235 = vmatpush.bf16.msra.mxu0 %v2674
        %3236 = vmatpush.bf16.msra.mxu0 %v2672
        %3237 = vmatmul.bf16.gmra.mxu0 %v3189
        %v3238 = vpop.f32.mrf.mxu0
        %v3239 = vadd.f32 0.0, %v3238
        %v3240 = vpop.f32.mrf.mxu0
        %v3241 = vadd.f32 0.0, %v3240
        %3242 = vmatmul.bf16.gmra.mxu0 %v3194
        %v3243 = vpop.f32.mrf.mxu0
        %v3244 = vadd.f32 0.0, %v3243
        %v3245 = vpop.f32.mrf.mxu0
        %v3246 = vadd.f32 0.0, %v3245
        %3247 = vmatmul.bf16.gmra.mxu0 %v3199
        %v3248 = vpop.f32.mrf.mxu0
        %v3249 = vadd.f32 0.0, %v3248
        %v3250 = vpop.f32.mrf.mxu0
        %v3251 = vadd.f32 0.0, %v3250
        %3252 = vmatmul.bf16.gmra.mxu0 %v3204
        %v3253 = vpop.f32.mrf.mxu0
        %v3254 = vadd.f32 0.0, %v3253
        %v3255 = vpop.f32.mrf.mxu0
        %3256 = vdwg.mxu0
        %3257 = vmatpush.bf16.msra.mxu0 %v2702
        %3258 = vmatpush.bf16.msra.mxu0 %v2700
        %3259 = vmatpush.bf16.msra.mxu0 %v2698
        %3260 = vmatpush.bf16.msra.mxu0 %v2696
        %3261 = vmatpush.bf16.msra.mxu0 %v2694
        %3262 = vmatpush.bf16.msra.mxu0 %v2692
        %3263 = vmatpush.bf16.msra.mxu0 %v2690
        %3264 = vmatpush.bf16.msra.mxu0 %v2688
        %3265 = vmatmul.bf16.gmra.mxu0 %v3190
        %v3266 = vpop.f32.mrf.mxu0
        %v3267 = vadd.f32 %v3239, %v3266
        %v3268 = vpop.f32.mrf.mxu0
        %v3269 = vadd.f32 %v3241, %v3268
        %3270 = vmatmul.bf16.gmra.mxu0 %v3195
        %v3271 = vpop.f32.mrf.mxu0
        %v3272 = vadd.f32 %v3244, %v3271
        %v3273 = vpop.f32.mrf.mxu0
        %v3274 = vadd.f32 %v3246, %v3273
        %3275 = vmatmul.bf16.gmra.mxu0 %v3200
        %v3276 = vpop.f32.mrf.mxu0
        %v3277 = vadd.f32 %v3249, %v3276
        %v3278 = vpop.f32.mrf.mxu0
        %v3279 = vadd.f32 %v3251, %v3278
        %3280 = vmatmul.bf16.gmra.mxu0 %v3205
        %v3281 = vpop.f32.mrf.mxu0
        %v3282 = vadd.f32 %v3254, %v3281
        %v3283 = vpop.f32.mrf.mxu0
        %3284 = vdwg.mxu0
        %3285 = vmatpush.bf16.msra.mxu0 %v2718
        %3286 = vmatpush.bf16.msra.mxu0 %v2716
        %3287 = vmatpush.bf16.msra.mxu0 %v2714
        %3288 = vmatpush.bf16.msra.mxu0 %v2712
        %3289 = vmatpush.bf16.msra.mxu0 %v2710
        %3290 = vmatpush.bf16.msra.mxu0 %v2708
        %3291 = vmatpush.bf16.msra.mxu0 %v2706
        %3292 = vmatpush.bf16.msra.mxu0 %v2704
        %3293 = vmatmul.bf16.gmra.mxu0 %v3191
        %v3294 = vpop.f32.mrf.mxu0
        %v3295 = vadd.f32 %v3267, %v3294
        %v3296 = vpop.f32.mrf.mxu0
        %v3297 = vadd.f32 %v3269, %v3296
        %3298 = vmatmul.bf16.gmra.mxu0 %v3196
        %v3299 = vpop.f32.mrf.mxu0
        %v3300 = vadd.f32 %v3272, %v3299
        %v3301 = vpop.f32.mrf.mxu0
        %v3302 = vadd.f32 %v3274, %v3301
        %3303 = vmatmul.bf16.gmra.mxu0 %v3201
        %v3304 = vpop.f32.mrf.mxu0
        %v3305 = vadd.f32 %v3277, %v3304
        %v3306 = vpop.f32.mrf.mxu0
        %v3307 = vadd.f32 %v3279, %v3306
        %3308 = vmatmul.bf16.gmra.mxu0 %v3206
        %v3309 = vpop.f32.mrf.mxu0
        %v3310 = vadd.f32 %v3282, %v3309
        %v3311 = vpop.f32.mrf.mxu0
        %3312 = vdwg.mxu0
        %3313 = vmatpush.bf16.msra.mxu0 %v2734
        %3314 = vmatpush.bf16.msra.mxu0 %v2732
        %3315 = vmatpush.bf16.msra.mxu0 %v2730
        %3316 = vmatpush.bf16.msra.mxu0 %v2728
        %3317 = vmatpush.bf16.msra.mxu0 %v2726
        %3318 = vmatpush.bf16.msra.mxu0 %v2724
        %3319 = vmatpush.bf16.msra.mxu0 %v2722
        %3320 = vmatpush.bf16.msra.mxu0 %v2720
        %3321 = vmatmul.bf16.gmra.mxu0 %v3192
        %v3322 = vpop.f32.mrf.mxu0
        %v3323 = vadd.f32 %v3295, %v3322
        %v3324 = vpop.f32.mrf.mxu0
        %v3325 = vadd.f32 %v3297, %v3324
        %3326 = vmatmul.bf16.gmra.mxu0 %v3197
        %v3327 = vpop.f32.mrf.mxu0
        %v3328 = vadd.f32 %v3300, %v3327
        %v3329 = vpop.f32.mrf.mxu0
        %v3330 = vadd.f32 %v3302, %v3329
        %3331 = vmatmul.bf16.gmra.mxu0 %v3202
        %v3332 = vpop.f32.mrf.mxu0
        %v3333 = vadd.f32 %v3305, %v3332
        %v3334 = vpop.f32.mrf.mxu0
        %v3335 = vadd.f32 %v3307, %v3334
        %3336 = vmatmul.bf16.gmra.mxu0 %v3207
        %v3337 = vpop.f32.mrf.mxu0
        %v3338 = vadd.f32 %v3310, %v3337
        %v3339 = vpop.f32.mrf.mxu0
        %3340 = vdwg.mxu0
        %3341 = vmatpush.bf16.msra.mxu0 %v2750
        %3342 = vmatpush.bf16.msra.mxu0 %v2748
        %3343 = vmatpush.bf16.msra.mxu0 %v2746
        %3344 = vmatpush.bf16.msra.mxu0 %v2744
        %3345 = vmatpush.bf16.msra.mxu0 %v2742
        %3346 = vmatpush.bf16.msra.mxu0 %v2740
        %3347 = vmatpush.bf16.msra.mxu0 %v2738
        %3348 = vmatpush.bf16.msra.mxu0 %v2736
        %3349 = vmatmul.bf16.gmra.mxu0 %v3193
        %v3350 = vpop.f32.mrf.mxu0
        %v3351 = vadd.f32 %v3323, %v3350
        %v3352 = vpop.f32.mrf.mxu0
        %v3353 = vadd.f32 %v3325, %v3352
        %3354 = vmatmul.bf16.gmra.mxu0 %v3198
        %v3355 = vpop.f32.mrf.mxu0
        %v3356 = vadd.f32 %v3328, %v3355
        %v3357 = vpop.f32.mrf.mxu0
        %v3358 = vadd.f32 %v3330, %v3357
        %3359 = vmatmul.bf16.gmra.mxu0 %v3203
        %v3360 = vpop.f32.mrf.mxu0
        %v3361 = vadd.f32 %v3333, %v3360
        %v3362 = vpop.f32.mrf.mxu0
        %v3363 = vadd.f32 %v3335, %v3362
        %3364 = vmatmul.bf16.gmra.mxu0 %v3208
        %v3365 = vpop.f32.mrf.mxu0
        %v3366 = vadd.f32 %v3338, %v3365
        %v3367 = vpop.f32.mrf.mxu0
        %3368 = vdwg.mxu0
        %3369 = vmatpush.bf16.msra.mxu0 %v2687
        %3370 = vmatpush.bf16.msra.mxu0 %v2685
        %3371 = vmatpush.bf16.msra.mxu0 %v2683
        %3372 = vmatpush.bf16.msra.mxu0 %v2681
        %3373 = vmatpush.bf16.msra.mxu0 %v2679
        %3374 = vmatpush.bf16.msra.mxu0 %v2677
        %3375 = vmatpush.bf16.msra.mxu0 %v2675
        %3376 = vmatpush.bf16.msra.mxu0 %v2673
        %3377 = vmatmul.bf16.gmra.mxu0 %v3189
        %v3378 = vpop.f32.mrf.mxu0
        %v3379 = vadd.f32 0.0, %v3378
        %v3380 = vpop.f32.mrf.mxu0
        %v3381 = vadd.f32 0.0, %v3380
        %3382 = vmatmul.bf16.gmra.mxu0 %v3194
        %v3383 = vpop.f32.mrf.mxu0
        %v3384 = vadd.f32 0.0, %v3383
        %v3385 = vpop.f32.mrf.mxu0
        %v3386 = vadd.f32 0.0, %v3385
        %3387 = vmatmul.bf16.gmra.mxu0 %v3199
        %v3388 = vpop.f32.mrf.mxu0
        %v3389 = vadd.f32 0.0, %v3388
        %v3390 = vpop.f32.mrf.mxu0
        %v3391 = vadd.f32 0.0, %v3390
        %3392 = vmatmul.bf16.gmra.mxu0 %v3204
        %v3393 = vpop.f32.mrf.mxu0
        %v3394 = vadd.f32 0.0, %v3393
        %v3395 = vpop.f32.mrf.mxu0
        %3396 = vdwg.mxu0
        %3397 = vmatpush.bf16.msra.mxu0 %v2703
        %3398 = vmatpush.bf16.msra.mxu0 %v2701
        %3399 = vmatpush.bf16.msra.mxu0 %v2699
        %3400 = vmatpush.bf16.msra.mxu0 %v2697
        %3401 = vmatpush.bf16.msra.mxu0 %v2695
        %3402 = vmatpush.bf16.msra.mxu0 %v2693
        %3403 = vmatpush.bf16.msra.mxu0 %v2691
        %3404 = vmatpush.bf16.msra.mxu0 %v2689
        %3405 = vmatmul.bf16.gmra.mxu0 %v3190
        %v3406 = vpop.f32.mrf.mxu0
        %v3407 = vadd.f32 %v3379, %v3406
        %v3408 = vpop.f32.mrf.mxu0
        %v3409 = vadd.f32 %v3381, %v3408
        %3410 = vmatmul.bf16.gmra.mxu0 %v3195
        %v3411 = vpop.f32.mrf.mxu0
        %v3412 = vadd.f32 %v3384, %v3411
        %v3413 = vpop.f32.mrf.mxu0
        %v3414 = vadd.f32 %v3386, %v3413
        %3415 = vmatmul.bf16.gmra.mxu0 %v3200
        %v3416 = vpop.f32.mrf.mxu0
        %v3417 = vadd.f32 %v3389, %v3416
        %v3418 = vpop.f32.mrf.mxu0
        %v3419 = vadd.f32 %v3391, %v3418
        %3420 = vmatmul.bf16.gmra.mxu0 %v3205
        %v3421 = vpop.f32.mrf.mxu0
        %v3422 = vadd.f32 %v3394, %v3421
        %v3423 = vpop.f32.mrf.mxu0
        %3424 = vdwg.mxu0
        %3425 = vmatpush.bf16.msra.mxu0 %v2719
        %3426 = vmatpush.bf16.msra.mxu0 %v2717
        %3427 = vmatpush.bf16.msra.mxu0 %v2715
        %3428 = vmatpush.bf16.msra.mxu0 %v2713
        %3429 = vmatpush.bf16.msra.mxu0 %v2711
        %3430 = vmatpush.bf16.msra.mxu0 %v2709
        %3431 = vmatpush.bf16.msra.mxu0 %v2707
        %3432 = vmatpush.bf16.msra.mxu0 %v2705
        %3433 = vmatmul.bf16.gmra.mxu0 %v3191
        %v3434 = vpop.f32.mrf.mxu0
        %v3435 = vadd.f32 %v3407, %v3434
        %v3436 = vpop.f32.mrf.mxu0
        %v3437 = vadd.f32 %v3409, %v3436
        %3438 = vmatmul.bf16.gmra.mxu0 %v3196
        %v3439 = vpop.f32.mrf.mxu0
        %v3440 = vadd.f32 %v3412, %v3439
        %v3441 = vpop.f32.mrf.mxu0
        %v3442 = vadd.f32 %v3414, %v3441
        %3443 = vmatmul.bf16.gmra.mxu0 %v3201
        %v3444 = vpop.f32.mrf.mxu0
        %v3445 = vadd.f32 %v3417, %v3444
        %v3446 = vpop.f32.mrf.mxu0
        %v3447 = vadd.f32 %v3419, %v3446
        %3448 = vmatmul.bf16.gmra.mxu0 %v3206
        %v3449 = vpop.f32.mrf.mxu0
        %v3450 = vadd.f32 %v3422, %v3449
        %v3451 = vpop.f32.mrf.mxu0
        %3452 = vdwg.mxu0
        %3453 = vmatpush.bf16.msra.mxu0 %v2735
        %3454 = vmatpush.bf16.msra.mxu0 %v2733
        %3455 = vmatpush.bf16.msra.mxu0 %v2731
        %3456 = vmatpush.bf16.msra.mxu0 %v2729
        %3457 = vmatpush.bf16.msra.mxu0 %v2727
        %3458 = vmatpush.bf16.msra.mxu0 %v2725
        %3459 = vmatpush.bf16.msra.mxu0 %v2723
        %3460 = vmatpush.bf16.msra.mxu0 %v2721
        %3461 = vmatmul.bf16.gmra.mxu0 %v3192
        %v3462 = vpop.f32.mrf.mxu0
        %v3463 = vadd.f32 %v3435, %v3462
        %v3464 = vpop.f32.mrf.mxu0
        %v3465 = vadd.f32 %v3437, %v3464
        %3466 = vmatmul.bf16.gmra.mxu0 %v3197
        %v3467 = vpop.f32.mrf.mxu0
        %v3468 = vadd.f32 %v3440, %v3467
        %v3469 = vpop.f32.mrf.mxu0
        %v3470 = vadd.f32 %v3442, %v3469
        %3471 = vmatmul.bf16.gmra.mxu0 %v3202
        %v3472 = vpop.f32.mrf.mxu0
        %v3473 = vadd.f32 %v3445, %v3472
        %v3474 = vpop.f32.mrf.mxu0
        %v3475 = vadd.f32 %v3447, %v3474
        %3476 = vmatmul.bf16.gmra.mxu0 %v3207
        %v3477 = vpop.f32.mrf.mxu0
        %v3478 = vadd.f32 %v3450, %v3477
        %v3479 = vpop.f32.mrf.mxu0
        %3480 = vdwg.mxu0
        %3481 = vmatpush.bf16.msra.mxu0 %v2751
        %3482 = vmatpush.bf16.msra.mxu0 %v2749
        %3483 = vmatpush.bf16.msra.mxu0 %v2747
        %3484 = vmatpush.bf16.msra.mxu0 %v2745
        %3485 = vmatpush.bf16.msra.mxu0 %v2743
        %3486 = vmatpush.bf16.msra.mxu0 %v2741
        %3487 = vmatpush.bf16.msra.mxu0 %v2739
        %3488 = vmatpush.bf16.msra.mxu0 %v2737
        %3489 = vmatmul.bf16.gmra.mxu0 %v3193
        %v3490 = vpop.f32.mrf.mxu0
        %v3491 = vadd.f32 %v3463, %v3490
        %v3492 = vpop.f32.mrf.mxu0
        %v3493 = vadd.f32 %v3465, %v3492
        %3494 = vmatmul.bf16.gmra.mxu0 %v3198
        %v3495 = vpop.f32.mrf.mxu0
        %v3496 = vadd.f32 %v3468, %v3495
        %v3497 = vpop.f32.mrf.mxu0
        %v3498 = vadd.f32 %v3470, %v3497
        %3499 = vmatmul.bf16.gmra.mxu0 %v3203
        %v3500 = vpop.f32.mrf.mxu0
        %v3501 = vadd.f32 %v3473, %v3500
        %v3502 = vpop.f32.mrf.mxu0
        %v3503 = vadd.f32 %v3475, %v3502
        %3504 = vmatmul.bf16.gmra.mxu0 %v3208
        %v3505 = vpop.f32.mrf.mxu0
        %v3506 = vadd.f32 %v3478, %v3505
        %v3507 = vpop.f32.mrf.mxu0
        %3508 = vdwg.mxu0
        %v3509 = vmax.f32 %v2954, %v3351
        %v3510 = vmax.f32 %v3094, %v3491
        %v3511 = vmax.f32 %v2956, %v3353
        %v3512 = vmax.f32 %v3096, %v3493
        %v3513 = vmax.f32 %v2959, %v3356
        %v3514 = vmax.f32 %v3099, %v3496
        %v3515 = vmax.f32 %v2961, %v3358
        %v3516 = vmax.f32 %v3101, %v3498
        %v3517 = vmax.f32 %v2964, %v3361
        %v3518 = vmax.f32 %v3104, %v3501
        %v3519 = vmax.f32 %v2966, %v3363
        %v3520 = vmax.f32 %v3106, %v3503
        %v3521 = vmax.f32 %v2969, %v3366
        %v3522 = vmax.f32 %v3109, %v3506
        %3537 = vrot.lane.b32.xlu0 %v3509, 44
        %v3538 = vpop.permute.xlu0 %3537
        %3539 = vrot.lane.b32.xlu0 %v3510, 44
        %v3540 = vpop.permute.xlu0 %3539
        %3541 = vrot.lane.b32.xlu0 %v3511, 44
        %v3542 = vpop.permute.xlu0 %3541
        %3543 = vrot.lane.b32.xlu0 %v3512, 44
        %v3544 = vpop.permute.xlu0 %3543
        %3545 = vrot.lane.b32.xlu0 %v3513, 44
        %v3546 = vpop.permute.xlu0 %3545
        %3547 = vrot.lane.b32.xlu0 %v3514, 44
        %v3548 = vpop.permute.xlu0 %3547
        %3549 = vrot.lane.b32.xlu0 %v3515, 44
        %v3550 = vpop.permute.xlu0 %3549
        %3551 = vrot.lane.b32.xlu0 %v3516, 44
        %v3552 = vpop.permute.xlu0 %3551
        %3553 = vrot.lane.b32.xlu0 %v3517, 44
        %v3554 = vpop.permute.xlu0 %3553
        %3555 = vrot.lane.b32.xlu0 %v3518, 44
        %v3556 = vpop.permute.xlu0 %3555
        %3557 = vrot.lane.b32.xlu0 %v3519, 44
        %v3558 = vpop.permute.xlu0 %3557
        %3559 = vrot.lane.b32.xlu0 %v3520, 44
        %v3560 = vpop.permute.xlu0 %3559
        %3561 = vrot.lane.b32.xlu0 %v3521, 44
        %v3562 = vpop.permute.xlu0 %3561
        %3563 = vrot.lane.b32.xlu0 %v3522, 44
        %v3564 = vpop.permute.xlu0 %3563
        %v3565 = vsel %vm2039, %v3538, %v3540
        %v3566 = vsel %vm2039, %v3542, %v3544
        %v3567 = vsel %vm2039, %v3546, %v3548
        %v3568 = vsel %vm2039, %v3550, %v3552
        %v3569 = vsel %vm2039, %v3554, %v3556
        %v3570 = vsel %vm2039, %v3558, %v3560
        %v3571 = vsel %vm2039, %v3562, %v3564
        %v3579 = vmax.f32 %v3509, %v3565
        %v3580 = vmax.f32 %v3511, %v3566
        %v3581 = vmax.f32 %v3513, %v3567
        %v3582 = vmax.f32 %v3515, %v3568
        %v3583 = vmax.f32 %v3517, %v3569
        %v3584 = vmax.f32 %v3519, %v3570
        %v3585 = vmax.f32 %v3521, %v3571
        %v3586 = vadd.f32 %v3579, %v2061
        %v3587 = vadd.f32 %v3580, %v2061
        %v3588 = vadd.f32 %v3581, %v2061
        %v3589 = vadd.f32 %v3582, %v2061
        %v3590 = vadd.f32 %v3583, %v2061
        %v3591 = vadd.f32 %v3584, %v2061
        %v3592 = vadd.f32 %v3585, %v2061
        %v3593 = vmax.f32 %v3586, 0.0
        %v3594 = vmax.f32 %v3587, 0.0
        %v3595 = vmax.f32 %v3588, 0.0
        %v3596 = vmax.f32 %v3589, 0.0
        %v3597 = vmax.f32 %v3590, 0.0
        %v3598 = vmax.f32 %v3591, 0.0
        %v3599 = vmax.f32 %v3592, 0.0
        %v3600 = vpack.c.bf16 %v3593, %v3593
        %v3601 = vpack.c.bf16 %v3594, %v3594
        %v3602 = vpack.c.bf16 %v3595, %v3595
        %v3603 = vpack.c.bf16 %v3596, %v3596
        %v3604 = vpack.c.bf16 %v3597, %v3597
        %v3605 = vpack.c.bf16 %v3598, %v3598
        %v3606 = vpack.c.bf16 %v3599, %v3599
        %s3607 = scalar_lea.vmem [#allocation4], 28
        %3608 = vst.msk [vmem:[%s3607] sm:$0xf] %vm2083, %v3600
        %3609 = vst.msk [vmem:[%s3607 + $0x4] sm:$0xf] %vm2083, %v3601
        %3610 = vst.msk [vmem:[%s3607 + $0x8] sm:$0xf] %vm2083, %v3602
        %3611 = vst.msk [vmem:[%s3607 + $0xc] sm:$0xf] %vm2083, %v3603
        %3612 = vst.msk [vmem:[%s3607 + $0x10] sm:$0xf] %vm2083, %v3604
        %3613 = vst.msk [vmem:[%s3607 + $0x14] sm:$0xf] %vm2083, %v3605
        %3614 = vst.msk [vmem:[%s3607 + $0x18] sm:$0xf] %vm2083, %v3606
        %v3615 = vld [vmem:[#allocation4] sm:$0xf]
        %v3616 = vld [vmem:[#allocation4 + $0x4] sm:$0xf]
        %v3617 = vld [vmem:[#allocation4 + $0x8] sm:$0xf]
        %v3618 = vld [vmem:[#allocation4 + $0xc] sm:$0xf]
        %v3619 = vld [vmem:[#allocation4 + $0x10] sm:$0xf]
        %3620 = vst [vmem:[#allocation3] sm:$0xf] %v3615
        %3621 = vst [vmem:[#allocation3 + $0x14] sm:$0xf] %v3616
        %3622 = vst [vmem:[#allocation3 + $0x28] sm:$0xf] %v3617
        %3623 = vst [vmem:[#allocation3 + $0x3c] sm:$0xf] %v3618
        %3624 = vst [vmem:[#allocation3 + $0x50] sm:$0xf] %v3619
        %v3625 = vld [vmem:[%s3607] sm:$0xf]
        %v3626 = vld [vmem:[%s3607 + $0x4] sm:$0xf]
        %v3627 = vld [vmem:[%s3607 + $0x8] sm:$0xf]
        %v3628 = vld [vmem:[%s3607 + $0xc] sm:$0xf]
        %v3629 = vld [vmem:[%s3607 + $0x10] sm:$0xf]
        %3630 = vst [vmem:[#allocation3 + $0x4] sm:$0xf] %v3625
        %3631 = vst [vmem:[#allocation3 + $0x18] sm:$0xf] %v3626
        %3632 = vst [vmem:[#allocation3 + $0x2c] sm:$0xf] %v3627
        %3633 = vst [vmem:[#allocation3 + $0x40] sm:$0xf] %v3628
        %3634 = vst [vmem:[#allocation3 + $0x54] sm:$0xf] %v3629
        %v3635 = vld [vmem:[#allocation4 + $0x4] sm:$0xf]
        %v3636 = vld [vmem:[#allocation4 + $0x8] sm:$0xf]
        %v3637 = vld [vmem:[#allocation4 + $0xc] sm:$0xf]
        %v3638 = vld [vmem:[#allocation4 + $0x10] sm:$0xf]
        %v3639 = vld [vmem:[#allocation4 + $0x14] sm:$0xf]
        %3640 = vst [vmem:[#allocation3 + $0x8] sm:$0xf] %v3635
        %3641 = vst [vmem:[#allocation3 + $0x1c] sm:$0xf] %v3636
        %3642 = vst [vmem:[#allocation3 + $0x30] sm:$0xf] %v3637
        %3643 = vst [vmem:[#allocation3 + $0x44] sm:$0xf] %v3638
        %3644 = vst [vmem:[#allocation3 + $0x58] sm:$0xf] %v3639
        %v3645 = vld [vmem:[%s3607 + $0x4] sm:$0xf]
        %v3646 = vld [vmem:[%s3607 + $0x8] sm:$0xf]
        %v3647 = vld [vmem:[%s3607 + $0xc] sm:$0xf]
        %v3648 = vld [vmem:[%s3607 + $0x10] sm:$0xf]
        %v3649 = vld [vmem:[%s3607 + $0x14] sm:$0xf]
        %3650 = vst [vmem:[#allocation3 + $0xc] sm:$0xf] %v3645
        %3651 = vst [vmem:[#allocation3 + $0x20] sm:$0xf] %v3646
        %3652 = vst [vmem:[#allocation3 + $0x34] sm:$0xf] %v3647
        %3653 = vst [vmem:[#allocation3 + $0x48] sm:$0xf] %v3648
        %3654 = vst [vmem:[#allocation3 + $0x5c] sm:$0xf] %v3649
        %v3655 = vld [vmem:[#allocation4 + $0x8] sm:$0xf]
        %v3656 = vld [vmem:[#allocation4 + $0xc] sm:$0xf]
        %v3657 = vld [vmem:[#allocation4 + $0x10] sm:$0xf]
        %v3658 = vld [vmem:[#allocation4 + $0x14] sm:$0xf]
        %v3659 = vld [vmem:[#allocation4 + $0x18] sm:$0xf]
        %3660 = vst [vmem:[#allocation3 + $0x10] sm:$0xf] %v3655
        %3661 = vst [vmem:[#allocation3 + $0x24] sm:$0xf] %v3656
        %3662 = vst [vmem:[#allocation3 + $0x38] sm:$0xf] %v3657
        %3663 = vst [vmem:[#allocation3 + $0x4c] sm:$0xf] %v3658
        %3664 = vst [vmem:[#allocation3 + $0x60] sm:$0xf] %v3659
        %v3665 = vld [vmem:[%s3607] sm:$0xf]
        %v3666 = vld [vmem:[%s3607 + $0x4] sm:$0xf]
        %v3667 = vld [vmem:[%s3607 + $0x8] sm:$0xf]
        %v3668 = vld [vmem:[%s3607 + $0xc] sm:$0xf]
        %v3669 = vld [vmem:[%s3607 + $0x10] sm:$0xf]
        %s3670 = scalar_lea.vmem [#allocation3], 100
        %3671 = vst [vmem:[%s3670] sm:$0xf] %v3665
        %3672 = vst [vmem:[%s3670 + $0x14] sm:$0xf] %v3666
        %3673 = vst [vmem:[%s3670 + $0x28] sm:$0xf] %v3667
        %3674 = vst [vmem:[%s3670 + $0x3c] sm:$0xf] %v3668
        %3675 = vst [vmem:[%s3670 + $0x50] sm:$0xf] %v3669
        %v3676 = vld [vmem:[#allocation4 + $0x4] sm:$0xf]
        %v3677 = vld [vmem:[#allocation4 + $0x8] sm:$0xf]
        %v3678 = vld [vmem:[#allocation4 + $0xc] sm:$0xf]
        %v3679 = vld [vmem:[#allocation4 + $0x10] sm:$0xf]
        %v3680 = vld [vmem:[#allocation4 + $0x14] sm:$0xf]
        %3681 = vst [vmem:[%s3670 + $0x4] sm:$0xf] %v3676
        %3682 = vst [vmem:[%s3670 + $0x18] sm:$0xf] %v3677
        %3683 = vst [vmem:[%s3670 + $0x2c] sm:$0xf] %v3678
        %3684 = vst [vmem:[%s3670 + $0x40] sm:$0xf] %v3679
        %3685 = vst [vmem:[%s3670 + $0x54] sm:$0xf] %v3680
        %v3686 = vld [vmem:[%s3607 + $0x4] sm:$0xf]
        %v3687 = vld [vmem:[%s3607 + $0x8] sm:$0xf]
        %v3688 = vld [vmem:[%s3607 + $0xc] sm:$0xf]
        %v3689 = vld [vmem:[%s3607 + $0x10] sm:$0xf]
        %v3690 = vld [vmem:[%s3607 + $0x14] sm:$0xf]
        %3691 = vst [vmem:[%s3670 + $0x8] sm:$0xf] %v3686
        %3692 = vst [vmem:[%s3670 + $0x1c] sm:$0xf] %v3687
        %3693 = vst [vmem:[%s3670 + $0x30] sm:$0xf] %v3688
        %3694 = vst [vmem:[%s3670 + $0x44] sm:$0xf] %v3689
        %3695 = vst [vmem:[%s3670 + $0x58] sm:$0xf] %v3690
        %v3696 = vld [vmem:[#allocation4 + $0x8] sm:$0xf]
        %v3697 = vld [vmem:[#allocation4 + $0xc] sm:$0xf]
        %v3698 = vld [vmem:[#allocation4 + $0x10] sm:$0xf]
        %v3699 = vld [vmem:[#allocation4 + $0x14] sm:$0xf]
        %v3700 = vld [vmem:[#allocation4 + $0x18] sm:$0xf]
        %3701 = vst [vmem:[%s3670 + $0xc] sm:$0xf] %v3696
        %3702 = vst [vmem:[%s3670 + $0x20] sm:$0xf] %v3697
        %3703 = vst [vmem:[%s3670 + $0x34] sm:$0xf] %v3698
        %3704 = vst [vmem:[%s3670 + $0x48] sm:$0xf] %v3699
        %3705 = vst [vmem:[%s3670 + $0x5c] sm:$0xf] %v3700
        %v3706 = vld [vmem:[%s3607 + $0x8] sm:$0xf]
        %v3707 = vld [vmem:[%s3607 + $0xc] sm:$0xf]
        %v3708 = vld [vmem:[%s3607 + $0x10] sm:$0xf]
        %v3709 = vld [vmem:[%s3607 + $0x14] sm:$0xf]
        %v3710 = vld [vmem:[%s3607 + $0x18] sm:$0xf]
        %3711 = vst [vmem:[%s3670 + $0x10] sm:$0xf] %v3706
        %3712 = vst [vmem:[%s3670 + $0x24] sm:$0xf] %v3707
        %3713 = vst [vmem:[%s3670 + $0x38] sm:$0xf] %v3708
        %3714 = vst [vmem:[%s3670 + $0x4c] sm:$0xf] %v3709
        %3715 = vst [vmem:[%s3670 + $0x60] sm:$0xf] %v3710
        %v3716 = vld [vmem:[#allocation3] sm:$0xff]
        %v3717 = vld [vmem:[#allocation3 + $0x8] sm:$0xff]
        %v3718 = vld [vmem:[#allocation3 + $0x10] sm:$0xf]
        %v3719 = vld [vmem:[#allocation3 + $0x14] sm:$0xff]
        %v3720 = vld [vmem:[#allocation3 + $0x1c] sm:$0xff]
        %v3721 = vld [vmem:[#allocation3 + $0x24] sm:$0xf]
        %v3722 = vld [vmem:[#allocation3 + $0x28] sm:$0xff]
        %v3723 = vld [vmem:[#allocation3 + $0x30] sm:$0xff]
        %v3724 = vld [vmem:[#allocation3 + $0x38] sm:$0xf]
        %v3725 = vld [vmem:[#allocation3 + $0x3c] sm:$0xff]
        %v3726 = vld [vmem:[#allocation3 + $0x44] sm:$0xff]
        %v3727 = vld [vmem:[#allocation3 + $0x4c] sm:$0xf]
        %v3728 = vld [vmem:[#allocation3 + $0x50] sm:$0xff]
        %v3729 = vld [vmem:[#allocation3 + $0x58] sm:$0xff]
        %v3730 = vld [vmem:[#allocation3 + $0x60] sm:$0xf]
        %v3731 = vld [vmem:[%s2] sm:$0xff]
        %v3732 = vld [vmem:[%s2 + $0x8] sm:$0xff]
        %v3733 = vld [vmem:[%s2 + $0x10] sm:$0xff]
        %v3734 = vld [vmem:[%s2 + $0x18] sm:$0xff]
        %v3735 = vld [vmem:[%s2 + $0x20] sm:$0xff]
        %v3736 = vld [vmem:[%s2 + $0x28] sm:$0xff]
        %v3737 = vld [vmem:[%s2 + $0x30] sm:$0xff]
        %v3738 = vld [vmem:[%s2 + $0x38] sm:$0xff]
        %v3739 = vld [vmem:[%s2 + $0x40] sm:$0xff]
        %v3740 = vld [vmem:[%s2 + $0x48] sm:$0xff]
        %v3741 = vld [vmem:[%s2 + $0x50] sm:$0xff]
        %v3742 = vld [vmem:[%s2 + $0x58] sm:$0xff]
        %v3743 = vld [vmem:[%s2 + $0x60] sm:$0xff]
        %v3744 = vld [vmem:[%s2 + $0x68] sm:$0xff]
        %v3745 = vld [vmem:[%s2 + $0x70] sm:$0xff]
        %v3746 = vld [vmem:[%s2 + $0x78] sm:$0xff]
        %v3747 = vld [vmem:[%s2 + $0x80] sm:$0xff]
        %v3748 = vld [vmem:[%s2 + $0x88] sm:$0xff]
        %v3749 = vld [vmem:[%s2 + $0x90] sm:$0xff]
        %v3750 = vld [vmem:[%s2 + $0x98] sm:$0xff]
        %v3751 = vld [vmem:[%s2 + $0xa0] sm:$0xff]
        %v3752 = vld [vmem:[%s2 + $0xa8] sm:$0xff]
        %v3753 = vld [vmem:[%s2 + $0xb0] sm:$0xff]
        %v3754 = vld [vmem:[%s2 + $0xb8] sm:$0xff]
        %v3755 = vld [vmem:[%s2 + $0xc0] sm:$0xff]
        %v3756 = vld [vmem:[%s2 + $0xc8] sm:$0xff]
        %v3757 = vld [vmem:[%s2 + $0xd0] sm:$0xff]
        %v3758 = vld [vmem:[%s2 + $0xd8] sm:$0xff]
        %v3759 = vld [vmem:[%s2 + $0xe0] sm:$0xff]
        %v3760 = vld [vmem:[%s2 + $0xe8] sm:$0xff]
        %v3761 = vld [vmem:[%s2 + $0xf0] sm:$0xff]
        %v3762 = vld [vmem:[%s2 + $0xf8] sm:$0xff]
        %v3763 = vld [vmem:[%s2 + $0x100] sm:$0xff]
        %v3764 = vld [vmem:[%s2 + $0x108] sm:$0xff]
        %v3765 = vld [vmem:[%s2 + $0x110] sm:$0xff]
        %v3766 = vld [vmem:[%s2 + $0x118] sm:$0xff]
        %v3767 = vld [vmem:[%s2 + $0x120] sm:$0xff]
        %v3768 = vld [vmem:[%s2 + $0x128] sm:$0xff]
        %v3769 = vld [vmem:[%s2 + $0x130] sm:$0xff]
        %v3770 = vld [vmem:[%s2 + $0x138] sm:$0xff]
        %v3771 = vld [vmem:[%s2 + $0x140] sm:$0xff]
        %v3772 = vld [vmem:[%s2 + $0x148] sm:$0xff]
        %v3773 = vld [vmem:[%s2 + $0x150] sm:$0xff]
        %v3774 = vld [vmem:[%s2 + $0x158] sm:$0xff]
        %v3775 = vld [vmem:[%s2 + $0x160] sm:$0xff]
        %v3776 = vld [vmem:[%s2 + $0x168] sm:$0xff]
        %v3777 = vld [vmem:[%s2 + $0x170] sm:$0xff]
        %v3778 = vld [vmem:[%s2 + $0x178] sm:$0xff]
        %v3779 = vld [vmem:[%s2 + $0x180] sm:$0xff]
        %v3780 = vld [vmem:[%s2 + $0x188] sm:$0xff]
        %v3781 = vld [vmem:[%s2 + $0x190] sm:$0xff]
        %v3782 = vld [vmem:[%s2 + $0x198] sm:$0xff]
        %v3783 = vld [vmem:[%s2 + $0x1a0] sm:$0xff]
        %v3784 = vld [vmem:[%s2 + $0x1a8] sm:$0xff]
        %v3785 = vld [vmem:[%s2 + $0x1b0] sm:$0xff]
        %v3786 = vld [vmem:[%s2 + $0x1b8] sm:$0xff]
        %v3787 = vld [vmem:[%s2 + $0x1c0] sm:$0xff]
        %v3788 = vld [vmem:[%s2 + $0x1c8] sm:$0xff]
        %v3789 = vld [vmem:[%s2 + $0x1d0] sm:$0xff]
        %v3790 = vld [vmem:[%s2 + $0x1d8] sm:$0xff]
        %v3791 = vld [vmem:[%s2 + $0x1e0] sm:$0xff]
        %v3792 = vld [vmem:[%s2 + $0x1e8] sm:$0xff]
        %v3793 = vld [vmem:[%s2 + $0x1f0] sm:$0xff]
        %v3794 = vld [vmem:[%s2 + $0x1f8] sm:$0xff]
        %v3795 = vld [vmem:[%s2 + $0x200] sm:$0xff]
        %v3796 = vld [vmem:[%s2 + $0x208] sm:$0xff]
        %v3797 = vld [vmem:[%s2 + $0x210] sm:$0xff]
        %v3798 = vld [vmem:[%s2 + $0x218] sm:$0xff]
        %v3799 = vld [vmem:[%s2 + $0x220] sm:$0xff]
        %v3800 = vld [vmem:[%s2 + $0x228] sm:$0xff]
        %v3801 = vld [vmem:[%s2 + $0x230] sm:$0xff]
        %v3802 = vld [vmem:[%s2 + $0x238] sm:$0xff]
        %v3803 = vld [vmem:[%s2 + $0x240] sm:$0xff]
        %v3804 = vld [vmem:[%s2 + $0x248] sm:$0xff]
        %v3805 = vld [vmem:[%s2 + $0x250] sm:$0xff]
        %v3806 = vld [vmem:[%s2 + $0x258] sm:$0xff]
        %v3807 = vld [vmem:[%s2 + $0x260] sm:$0xff]
        %v3808 = vld [vmem:[%s2 + $0x268] sm:$0xff]
        %v3809 = vld [vmem:[%s2 + $0x270] sm:$0xff]
        %v3810 = vld [vmem:[%s2 + $0x278] sm:$0xff]
        %v3826 = vunpack.c.l.b16 %v3716
        %v3827 = vunpack.c.h.b16 %v3716
        %v3828 = vunpack.c.l.b16 %v3717
        %v3829 = vunpack.c.h.b16 %v3717
        %v3830 = vunpack.c.l.b16 %v3718
        %v3831 = vunpack.c.l.b16 %v3719
        %v3832 = vunpack.c.h.b16 %v3719
        %v3833 = vunpack.c.l.b16 %v3720
        %v3834 = vunpack.c.h.b16 %v3720
        %v3835 = vunpack.c.l.b16 %v3721
        %v3836 = vunpack.c.l.b16 %v3722
        %v3837 = vunpack.c.h.b16 %v3722
        %v3838 = vunpack.c.l.b16 %v3723
        %v3839 = vunpack.c.h.b16 %v3723
        %v3840 = vunpack.c.l.b16 %v3724
        %v3841 = vunpack.c.l.b16 %v3725
        %v3842 = vunpack.c.h.b16 %v3725
        %v3843 = vunpack.c.l.b16 %v3726
        %v3844 = vunpack.c.h.b16 %v3726
        %v3845 = vunpack.c.l.b16 %v3727
        %v3846 = vunpack.c.l.b16 %v3728
        %v3847 = vunpack.c.h.b16 %v3728
        %v3848 = vunpack.c.l.b16 %v3729
        %v3849 = vunpack.c.h.b16 %v3729
        %v3850 = vunpack.c.l.b16 %v3730
        %v3851 = vpack.c.b16 %v3831, %v3826
        %v3852 = vpack.c.b16 %v3832, %v3827
        %v3853 = vpack.c.b16 %v3833, %v3828
        %v3854 = vpack.c.b16 %v3834, %v3829
        %v3855 = vpack.c.b16 %v3835, %v3830
        %v3856 = vpack.c.b16 %v3841, %v3836
        %v3857 = vpack.c.b16 %v3842, %v3837
        %v3858 = vpack.c.b16 %v3843, %v3838
        %v3859 = vpack.c.b16 %v3844, %v3839
        %v3860 = vpack.c.b16 %v3845, %v3840
        %v3861 = vpack.c.b16 %v3846, %v3846
        %v3862 = vpack.c.b16 %v3847, %v3847
        %v3863 = vpack.c.b16 %v3848, %v3848
        %v3864 = vpack.c.b16 %v3849, %v3849
        %v3865 = vpack.c.b16 %v3850, %v3850
        %v3961 = vunpack.c.l.b16 %v3731
        %v3962 = vunpack.c.h.b16 %v3731
        %v3963 = vunpack.c.l.b16 %v3732
        %v3964 = vunpack.c.h.b16 %v3732
        %v3965 = vunpack.c.l.b16 %v3733
        %v3966 = vunpack.c.h.b16 %v3733
        %v3967 = vunpack.c.l.b16 %v3734
        %v3968 = vunpack.c.h.b16 %v3734
        %v3969 = vunpack.c.l.b16 %v3735
        %v3970 = vunpack.c.h.b16 %v3735
        %v3971 = vunpack.c.l.b16 %v3736
        %v3972 = vunpack.c.h.b16 %v3736
        %v3973 = vunpack.c.l.b16 %v3737
        %v3974 = vunpack.c.h.b16 %v3737
        %v3975 = vunpack.c.l.b16 %v3738
        %v3976 = vunpack.c.h.b16 %v3738
        %v3977 = vunpack.c.l.b16 %v3739
        %v3978 = vunpack.c.h.b16 %v3739
        %v3979 = vunpack.c.l.b16 %v3740
        %v3980 = vunpack.c.h.b16 %v3740
        %v3981 = vunpack.c.l.b16 %v3741
        %v3982 = vunpack.c.h.b16 %v3741
        %v3983 = vunpack.c.l.b16 %v3742
        %v3984 = vunpack.c.h.b16 %v3742
        %v3985 = vunpack.c.l.b16 %v3743
        %v3986 = vunpack.c.h.b16 %v3743
        %v3987 = vunpack.c.l.b16 %v3744
        %v3988 = vunpack.c.h.b16 %v3744
        %v3989 = vunpack.c.l.b16 %v3745
        %v3990 = vunpack.c.h.b16 %v3745
        %v3991 = vunpack.c.l.b16 %v3746
        %v3992 = vunpack.c.h.b16 %v3746
        %v3993 = vunpack.c.l.b16 %v3747
        %v3994 = vunpack.c.h.b16 %v3747
        %v3995 = vunpack.c.l.b16 %v3748
        %v3996 = vunpack.c.h.b16 %v3748
        %v3997 = vunpack.c.l.b16 %v3749
        %v3998 = vunpack.c.h.b16 %v3749
        %v3999 = vunpack.c.l.b16 %v3750
        %v4000 = vunpack.c.h.b16 %v3750
        %v4001 = vunpack.c.l.b16 %v3751
        %v4002 = vunpack.c.h.b16 %v3751
        %v4003 = vunpack.c.l.b16 %v3752
        %v4004 = vunpack.c.h.b16 %v3752
        %v4005 = vunpack.c.l.b16 %v3753
        %v4006 = vunpack.c.h.b16 %v3753
        %v4007 = vunpack.c.l.b16 %v3754
        %v4008 = vunpack.c.h.b16 %v3754
        %v4009 = vunpack.c.l.b16 %v3755
        %v4010 = vunpack.c.h.b16 %v3755
        %v4011 = vunpack.c.l.b16 %v3756
        %v4012 = vunpack.c.h.b16 %v3756
        %v4013 = vunpack.c.l.b16 %v3757
        %v4014 = vunpack.c.h.b16 %v3757
        %v4015 = vunpack.c.l.b16 %v3758
        %v4016 = vunpack.c.h.b16 %v3758
        %v4017 = vunpack.c.l.b16 %v3759
        %v4018 = vunpack.c.h.b16 %v3759
        %v4019 = vunpack.c.l.b16 %v3760
        %v4020 = vunpack.c.h.b16 %v3760
        %v4021 = vunpack.c.l.b16 %v3761
        %v4022 = vunpack.c.h.b16 %v3761
        %v4023 = vunpack.c.l.b16 %v3762
        %v4024 = vunpack.c.h.b16 %v3762
        %v4025 = vunpack.c.l.b16 %v3763
        %v4026 = vunpack.c.h.b16 %v3763
        %v4027 = vunpack.c.l.b16 %v3764
        %v4028 = vunpack.c.h.b16 %v3764
        %v4029 = vunpack.c.l.b16 %v3765
        %v4030 = vunpack.c.h.b16 %v3765
        %v4031 = vunpack.c.l.b16 %v3766
        %v4032 = vunpack.c.h.b16 %v3766
        %v4033 = vunpack.c.l.b16 %v3767
        %v4034 = vunpack.c.h.b16 %v3767
        %v4035 = vunpack.c.l.b16 %v3768
        %v4036 = vunpack.c.h.b16 %v3768
        %v4037 = vunpack.c.l.b16 %v3769
        %v4038 = vunpack.c.h.b16 %v3769
        %v4039 = vunpack.c.l.b16 %v3770
        %v4040 = vunpack.c.h.b16 %v3770
        %v4041 = vunpack.c.l.b16 %v3771
        %v4042 = vunpack.c.h.b16 %v3771
        %v4043 = vunpack.c.l.b16 %v3772
        %v4044 = vunpack.c.h.b16 %v3772
        %v4045 = vunpack.c.l.b16 %v3773
        %v4046 = vunpack.c.h.b16 %v3773
        %v4047 = vunpack.c.l.b16 %v3774
        %v4048 = vunpack.c.h.b16 %v3774
        %v4049 = vunpack.c.l.b16 %v3775
        %v4050 = vunpack.c.h.b16 %v3775
        %v4051 = vunpack.c.l.b16 %v3776
        %v4052 = vunpack.c.h.b16 %v3776
        %v4053 = vunpack.c.l.b16 %v3777
        %v4054 = vunpack.c.h.b16 %v3777
        %v4055 = vunpack.c.l.b16 %v3778
        %v4056 = vunpack.c.h.b16 %v3778
        %v4057 = vunpack.c.l.b16 %v3779
        %v4058 = vunpack.c.h.b16 %v3779
        %v4059 = vunpack.c.l.b16 %v3780
        %v4060 = vunpack.c.h.b16 %v3780
        %v4061 = vunpack.c.l.b16 %v3781
        %v4062 = vunpack.c.h.b16 %v3781
        %v4063 = vunpack.c.l.b16 %v3782
        %v4064 = vunpack.c.h.b16 %v3782
        %v4065 = vunpack.c.l.b16 %v3783
        %v4066 = vunpack.c.h.b16 %v3783
        %v4067 = vunpack.c.l.b16 %v3784
        %v4068 = vunpack.c.h.b16 %v3784
        %v4069 = vunpack.c.l.b16 %v3785
        %v4070 = vunpack.c.h.b16 %v3785
        %v4071 = vunpack.c.l.b16 %v3786
        %v4072 = vunpack.c.h.b16 %v3786
        %v4073 = vunpack.c.l.b16 %v3787
        %v4074 = vunpack.c.h.b16 %v3787
        %v4075 = vunpack.c.l.b16 %v3788
        %v4076 = vunpack.c.h.b16 %v3788
        %v4077 = vunpack.c.l.b16 %v3789
        %v4078 = vunpack.c.h.b16 %v3789
        %v4079 = vunpack.c.l.b16 %v3790
        %v4080 = vunpack.c.h.b16 %v3790
        %v4081 = vunpack.c.l.b16 %v3791
        %v4082 = vunpack.c.h.b16 %v3791
        %v4083 = vunpack.c.l.b16 %v3792
        %v4084 = vunpack.c.h.b16 %v3792
        %v4085 = vunpack.c.l.b16 %v3793
        %v4086 = vunpack.c.h.b16 %v3793
        %v4087 = vunpack.c.l.b16 %v3794
        %v4088 = vunpack.c.h.b16 %v3794
        %v4089 = vunpack.c.l.b16 %v3795
        %v4090 = vunpack.c.h.b16 %v3795
        %v4091 = vunpack.c.l.b16 %v3796
        %v4092 = vunpack.c.h.b16 %v3796
        %v4093 = vunpack.c.l.b16 %v3797
        %v4094 = vunpack.c.h.b16 %v3797
        %v4095 = vunpack.c.l.b16 %v3798
        %v4096 = vunpack.c.h.b16 %v3798
        %v4097 = vunpack.c.l.b16 %v3799
        %v4098 = vunpack.c.h.b16 %v3799
        %v4099 = vunpack.c.l.b16 %v3800
        %v4100 = vunpack.c.h.b16 %v3800
        %v4101 = vunpack.c.l.b16 %v3801
        %v4102 = vunpack.c.h.b16 %v3801
        %v4103 = vunpack.c.l.b16 %v3802
        %v4104 = vunpack.c.h.b16 %v3802
        %v4105 = vunpack.c.l.b16 %v3803
        %v4106 = vunpack.c.h.b16 %v3803
        %v4107 = vunpack.c.l.b16 %v3804
        %v4108 = vunpack.c.h.b16 %v3804
        %v4109 = vunpack.c.l.b16 %v3805
        %v4110 = vunpack.c.h.b16 %v3805
        %v4111 = vunpack.c.l.b16 %v3806
        %v4112 = vunpack.c.h.b16 %v3806
        %v4113 = vunpack.c.l.b16 %v3807
        %v4114 = vunpack.c.h.b16 %v3807
        %v4115 = vunpack.c.l.b16 %v3808
        %v4116 = vunpack.c.h.b16 %v3808
        %v4117 = vunpack.c.l.b16 %v3809
        %v4118 = vunpack.c.h.b16 %v3809
        %v4119 = vunpack.c.l.b16 %v3810
        %v4120 = vunpack.c.h.b16 %v3810
        %v4121 = vpack.c.b16 %v3963, %v3961
        %v4122 = vpack.c.b16 %v3964, %v3962
        %v4123 = vpack.c.b16 %v3967, %v3965
        %v4124 = vpack.c.b16 %v3968, %v3966
        %v4125 = vpack.c.b16 %v3971, %v3969
        %v4126 = vpack.c.b16 %v3972, %v3970
        %v4127 = vpack.c.b16 %v3975, %v3973
        %v4128 = vpack.c.b16 %v3976, %v3974
        %v4129 = vpack.c.b16 %v3979, %v3977
        %v4130 = vpack.c.b16 %v3980, %v3978
        %v4131 = vpack.c.b16 %v3983, %v3981
        %v4132 = vpack.c.b16 %v3984, %v3982
        %v4133 = vpack.c.b16 %v3987, %v3985
        %v4134 = vpack.c.b16 %v3988, %v3986
        %v4135 = vpack.c.b16 %v3991, %v3989
        %v4136 = vpack.c.b16 %v3992, %v3990
        %v4137 = vpack.c.b16 %v3995, %v3993
        %v4138 = vpack.c.b16 %v3996, %v3994
        %v4139 = vpack.c.b16 %v3999, %v3997
        %v4140 = vpack.c.b16 %v4000, %v3998
        %v4141 = vpack.c.b16 %v4003, %v4001
        %v4142 = vpack.c.b16 %v4004, %v4002
        %v4143 = vpack.c.b16 %v4007, %v4005
        %v4144 = vpack.c.b16 %v4008, %v4006
        %v4145 = vpack.c.b16 %v4011, %v4009
        %v4146 = vpack.c.b16 %v4012, %v4010
        %v4147 = vpack.c.b16 %v4015, %v4013
        %v4148 = vpack.c.b16 %v4016, %v4014
        %v4149 = vpack.c.b16 %v4019, %v4017
        %v4150 = vpack.c.b16 %v4020, %v4018
        %v4151 = vpack.c.b16 %v4023, %v4021
        %v4152 = vpack.c.b16 %v4024, %v4022
        %v4153 = vpack.c.b16 %v4027, %v4025
        %v4154 = vpack.c.b16 %v4028, %v4026
        %v4155 = vpack.c.b16 %v4031, %v4029
        %v4156 = vpack.c.b16 %v4032, %v4030
        %v4157 = vpack.c.b16 %v4035, %v4033
        %v4158 = vpack.c.b16 %v4036, %v4034
        %v4159 = vpack.c.b16 %v4039, %v4037
        %v4160 = vpack.c.b16 %v4040, %v4038
        %v4161 = vpack.c.b16 %v4043, %v4041
        %v4162 = vpack.c.b16 %v4044, %v4042
        %v4163 = vpack.c.b16 %v4047, %v4045
        %v4164 = vpack.c.b16 %v4048, %v4046
        %v4165 = vpack.c.b16 %v4051, %v4049
        %v4166 = vpack.c.b16 %v4052, %v4050
        %v4167 = vpack.c.b16 %v4055, %v4053
        %v4168 = vpack.c.b16 %v4056, %v4054
        %v4169 = vpack.c.b16 %v4059, %v4057
        %v4170 = vpack.c.b16 %v4060, %v4058
        %v4171 = vpack.c.b16 %v4063, %v4061
        %v4172 = vpack.c.b16 %v4064, %v4062
        %v4173 = vpack.c.b16 %v4067, %v4065
        %v4174 = vpack.c.b16 %v4068, %v4066
        %v4175 = vpack.c.b16 %v4071, %v4069
        %v4176 = vpack.c.b16 %v4072, %v4070
        %v4177 = vpack.c.b16 %v4075, %v4073
        %v4178 = vpack.c.b16 %v4076, %v4074
        %v4179 = vpack.c.b16 %v4079, %v4077
        %v4180 = vpack.c.b16 %v4080, %v4078
        %v4181 = vpack.c.b16 %v4083, %v4081
        %v4182 = vpack.c.b16 %v4084, %v4082
        %v4183 = vpack.c.b16 %v4087, %v4085
        %v4184 = vpack.c.b16 %v4088, %v4086
        %v4185 = vpack.c.b16 %v4091, %v4089
        %v4186 = vpack.c.b16 %v4092, %v4090
        %v4187 = vpack.c.b16 %v4095, %v4093
        %v4188 = vpack.c.b16 %v4096, %v4094
        %v4189 = vpack.c.b16 %v4099, %v4097
        %v4190 = vpack.c.b16 %v4100, %v4098
        %v4191 = vpack.c.b16 %v4103, %v4101
        %v4192 = vpack.c.b16 %v4104, %v4102
        %v4193 = vpack.c.b16 %v4107, %v4105
        %v4194 = vpack.c.b16 %v4108, %v4106
        %v4195 = vpack.c.b16 %v4111, %v4109
        %v4196 = vpack.c.b16 %v4112, %v4110
        %v4197 = vpack.c.b16 %v4115, %v4113
        %v4198 = vpack.c.b16 %v4116, %v4114
        %v4199 = vpack.c.b16 %v4119, %v4117
        %v4200 = vpack.c.b16 %v4120, %v4118
        %4281 = vmatpush.bf16.msra.mxu0 %v4135
        %4282 = vmatpush.bf16.msra.mxu0 %v4133
        %4283 = vmatpush.bf16.msra.mxu0 %v4131
        %4284 = vmatpush.bf16.msra.mxu0 %v4129
        %4285 = vmatpush.bf16.msra.mxu0 %v4127
        %4286 = vmatpush.bf16.msra.mxu0 %v4125
        %4287 = vmatpush.bf16.msra.mxu0 %v4123
        %4288 = vmatpush.bf16.msra.mxu0 %v4121
        %4289 = vmatmul.bf16.gmra.mxu0 %v3851
        %v4290 = vpop.f32.mrf.mxu0
        %v4291 = vadd.f32 0.0, %v4290
        %v4292 = vpop.f32.mrf.mxu0
        %v4293 = vadd.f32 0.0, %v4292
        %4294 = vmatmul.bf16.gmra.mxu0 %v3856
        %v4295 = vpop.f32.mrf.mxu0
        %v4296 = vadd.f32 0.0, %v4295
        %v4297 = vpop.f32.mrf.mxu0
        %v4298 = vadd.f32 0.0, %v4297
        %4299 = vmatmul.bf16.gmra.mxu0 %v3861
        %v4300 = vpop.f32.mrf.mxu0
        %v4301 = vadd.f32 0.0, %v4300
        %v4302 = vpop.f32.mrf.mxu0
        %4303 = vdwg.mxu0
        %4304 = vmatpush.bf16.msra.mxu0 %v4151
        %4305 = vmatpush.bf16.msra.mxu0 %v4149
        %4306 = vmatpush.bf16.msra.mxu0 %v4147
        %4307 = vmatpush.bf16.msra.mxu0 %v4145
        %4308 = vmatpush.bf16.msra.mxu0 %v4143
        %4309 = vmatpush.bf16.msra.mxu0 %v4141
        %4310 = vmatpush.bf16.msra.mxu0 %v4139
        %4311 = vmatpush.bf16.msra.mxu0 %v4137
        %4312 = vmatmul.bf16.gmra.mxu0 %v3852
        %v4313 = vpop.f32.mrf.mxu0
        %v4314 = vadd.f32 %v4291, %v4313
        %v4315 = vpop.f32.mrf.mxu0
        %v4316 = vadd.f32 %v4293, %v4315
        %4317 = vmatmul.bf16.gmra.mxu0 %v3857
        %v4318 = vpop.f32.mrf.mxu0
        %v4319 = vadd.f32 %v4296, %v4318
        %v4320 = vpop.f32.mrf.mxu0
        %v4321 = vadd.f32 %v4298, %v4320
        %4322 = vmatmul.bf16.gmra.mxu0 %v3862
        %v4323 = vpop.f32.mrf.mxu0
        %v4324 = vadd.f32 %v4301, %v4323
        %v4325 = vpop.f32.mrf.mxu0
        %4326 = vdwg.mxu0
        %4327 = vmatpush.bf16.msra.mxu0 %v4167
        %4328 = vmatpush.bf16.msra.mxu0 %v4165
        %4329 = vmatpush.bf16.msra.mxu0 %v4163
        %4330 = vmatpush.bf16.msra.mxu0 %v4161
        %4331 = vmatpush.bf16.msra.mxu0 %v4159
        %4332 = vmatpush.bf16.msra.mxu0 %v4157
        %4333 = vmatpush.bf16.msra.mxu0 %v4155
        %4334 = vmatpush.bf16.msra.mxu0 %v4153
        %4335 = vmatmul.bf16.gmra.mxu0 %v3853
        %v4336 = vpop.f32.mrf.mxu0
        %v4337 = vadd.f32 %v4314, %v4336
        %v4338 = vpop.f32.mrf.mxu0
        %v4339 = vadd.f32 %v4316, %v4338
        %4340 = vmatmul.bf16.gmra.mxu0 %v3858
        %v4341 = vpop.f32.mrf.mxu0
        %v4342 = vadd.f32 %v4319, %v4341
        %v4343 = vpop.f32.mrf.mxu0
        %v4344 = vadd.f32 %v4321, %v4343
        %4345 = vmatmul.bf16.gmra.mxu0 %v3863
        %v4346 = vpop.f32.mrf.mxu0
        %v4347 = vadd.f32 %v4324, %v4346
        %v4348 = vpop.f32.mrf.mxu0
        %4349 = vdwg.mxu0
        %4350 = vmatpush.bf16.msra.mxu0 %v4183
        %4351 = vmatpush.bf16.msra.mxu0 %v4181
        %4352 = vmatpush.bf16.msra.mxu0 %v4179
        %4353 = vmatpush.bf16.msra.mxu0 %v4177
        %4354 = vmatpush.bf16.msra.mxu0 %v4175
        %4355 = vmatpush.bf16.msra.mxu0 %v4173
        %4356 = vmatpush.bf16.msra.mxu0 %v4171
        %4357 = vmatpush.bf16.msra.mxu0 %v4169
        %4358 = vmatmul.bf16.gmra.mxu0 %v3854
        %v4359 = vpop.f32.mrf.mxu0
        %v4360 = vadd.f32 %v4337, %v4359
        %v4361 = vpop.f32.mrf.mxu0
        %v4362 = vadd.f32 %v4339, %v4361
        %4363 = vmatmul.bf16.gmra.mxu0 %v3859
        %v4364 = vpop.f32.mrf.mxu0
        %v4365 = vadd.f32 %v4342, %v4364
        %v4366 = vpop.f32.mrf.mxu0
        %v4367 = vadd.f32 %v4344, %v4366
        %4368 = vmatmul.bf16.gmra.mxu0 %v3864
        %v4369 = vpop.f32.mrf.mxu0
        %v4370 = vadd.f32 %v4347, %v4369
        %v4371 = vpop.f32.mrf.mxu0
        %4372 = vdwg.mxu0
        %4373 = vmatpush.bf16.msra.mxu0 %v4199
        %4374 = vmatpush.bf16.msra.mxu0 %v4197
        %4375 = vmatpush.bf16.msra.mxu0 %v4195
        %4376 = vmatpush.bf16.msra.mxu0 %v4193
        %4377 = vmatpush.bf16.msra.mxu0 %v4191
        %4378 = vmatpush.bf16.msra.mxu0 %v4189
        %4379 = vmatpush.bf16.msra.mxu0 %v4187
        %4380 = vmatpush.bf16.msra.mxu0 %v4185
        %4381 = vmatmul.bf16.gmra.mxu0 %v3855
        %v4382 = vpop.f32.mrf.mxu0
        %v4383 = vadd.f32 %v4360, %v4382
        %v4384 = vpop.f32.mrf.mxu0
        %v4385 = vadd.f32 %v4362, %v4384
        %4386 = vmatmul.bf16.gmra.mxu0 %v3860
        %v4387 = vpop.f32.mrf.mxu0
        %v4388 = vadd.f32 %v4365, %v4387
        %v4389 = vpop.f32.mrf.mxu0
        %v4390 = vadd.f32 %v4367, %v4389
        %4391 = vmatmul.bf16.gmra.mxu0 %v3865
        %v4392 = vpop.f32.mrf.mxu0
        %v4393 = vadd.f32 %v4370, %v4392
        %v4394 = vpop.f32.mrf.mxu0
        %4395 = vdwg.mxu0
        %4396 = vmatpush.bf16.msra.mxu0 %v4136
        %4397 = vmatpush.bf16.msra.mxu0 %v4134
        %4398 = vmatpush.bf16.msra.mxu0 %v4132
        %4399 = vmatpush.bf16.msra.mxu0 %v4130
        %4400 = vmatpush.bf16.msra.mxu0 %v4128
        %4401 = vmatpush.bf16.msra.mxu0 %v4126
        %4402 = vmatpush.bf16.msra.mxu0 %v4124
        %4403 = vmatpush.bf16.msra.mxu0 %v4122
        %4404 = vmatmul.bf16.gmra.mxu0 %v3851
        %v4405 = vpop.f32.mrf.mxu0
        %v4406 = vadd.f32 0.0, %v4405
        %v4407 = vpop.f32.mrf.mxu0
        %v4408 = vadd.f32 0.0, %v4407
        %4409 = vmatmul.bf16.gmra.mxu0 %v3856
        %v4410 = vpop.f32.mrf.mxu0
        %v4411 = vadd.f32 0.0, %v4410
        %v4412 = vpop.f32.mrf.mxu0
        %v4413 = vadd.f32 0.0, %v4412
        %4414 = vmatmul.bf16.gmra.mxu0 %v3861
        %v4415 = vpop.f32.mrf.mxu0
        %v4416 = vadd.f32 0.0, %v4415
        %v4417 = vpop.f32.mrf.mxu0
        %4418 = vdwg.mxu0
        %4419 = vmatpush.bf16.msra.mxu0 %v4152
        %4420 = vmatpush.bf16.msra.mxu0 %v4150
        %4421 = vmatpush.bf16.msra.mxu0 %v4148
        %4422 = vmatpush.bf16.msra.mxu0 %v4146
        %4423 = vmatpush.bf16.msra.mxu0 %v4144
        %4424 = vmatpush.bf16.msra.mxu0 %v4142
        %4425 = vmatpush.bf16.msra.mxu0 %v4140
        %4426 = vmatpush.bf16.msra.mxu0 %v4138
        %4427 = vmatmul.bf16.gmra.mxu0 %v3852
        %v4428 = vpop.f32.mrf.mxu0
        %v4429 = vadd.f32 %v4406, %v4428
        %v4430 = vpop.f32.mrf.mxu0
        %v4431 = vadd.f32 %v4408, %v4430
        %4432 = vmatmul.bf16.gmra.mxu0 %v3857
        %v4433 = vpop.f32.mrf.mxu0
        %v4434 = vadd.f32 %v4411, %v4433
        %v4435 = vpop.f32.mrf.mxu0
        %v4436 = vadd.f32 %v4413, %v4435
        %4437 = vmatmul.bf16.gmra.mxu0 %v3862
        %v4438 = vpop.f32.mrf.mxu0
        %v4439 = vadd.f32 %v4416, %v4438
        %v4440 = vpop.f32.mrf.mxu0
        %4441 = vdwg.mxu0
        %4442 = vmatpush.bf16.msra.mxu0 %v4168
        %4443 = vmatpush.bf16.msra.mxu0 %v4166
        %4444 = vmatpush.bf16.msra.mxu0 %v4164
        %4445 = vmatpush.bf16.msra.mxu0 %v4162
        %4446 = vmatpush.bf16.msra.mxu0 %v4160
        %4447 = vmatpush.bf16.msra.mxu0 %v4158
        %4448 = vmatpush.bf16.msra.mxu0 %v4156
        %4449 = vmatpush.bf16.msra.mxu0 %v4154
        %4450 = vmatmul.bf16.gmra.mxu0 %v3853
        %v4451 = vpop.f32.mrf.mxu0
        %v4452 = vadd.f32 %v4429, %v4451
        %v4453 = vpop.f32.mrf.mxu0
        %v4454 = vadd.f32 %v4431, %v4453
        %4455 = vmatmul.bf16.gmra.mxu0 %v3858
        %v4456 = vpop.f32.mrf.mxu0
        %v4457 = vadd.f32 %v4434, %v4456
        %v4458 = vpop.f32.mrf.mxu0
        %v4459 = vadd.f32 %v4436, %v4458
        %4460 = vmatmul.bf16.gmra.mxu0 %v3863
        %v4461 = vpop.f32.mrf.mxu0
        %v4462 = vadd.f32 %v4439, %v4461
        %v4463 = vpop.f32.mrf.mxu0
        %4464 = vdwg.mxu0
        %4465 = vmatpush.bf16.msra.mxu0 %v4184
        %4466 = vmatpush.bf16.msra.mxu0 %v4182
        %4467 = vmatpush.bf16.msra.mxu0 %v4180
        %4468 = vmatpush.bf16.msra.mxu0 %v4178
        %4469 = vmatpush.bf16.msra.mxu0 %v4176
        %4470 = vmatpush.bf16.msra.mxu0 %v4174
        %4471 = vmatpush.bf16.msra.mxu0 %v4172
        %4472 = vmatpush.bf16.msra.mxu0 %v4170
        %4473 = vmatmul.bf16.gmra.mxu0 %v3854
        %v4474 = vpop.f32.mrf.mxu0
        %v4475 = vadd.f32 %v4452, %v4474
        %v4476 = vpop.f32.mrf.mxu0
        %v4477 = vadd.f32 %v4454, %v4476
        %4478 = vmatmul.bf16.gmra.mxu0 %v3859
        %v4479 = vpop.f32.mrf.mxu0
        %v4480 = vadd.f32 %v4457, %v4479
        %v4481 = vpop.f32.mrf.mxu0
        %v4482 = vadd.f32 %v4459, %v4481
        %4483 = vmatmul.bf16.gmra.mxu0 %v3864
        %v4484 = vpop.f32.mrf.mxu0
        %v4485 = vadd.f32 %v4462, %v4484
        %v4486 = vpop.f32.mrf.mxu0
        %4487 = vdwg.mxu0
        %4488 = vmatpush.bf16.msra.mxu0 %v4200
        %4489 = vmatpush.bf16.msra.mxu0 %v4198
        %4490 = vmatpush.bf16.msra.mxu0 %v4196
        %4491 = vmatpush.bf16.msra.mxu0 %v4194
        %4492 = vmatpush.bf16.msra.mxu0 %v4192
        %4493 = vmatpush.bf16.msra.mxu0 %v4190
        %4494 = vmatpush.bf16.msra.mxu0 %v4188
        %4495 = vmatpush.bf16.msra.mxu0 %v4186
        %4496 = vmatmul.bf16.gmra.mxu0 %v3855
        %v4497 = vpop.f32.mrf.mxu0
        %v4498 = vadd.f32 %v4475, %v4497
        %v4499 = vpop.f32.mrf.mxu0
        %v4500 = vadd.f32 %v4477, %v4499
        %4501 = vmatmul.bf16.gmra.mxu0 %v3860
        %v4502 = vpop.f32.mrf.mxu0
        %v4503 = vadd.f32 %v4480, %v4502
        %v4504 = vpop.f32.mrf.mxu0
        %v4505 = vadd.f32 %v4482, %v4504
        %4506 = vmatmul.bf16.gmra.mxu0 %v3865
        %v4507 = vpop.f32.mrf.mxu0
        %v4508 = vadd.f32 %v4485, %v4507
        %v4509 = vpop.f32.mrf.mxu0
        %4510 = vdwg.mxu0
        %v4511 = vld [vmem:[%s3670] sm:$0xff]
        %v4512 = vld [vmem:[%s3670 + $0x8] sm:$0xff]
        %v4513 = vld [vmem:[%s3670 + $0x10] sm:$0xf]
        %v4514 = vld [vmem:[%s3670 + $0x14] sm:$0xff]
        %v4515 = vld [vmem:[%s3670 + $0x1c] sm:$0xff]
        %v4516 = vld [vmem:[%s3670 + $0x24] sm:$0xf]
        %v4517 = vld [vmem:[%s3670 + $0x28] sm:$0xff]
        %v4518 = vld [vmem:[%s3670 + $0x30] sm:$0xff]
        %v4519 = vld [vmem:[%s3670 + $0x38] sm:$0xf]
        %v4520 = vld [vmem:[%s3670 + $0x3c] sm:$0xff]
        %v4521 = vld [vmem:[%s3670 + $0x44] sm:$0xff]
        %v4522 = vld [vmem:[%s3670 + $0x4c] sm:$0xf]
        %v4523 = vld [vmem:[%s3670 + $0x50] sm:$0xff]
        %v4524 = vld [vmem:[%s3670 + $0x58] sm:$0xff]
        %v4525 = vld [vmem:[%s3670 + $0x60] sm:$0xf]
        %v4541 = vunpack.c.l.b16 %v4511
        %v4542 = vunpack.c.h.b16 %v4511
        %v4543 = vunpack.c.l.b16 %v4512
        %v4544 = vunpack.c.h.b16 %v4512
        %v4545 = vunpack.c.l.b16 %v4513
        %v4546 = vunpack.c.l.b16 %v4514
        %v4547 = vunpack.c.h.b16 %v4514
        %v4548 = vunpack.c.l.b16 %v4515
        %v4549 = vunpack.c.h.b16 %v4515
        %v4550 = vunpack.c.l.b16 %v4516
        %v4551 = vunpack.c.l.b16 %v4517
        %v4552 = vunpack.c.h.b16 %v4517
        %v4553 = vunpack.c.l.b16 %v4518
        %v4554 = vunpack.c.h.b16 %v4518
        %v4555 = vunpack.c.l.b16 %v4519
        %v4556 = vunpack.c.l.b16 %v4520
        %v4557 = vunpack.c.h.b16 %v4520
        %v4558 = vunpack.c.l.b16 %v4521
        %v4559 = vunpack.c.h.b16 %v4521
        %v4560 = vunpack.c.l.b16 %v4522
        %v4561 = vunpack.c.l.b16 %v4523
        %v4562 = vunpack.c.h.b16 %v4523
        %v4563 = vunpack.c.l.b16 %v4524
        %v4564 = vunpack.c.h.b16 %v4524
        %v4565 = vunpack.c.l.b16 %v4525
        %v4566 = vpack.c.b16 %v4546, %v4541
        %v4567 = vpack.c.b16 %v4547, %v4542
        %v4568 = vpack.c.b16 %v4548, %v4543
        %v4569 = vpack.c.b16 %v4549, %v4544
        %v4570 = vpack.c.b16 %v4550, %v4545
        %v4571 = vpack.c.b16 %v4556, %v4551
        %v4572 = vpack.c.b16 %v4557, %v4552
        %v4573 = vpack.c.b16 %v4558, %v4553
        %v4574 = vpack.c.b16 %v4559, %v4554
        %v4575 = vpack.c.b16 %v4560, %v4555
        %v4576 = vpack.c.b16 %v4561, %v4561
        %v4577 = vpack.c.b16 %v4562, %v4562
        %v4578 = vpack.c.b16 %v4563, %v4563
        %v4579 = vpack.c.b16 %v4564, %v4564
        %v4580 = vpack.c.b16 %v4565, %v4565
        %4596 = vmatpush.bf16.msra.mxu0 %v4135
        %4597 = vmatpush.bf16.msra.mxu0 %v4133
        %4598 = vmatpush.bf16.msra.mxu0 %v4131
        %4599 = vmatpush.bf16.msra.mxu0 %v4129
        %4600 = vmatpush.bf16.msra.mxu0 %v4127
        %4601 = vmatpush.bf16.msra.mxu0 %v4125
        %4602 = vmatpush.bf16.msra.mxu0 %v4123
        %4603 = vmatpush.bf16.msra.mxu0 %v4121
        %4604 = vmatmul.bf16.gmra.mxu0 %v4566
        %v4605 = vpop.f32.mrf.mxu0
        %v4606 = vadd.f32 0.0, %v4605
        %v4607 = vpop.f32.mrf.mxu0
        %v4608 = vadd.f32 0.0, %v4607
        %4609 = vmatmul.bf16.gmra.mxu0 %v4571
        %v4610 = vpop.f32.mrf.mxu0
        %v4611 = vadd.f32 0.0, %v4610
        %v4612 = vpop.f32.mrf.mxu0
        %v4613 = vadd.f32 0.0, %v4612
        %4614 = vmatmul.bf16.gmra.mxu0 %v4576
        %v4615 = vpop.f32.mrf.mxu0
        %v4616 = vadd.f32 0.0, %v4615
        %v4617 = vpop.f32.mrf.mxu0
        %4618 = vdwg.mxu0
        %4619 = vmatpush.bf16.msra.mxu0 %v4151
        %4620 = vmatpush.bf16.msra.mxu0 %v4149
        %4621 = vmatpush.bf16.msra.mxu0 %v4147
        %4622 = vmatpush.bf16.msra.mxu0 %v4145
        %4623 = vmatpush.bf16.msra.mxu0 %v4143
        %4624 = vmatpush.bf16.msra.mxu0 %v4141
        %4625 = vmatpush.bf16.msra.mxu0 %v4139
        %4626 = vmatpush.bf16.msra.mxu0 %v4137
        %4627 = vmatmul.bf16.gmra.mxu0 %v4567
        %v4628 = vpop.f32.mrf.mxu0
        %v4629 = vadd.f32 %v4606, %v4628
        %v4630 = vpop.f32.mrf.mxu0
        %v4631 = vadd.f32 %v4608, %v4630
        %4632 = vmatmul.bf16.gmra.mxu0 %v4572
        %v4633 = vpop.f32.mrf.mxu0
        %v4634 = vadd.f32 %v4611, %v4633
        %v4635 = vpop.f32.mrf.mxu0
        %v4636 = vadd.f32 %v4613, %v4635
        %4637 = vmatmul.bf16.gmra.mxu0 %v4577
        %v4638 = vpop.f32.mrf.mxu0
        %v4639 = vadd.f32 %v4616, %v4638
        %v4640 = vpop.f32.mrf.mxu0
        %4641 = vdwg.mxu0
        %4642 = vmatpush.bf16.msra.mxu0 %v4167
        %4643 = vmatpush.bf16.msra.mxu0 %v4165
        %4644 = vmatpush.bf16.msra.mxu0 %v4163
        %4645 = vmatpush.bf16.msra.mxu0 %v4161
        %4646 = vmatpush.bf16.msra.mxu0 %v4159
        %4647 = vmatpush.bf16.msra.mxu0 %v4157
        %4648 = vmatpush.bf16.msra.mxu0 %v4155
        %4649 = vmatpush.bf16.msra.mxu0 %v4153
        %4650 = vmatmul.bf16.gmra.mxu0 %v4568
        %v4651 = vpop.f32.mrf.mxu0
        %v4652 = vadd.f32 %v4629, %v4651
        %v4653 = vpop.f32.mrf.mxu0
        %v4654 = vadd.f32 %v4631, %v4653
        %4655 = vmatmul.bf16.gmra.mxu0 %v4573
        %v4656 = vpop.f32.mrf.mxu0
        %v4657 = vadd.f32 %v4634, %v4656
        %v4658 = vpop.f32.mrf.mxu0
        %v4659 = vadd.f32 %v4636, %v4658
        %4660 = vmatmul.bf16.gmra.mxu0 %v4578
        %v4661 = vpop.f32.mrf.mxu0
        %v4662 = vadd.f32 %v4639, %v4661
        %v4663 = vpop.f32.mrf.mxu0
        %4664 = vdwg.mxu0
        %4665 = vmatpush.bf16.msra.mxu0 %v4183
        %4666 = vmatpush.bf16.msra.mxu0 %v4181
        %4667 = vmatpush.bf16.msra.mxu0 %v4179
        %4668 = vmatpush.bf16.msra.mxu0 %v4177
        %4669 = vmatpush.bf16.msra.mxu0 %v4175
        %4670 = vmatpush.bf16.msra.mxu0 %v4173
        %4671 = vmatpush.bf16.msra.mxu0 %v4171
        %4672 = vmatpush.bf16.msra.mxu0 %v4169
        %4673 = vmatmul.bf16.gmra.mxu0 %v4569
        %v4674 = vpop.f32.mrf.mxu0
        %v4675 = vadd.f32 %v4652, %v4674
        %v4676 = vpop.f32.mrf.mxu0
        %v4677 = vadd.f32 %v4654, %v4676
        %4678 = vmatmul.bf16.gmra.mxu0 %v4574
        %v4679 = vpop.f32.mrf.mxu0
        %v4680 = vadd.f32 %v4657, %v4679
        %v4681 = vpop.f32.mrf.mxu0
        %v4682 = vadd.f32 %v4659, %v4681
        %4683 = vmatmul.bf16.gmra.mxu0 %v4579
        %v4684 = vpop.f32.mrf.mxu0
        %v4685 = vadd.f32 %v4662, %v4684
        %v4686 = vpop.f32.mrf.mxu0
        %4687 = vdwg.mxu0
        %4688 = vmatpush.bf16.msra.mxu0 %v4199
        %4689 = vmatpush.bf16.msra.mxu0 %v4197
        %4690 = vmatpush.bf16.msra.mxu0 %v4195
        %4691 = vmatpush.bf16.msra.mxu0 %v4193
        %4692 = vmatpush.bf16.msra.mxu0 %v4191
        %4693 = vmatpush.bf16.msra.mxu0 %v4189
        %4694 = vmatpush.bf16.msra.mxu0 %v4187
        %4695 = vmatpush.bf16.msra.mxu0 %v4185
        %4696 = vmatmul.bf16.gmra.mxu0 %v4570
        %v4697 = vpop.f32.mrf.mxu0
        %v4698 = vadd.f32 %v4675, %v4697
        %v4699 = vpop.f32.mrf.mxu0
        %v4700 = vadd.f32 %v4677, %v4699
        %4701 = vmatmul.bf16.gmra.mxu0 %v4575
        %v4702 = vpop.f32.mrf.mxu0
        %v4703 = vadd.f32 %v4680, %v4702
        %v4704 = vpop.f32.mrf.mxu0
        %v4705 = vadd.f32 %v4682, %v4704
        %4706 = vmatmul.bf16.gmra.mxu0 %v4580
        %v4707 = vpop.f32.mrf.mxu0
        %v4708 = vadd.f32 %v4685, %v4707
        %v4709 = vpop.f32.mrf.mxu0
        %4710 = vdwg.mxu0
        %4711 = vmatpush.bf16.msra.mxu0 %v4136
        %4712 = vmatpush.bf16.msra.mxu0 %v4134
        %4713 = vmatpush.bf16.msra.mxu0 %v4132
        %4714 = vmatpush.bf16.msra.mxu0 %v4130
        %4715 = vmatpush.bf16.msra.mxu0 %v4128
        %4716 = vmatpush.bf16.msra.mxu0 %v4126
        %4717 = vmatpush.bf16.msra.mxu0 %v4124
        %4718 = vmatpush.bf16.msra.mxu0 %v4122
        %4719 = vmatmul.bf16.gmra.mxu0 %v4566
        %v4720 = vpop.f32.mrf.mxu0
        %v4721 = vadd.f32 0.0, %v4720
        %v4722 = vpop.f32.mrf.mxu0
        %v4723 = vadd.f32 0.0, %v4722
        %4724 = vmatmul.bf16.gmra.mxu0 %v4571
        %v4725 = vpop.f32.mrf.mxu0
        %v4726 = vadd.f32 0.0, %v4725
        %v4727 = vpop.f32.mrf.mxu0
        %v4728 = vadd.f32 0.0, %v4727
        %4729 = vmatmul.bf16.gmra.mxu0 %v4576
        %v4730 = vpop.f32.mrf.mxu0
        %v4731 = vadd.f32 0.0, %v4730
        %v4732 = vpop.f32.mrf.mxu0
        %4733 = vdwg.mxu0
        %4734 = vmatpush.bf16.msra.mxu0 %v4152
        %4735 = vmatpush.bf16.msra.mxu0 %v4150
        %4736 = vmatpush.bf16.msra.mxu0 %v4148
        %4737 = vmatpush.bf16.msra.mxu0 %v4146
        %4738 = vmatpush.bf16.msra.mxu0 %v4144
        %4739 = vmatpush.bf16.msra.mxu0 %v4142
        %4740 = vmatpush.bf16.msra.mxu0 %v4140
        %4741 = vmatpush.bf16.msra.mxu0 %v4138
        %4742 = vmatmul.bf16.gmra.mxu0 %v4567
        %v4743 = vpop.f32.mrf.mxu0
        %v4744 = vadd.f32 %v4721, %v4743
        %v4745 = vpop.f32.mrf.mxu0
        %v4746 = vadd.f32 %v4723, %v4745
        %4747 = vmatmul.bf16.gmra.mxu0 %v4572
        %v4748 = vpop.f32.mrf.mxu0
        %v4749 = vadd.f32 %v4726, %v4748
        %v4750 = vpop.f32.mrf.mxu0
        %v4751 = vadd.f32 %v4728, %v4750
        %4752 = vmatmul.bf16.gmra.mxu0 %v4577
        %v4753 = vpop.f32.mrf.mxu0
        %v4754 = vadd.f32 %v4731, %v4753
        %v4755 = vpop.f32.mrf.mxu0
        %4756 = vdwg.mxu0
        %4757 = vmatpush.bf16.msra.mxu0 %v4168
        %4758 = vmatpush.bf16.msra.mxu0 %v4166
        %4759 = vmatpush.bf16.msra.mxu0 %v4164
        %4760 = vmatpush.bf16.msra.mxu0 %v4162
        %4761 = vmatpush.bf16.msra.mxu0 %v4160
        %4762 = vmatpush.bf16.msra.mxu0 %v4158
        %4763 = vmatpush.bf16.msra.mxu0 %v4156
        %4764 = vmatpush.bf16.msra.mxu0 %v4154
        %4765 = vmatmul.bf16.gmra.mxu0 %v4568
        %v4766 = vpop.f32.mrf.mxu0
        %v4767 = vadd.f32 %v4744, %v4766
        %v4768 = vpop.f32.mrf.mxu0
        %v4769 = vadd.f32 %v4746, %v4768
        %4770 = vmatmul.bf16.gmra.mxu0 %v4573
        %v4771 = vpop.f32.mrf.mxu0
        %v4772 = vadd.f32 %v4749, %v4771
        %v4773 = vpop.f32.mrf.mxu0
        %v4774 = vadd.f32 %v4751, %v4773
        %4775 = vmatmul.bf16.gmra.mxu0 %v4578
        %v4776 = vpop.f32.mrf.mxu0
        %v4777 = vadd.f32 %v4754, %v4776
        %v4778 = vpop.f32.mrf.mxu0
        %4779 = vdwg.mxu0
        %4780 = vmatpush.bf16.msra.mxu0 %v4184
        %4781 = vmatpush.bf16.msra.mxu0 %v4182
        %4782 = vmatpush.bf16.msra.mxu0 %v4180
        %4783 = vmatpush.bf16.msra.mxu0 %v4178
        %4784 = vmatpush.bf16.msra.mxu0 %v4176
        %4785 = vmatpush.bf16.msra.mxu0 %v4174
        %4786 = vmatpush.bf16.msra.mxu0 %v4172
        %4787 = vmatpush.bf16.msra.mxu0 %v4170
        %4788 = vmatmul.bf16.gmra.mxu0 %v4569
        %v4789 = vpop.f32.mrf.mxu0
        %v4790 = vadd.f32 %v4767, %v4789
        %v4791 = vpop.f32.mrf.mxu0
        %v4792 = vadd.f32 %v4769, %v4791
        %4793 = vmatmul.bf16.gmra.mxu0 %v4574
        %v4794 = vpop.f32.mrf.mxu0
        %v4795 = vadd.f32 %v4772, %v4794
        %v4796 = vpop.f32.mrf.mxu0
        %v4797 = vadd.f32 %v4774, %v4796
        %4798 = vmatmul.bf16.gmra.mxu0 %v4579
        %v4799 = vpop.f32.mrf.mxu0
        %v4800 = vadd.f32 %v4777, %v4799
        %v4801 = vpop.f32.mrf.mxu0
        %4802 = vdwg.mxu0
        %4803 = vmatpush.bf16.msra.mxu0 %v4200
        %4804 = vmatpush.bf16.msra.mxu0 %v4198
        %4805 = vmatpush.bf16.msra.mxu0 %v4196
        %4806 = vmatpush.bf16.msra.mxu0 %v4194
        %4807 = vmatpush.bf16.msra.mxu0 %v4192
        %4808 = vmatpush.bf16.msra.mxu0 %v4190
        %4809 = vmatpush.bf16.msra.mxu0 %v4188
        %4810 = vmatpush.bf16.msra.mxu0 %v4186
        %4811 = vmatmul.bf16.gmra.mxu0 %v4570
        %v4812 = vpop.f32.mrf.mxu0
        %v4813 = vadd.f32 %v4790, %v4812
        %v4814 = vpop.f32.mrf.mxu0
        %v4815 = vadd.f32 %v4792, %v4814
        %4816 = vmatmul.bf16.gmra.mxu0 %v4575
        %v4817 = vpop.f32.mrf.mxu0
        %v4818 = vadd.f32 %v4795, %v4817
        %v4819 = vpop.f32.mrf.mxu0
        %v4820 = vadd.f32 %v4797, %v4819
        %4821 = vmatmul.bf16.gmra.mxu0 %v4580
        %v4822 = vpop.f32.mrf.mxu0
        %v4823 = vadd.f32 %v4800, %v4822
        %v4824 = vpop.f32.mrf.mxu0
        %4825 = vdwg.mxu0
        %v4826 = vmax.f32 %v4383, %v4698
        %v4827 = vmax.f32 %v4498, %v4813
        %v4828 = vmax.f32 %v4385, %v4700
        %v4829 = vmax.f32 %v4500, %v4815
        %v4830 = vmax.f32 %v4388, %v4703
        %v4831 = vmax.f32 %v4503, %v4818
        %v4832 = vmax.f32 %v4390, %v4705
        %v4833 = vmax.f32 %v4505, %v4820
        %v4834 = vmax.f32 %v4393, %v4708
        %v4835 = vmax.f32 %v4508, %v4823
        %4846 = vrot.lane.b32.xlu0 %v4826, 48
        %v4847 = vpop.permute.xlu0 %4846
        %4848 = vrot.lane.b32.xlu0 %v4827, 48
        %v4849 = vpop.permute.xlu0 %4848
        %4850 = vrot.lane.b32.xlu0 %v4828, 48
        %v4851 = vpop.permute.xlu0 %4850
        %4852 = vrot.lane.b32.xlu0 %v4829, 48
        %v4853 = vpop.permute.xlu0 %4852
        %4854 = vrot.lane.b32.xlu0 %v4830, 48
        %v4855 = vpop.permute.xlu0 %4854
        %4856 = vrot.lane.b32.xlu0 %v4831, 48
        %v4857 = vpop.permute.xlu0 %4856
        %4858 = vrot.lane.b32.xlu0 %v4832, 48
        %v4859 = vpop.permute.xlu0 %4858
        %4860 = vrot.lane.b32.xlu0 %v4833, 48
        %v4861 = vpop.permute.xlu0 %4860
        %4862 = vrot.lane.b32.xlu0 %v4834, 48
        %v4863 = vpop.permute.xlu0 %4862
        %4864 = vrot.lane.b32.xlu0 %v4835, 48
        %v4865 = vpop.permute.xlu0 %4864
        %vm4866 = vcmask 392192
        %v4867 = vsel %vm4866, %v4847, %v4849
        %v4868 = vsel %vm4866, %v4851, %v4853
        %v4869 = vsel %vm4866, %v4855, %v4857
        %v4870 = vsel %vm4866, %v4859, %v4861
        %v4871 = vsel %vm4866, %v4863, %v4865
        %v4877 = vmax.f32 %v4826, %v4867
        %v4878 = vmax.f32 %v4828, %v4868
        %v4879 = vmax.f32 %v4830, %v4869
        %v4880 = vmax.f32 %v4832, %v4870
        %v4881 = vmax.f32 %v4834, %v4871
        %v4882 = vperm.slane %v544, 0
        %v4883 = vadd.f32 %v4877, %v4882
        %v4884 = vadd.f32 %v4878, %v4882
        %v4885 = vadd.f32 %v4879, %v4882
        %v4886 = vadd.f32 %v4880, %v4882
        %v4887 = vadd.f32 %v4881, %v4882
        %v4888 = vmax.f32 %v4883, 0.0
        %v4889 = vmax.f32 %v4884, 0.0
        %v4890 = vmax.f32 %v4885, 0.0
        %v4891 = vmax.f32 %v4886, 0.0
        %v4892 = vmax.f32 %v4887, 0.0
        %v4893 = vpack.c.bf16 %v4888, %v4888
        %v4894 = vld [vmem:[%s3] sm:$0xf]
        %v4895 = vld [vmem:[%s3 + $0x4] sm:$0xf]
        %v4896 = vld [vmem:[%s3 + $0x8] sm:$0xf]
        %v4897 = vld [vmem:[%s3 + $0xc] sm:$0xf]
        %v4898 = vld [vmem:[%s3 + $0x10] sm:$0xf]
        %v4899 = vld [vmem:[%s3 + $0x14] sm:$0xf]
        %v4900 = vld [vmem:[%s3 + $0x18] sm:$0xf]
        %v4901 = vld [vmem:[%s3 + $0x1c] sm:$0xf]
        %v4902 = vld [vmem:[%s3 + $0x20] sm:$0xf]
        %v4903 = vld [vmem:[%s3 + $0x24] sm:$0xf]
        %v4904 = vpack.c.bf16 %v4889, %v4889
        %s4905 = scalar_lea.vmem %s3, 40
        %v4906 = vld [vmem:[%s4905] sm:$0xf]
        %v4907 = vld [vmem:[%s4905 + $0x4] sm:$0xf]
        %v4908 = vld [vmem:[%s4905 + $0x8] sm:$0xf]
        %v4909 = vld [vmem:[%s4905 + $0xc] sm:$0xf]
        %v4910 = vld [vmem:[%s4905 + $0x10] sm:$0xf]
        %v4911 = vld [vmem:[%s4905 + $0x14] sm:$0xf]
        %v4912 = vld [vmem:[%s4905 + $0x18] sm:$0xf]
        %v4913 = vld [vmem:[%s4905 + $0x1c] sm:$0xf]
        %v4914 = vld [vmem:[%s4905 + $0x20] sm:$0xf]
        %v4915 = vld [vmem:[%s4905 + $0x24] sm:$0xf]
        %v4926 = vunpack.c.l.b16 %v4906
        %v4927 = vunpack.c.l.b16 %v4907
        %v4928 = vunpack.c.l.b16 %v4908
        %v4929 = vunpack.c.l.b16 %v4909
        %v4930 = vunpack.c.l.b16 %v4910
        %v4931 = vunpack.c.l.b16 %v4911
        %v4932 = vunpack.c.l.b16 %v4912
        %v4933 = vunpack.c.l.b16 %v4913
        %v4934 = vunpack.c.l.b16 %v4914
        %v4935 = vunpack.c.l.b16 %v4915
        %v4936 = vpack.c.b16 %v4927, %v4926
        %v4937 = vpack.c.b16 %v4929, %v4928
        %v4938 = vpack.c.b16 %v4931, %v4930
        %v4939 = vpack.c.b16 %v4933, %v4932
        %v4940 = vpack.c.b16 %v4935, %v4934
        %vm4946 = vcmask 654336
        %v4948 = vsel %vm4946, %v4904, 0
        %4950 = vmatpush.bf16.msra.mxu0 0
        %4951 = vmatpush.bf16.msra.mxu0 0
        %4952 = vmatpush.bf16.msra.mxu0 0
        %4953 = vmatpush.bf16.msra.mxu0 %v4940
        %4954 = vmatpush.bf16.msra.mxu0 %v4939
        %4955 = vmatpush.bf16.msra.mxu0 %v4938
        %4956 = vmatpush.bf16.msra.mxu0 %v4937
        %4957 = vmatpush.bf16.msra.mxu0 %v4936
        %4958 = vmatmul.bf16.gmra.mxu0 %v4948
        %v4959 = vpop.f32.mrf.mxu0
        %v4960 = vadd.f32 0.0, %v4959
        %v4961 = vpop.f32.mrf.mxu0
        %4962 = vdwg.mxu0
        %v4973 = vunpack.c.l.b16 %v4894
        %v4974 = vunpack.c.l.b16 %v4895
        %v4975 = vunpack.c.l.b16 %v4896
        %v4976 = vunpack.c.l.b16 %v4897
        %v4977 = vunpack.c.l.b16 %v4898
        %v4978 = vunpack.c.l.b16 %v4899
        %v4979 = vunpack.c.l.b16 %v4900
        %v4980 = vunpack.c.l.b16 %v4901
        %v4981 = vunpack.c.l.b16 %v4902
        %v4982 = vunpack.c.l.b16 %v4903
        %v4983 = vpack.c.b16 %v4974, %v4973
        %v4984 = vpack.c.b16 %v4976, %v4975
        %v4985 = vpack.c.b16 %v4978, %v4977
        %v4986 = vpack.c.b16 %v4980, %v4979
        %v4987 = vpack.c.b16 %v4982, %v4981
        %v4994 = vsel %vm4946, %v4893, 0
        %4996 = vmatpush.bf16.msra.mxu0 0
        %4997 = vmatpush.bf16.msra.mxu0 0
        %4998 = vmatpush.bf16.msra.mxu0 0
        %4999 = vmatpush.bf16.msra.mxu0 %v4987
        %5000 = vmatpush.bf16.msra.mxu0 %v4986
        %5001 = vmatpush.bf16.msra.mxu0 %v4985
        %5002 = vmatpush.bf16.msra.mxu0 %v4984
        %5003 = vmatpush.bf16.msra.mxu0 %v4983
        %5004 = vmatmul.bf16.gmra.mxu0 %v4994
        %v5005 = vpop.f32.mrf.mxu0
        %v5006 = vadd.f32 %v4960, %v5005
        %v5007 = vpop.f32.mrf.mxu0
        %5008 = vdwg.mxu0
        %v5009 = vpack.c.bf16 %v4890, %v4890
        %s5010 = scalar_lea.vmem %s3, 80
        %v5011 = vld [vmem:[%s5010] sm:$0xf]
        %v5012 = vld [vmem:[%s5010 + $0x4] sm:$0xf]
        %v5013 = vld [vmem:[%s5010 + $0x8] sm:$0xf]
        %v5014 = vld [vmem:[%s5010 + $0xc] sm:$0xf]
        %v5015 = vld [vmem:[%s5010 + $0x10] sm:$0xf]
        %v5016 = vld [vmem:[%s5010 + $0x14] sm:$0xf]
        %v5017 = vld [vmem:[%s5010 + $0x18] sm:$0xf]
        %v5018 = vld [vmem:[%s5010 + $0x1c] sm:$0xf]
        %v5019 = vld [vmem:[%s5010 + $0x20] sm:$0xf]
        %v5020 = vld [vmem:[%s5010 + $0x24] sm:$0xf]
        %v5031 = vunpack.c.l.b16 %v5011
        %v5032 = vunpack.c.l.b16 %v5012
        %v5033 = vunpack.c.l.b16 %v5013
        %v5034 = vunpack.c.l.b16 %v5014
        %v5035 = vunpack.c.l.b16 %v5015
        %v5036 = vunpack.c.l.b16 %v5016
        %v5037 = vunpack.c.l.b16 %v5017
        %v5038 = vunpack.c.l.b16 %v5018
        %v5039 = vunpack.c.l.b16 %v5019
        %v5040 = vunpack.c.l.b16 %v5020
        %v5041 = vpack.c.b16 %v5032, %v5031
        %v5042 = vpack.c.b16 %v5034, %v5033
        %v5043 = vpack.c.b16 %v5036, %v5035
        %v5044 = vpack.c.b16 %v5038, %v5037
        %v5045 = vpack.c.b16 %v5040, %v5039
        %v5052 = vsel %vm4946, %v5009, 0
        %5054 = vmatpush.bf16.msra.mxu0 0
        %5055 = vmatpush.bf16.msra.mxu0 0
        %5056 = vmatpush.bf16.msra.mxu0 0
        %5057 = vmatpush.bf16.msra.mxu0 %v5045
        %5058 = vmatpush.bf16.msra.mxu0 %v5044
        %5059 = vmatpush.bf16.msra.mxu0 %v5043
        %5060 = vmatpush.bf16.msra.mxu0 %v5042
        %5061 = vmatpush.bf16.msra.mxu0 %v5041
        %5062 = vmatmul.bf16.gmra.mxu0 %v5052
        %v5063 = vpop.f32.mrf.mxu0
        %v5064 = vadd.f32 0.0, %v5063
        %v5065 = vpop.f32.mrf.mxu0
        %5066 = vdwg.mxu0
        %v5067 = vadd.f32 %v5006, %v5064
        %v5068 = vpack.c.bf16 %v4891, %v4891
        %s5069 = scalar_lea.vmem %s3, 120
        %v5070 = vld [vmem:[%s5069] sm:$0xf]
        %v5071 = vld [vmem:[%s5069 + $0x4] sm:$0xf]
        %v5072 = vld [vmem:[%s5069 + $0x8] sm:$0xf]
        %v5073 = vld [vmem:[%s5069 + $0xc] sm:$0xf]
        %v5074 = vld [vmem:[%s5069 + $0x10] sm:$0xf]
        %v5075 = vld [vmem:[%s5069 + $0x14] sm:$0xf]
        %v5076 = vld [vmem:[%s5069 + $0x18] sm:$0xf]
        %v5077 = vld [vmem:[%s5069 + $0x1c] sm:$0xf]
        %v5078 = vld [vmem:[%s5069 + $0x20] sm:$0xf]
        %v5079 = vld [vmem:[%s5069 + $0x24] sm:$0xf]
        %v5090 = vunpack.c.l.b16 %v5070
        %v5091 = vunpack.c.l.b16 %v5071
        %v5092 = vunpack.c.l.b16 %v5072
        %v5093 = vunpack.c.l.b16 %v5073
        %v5094 = vunpack.c.l.b16 %v5074
        %v5095 = vunpack.c.l.b16 %v5075
        %v5096 = vunpack.c.l.b16 %v5076
        %v5097 = vunpack.c.l.b16 %v5077
        %v5098 = vunpack.c.l.b16 %v5078
        %v5099 = vunpack.c.l.b16 %v5079
        %v5100 = vpack.c.b16 %v5091, %v5090
        %v5101 = vpack.c.b16 %v5093, %v5092
        %v5102 = vpack.c.b16 %v5095, %v5094
        %v5103 = vpack.c.b16 %v5097, %v5096
        %v5104 = vpack.c.b16 %v5099, %v5098
        %v5111 = vsel %vm4946, %v5068, 0
        %5113 = vmatpush.bf16.msra.mxu0 0
        %5114 = vmatpush.bf16.msra.mxu0 0
        %5115 = vmatpush.bf16.msra.mxu0 0
        %5116 = vmatpush.bf16.msra.mxu0 %v5104
        %5117 = vmatpush.bf16.msra.mxu0 %v5103
        %5118 = vmatpush.bf16.msra.mxu0 %v5102
        %5119 = vmatpush.bf16.msra.mxu0 %v5101
        %5120 = vmatpush.bf16.msra.mxu0 %v5100
        %5121 = vmatmul.bf16.gmra.mxu0 %v5111
        %v5122 = vpop.f32.mrf.mxu0
        %v5123 = vadd.f32 0.0, %v5122
        %v5124 = vpop.f32.mrf.mxu0
        %5125 = vdwg.mxu0
        %v5126 = vadd.f32 %v5067, %v5123
        %v5127 = vpack.c.bf16 %v4892, %v4892
        %s5128 = scalar_lea.vmem %s3, 160
        %v5129 = vld [vmem:[%s5128] sm:$0xf]
        %v5130 = vld [vmem:[%s5128 + $0x4] sm:$0xf]
        %v5131 = vld [vmem:[%s5128 + $0x8] sm:$0xf]
        %v5132 = vld [vmem:[%s5128 + $0xc] sm:$0xf]
        %v5133 = vld [vmem:[%s5128 + $0x10] sm:$0xf]
        %v5134 = vld [vmem:[%s5128 + $0x14] sm:$0xf]
        %v5135 = vld [vmem:[%s5128 + $0x18] sm:$0xf]
        %v5136 = vld [vmem:[%s5128 + $0x1c] sm:$0xf]
        %v5137 = vld [vmem:[%s5128 + $0x20] sm:$0xf]
        %v5138 = vld [vmem:[%s5128 + $0x24] sm:$0xf]
        %v5149 = vunpack.c.l.b16 %v5129
        %v5150 = vunpack.c.l.b16 %v5130
        %v5151 = vunpack.c.l.b16 %v5131
        %v5152 = vunpack.c.l.b16 %v5132
        %v5153 = vunpack.c.l.b16 %v5133
        %v5154 = vunpack.c.l.b16 %v5134
        %v5155 = vunpack.c.l.b16 %v5135
        %v5156 = vunpack.c.l.b16 %v5136
        %v5157 = vunpack.c.l.b16 %v5137
        %v5158 = vunpack.c.l.b16 %v5138
        %v5159 = vpack.c.b16 %v5150, %v5149
        %v5160 = vpack.c.b16 %v5152, %v5151
        %v5161 = vpack.c.b16 %v5154, %v5153
        %v5162 = vpack.c.b16 %v5156, %v5155
        %v5163 = vpack.c.b16 %v5158, %v5157
        %v5170 = vsel %vm4946, %v5127, 0
        %5172 = vmatpush.bf16.msra.mxu0 0
        %5173 = vmatpush.bf16.msra.mxu0 0
        %5174 = vmatpush.bf16.msra.mxu0 0
        %5175 = vmatpush.bf16.msra.mxu0 %v5163
        %5176 = vmatpush.bf16.msra.mxu0 %v5162
        %5177 = vmatpush.bf16.msra.mxu0 %v5161
        %5178 = vmatpush.bf16.msra.mxu0 %v5160
        %5179 = vmatpush.bf16.msra.mxu0 %v5159
        %5180 = vmatmul.bf16.gmra.mxu0 %v5170
        %v5181 = vpop.f32.mrf.mxu0
        %v5182 = vadd.f32 0.0, %v5181
        %v5183 = vpop.f32.mrf.mxu0
        %5184 = vdwg.mxu0
        %v5185 = vadd.f32 %v5126, %v5182
        %v5186 = vperm.slane %v545, 0
        %v5187 = vadd.f32 %v5185, %v5186
        %v5188 = vmax.f32 %v5187, 0.0
        %v5189 = vpack.c.bf16 %v5188, %v5188
        %v5190 = vld [vmem:[%s4] sm:$0xf]
        %v5191 = vld [vmem:[%s4 + $0x4] sm:$0xf]
        %v5192 = vld [vmem:[%s4 + $0x8] sm:$0xf]
        %v5193 = vld [vmem:[%s4 + $0xc] sm:$0xf]
        %v5194 = vld [vmem:[%s4 + $0x10] sm:$0xf]
        %v5195 = vld [vmem:[%s4 + $0x14] sm:$0xf]
        %v5196 = vld [vmem:[%s4 + $0x18] sm:$0xf]
        %v5197 = vld [vmem:[%s4 + $0x1c] sm:$0xf]
        %v5198 = vld [vmem:[%s4 + $0x20] sm:$0xf]
        %v5199 = vld [vmem:[%s4 + $0x24] sm:$0xf]
        %v5200 = vld [vmem:[%s4 + $0x28] sm:$0xf]
        %v5201 = vld [vmem:[%s4 + $0x2c] sm:$0xf]
        %v5202 = vld [vmem:[%s4 + $0x30] sm:$0xf]
        %v5203 = vld [vmem:[%s4 + $0x34] sm:$0xf]
        %v5204 = vld [vmem:[%s4 + $0x38] sm:$0xf]
        %v5205 = vperm.slane %v546, 0
        %v5221 = vunpack.c.l.b16 %v5190
        %v5222 = vunpack.c.l.b16 %v5191
        %v5223 = vunpack.c.l.b16 %v5192
        %v5224 = vunpack.c.l.b16 %v5193
        %v5225 = vunpack.c.l.b16 %v5194
        %v5226 = vunpack.c.l.b16 %v5195
        %v5227 = vunpack.c.l.b16 %v5196
        %v5228 = vunpack.c.l.b16 %v5197
        %v5229 = vunpack.c.l.b16 %v5198
        %v5230 = vunpack.c.l.b16 %v5199
        %v5231 = vunpack.c.l.b16 %v5200
        %v5232 = vunpack.c.l.b16 %v5201
        %v5233 = vunpack.c.l.b16 %v5202
        %v5234 = vunpack.c.l.b16 %v5203
        %v5235 = vunpack.c.l.b16 %v5204
        %v5236 = vpack.c.b16 %v5222, %v5221
        %v5237 = vpack.c.b16 %v5224, %v5223
        %v5238 = vpack.c.b16 %v5226, %v5225
        %v5239 = vpack.c.b16 %v5228, %v5227
        %v5240 = vpack.c.b16 %v5230, %v5229
        %v5241 = vpack.c.b16 %v5232, %v5231
        %v5242 = vpack.c.b16 %v5234, %v5233
        %v5243 = vpack.c.b16 %v5235, %v5235
        %vm5251 = vcmask 982016
        %v5253 = vsel %vm5251, %v5189, 0
        %vm5255 = vcmask 1043456
        %v5257 = vsel %vm5255, %v5243, 0
        %5259 = vmatpush.bf16.msra.mxu0 %v5257
        %5260 = vmatpush.bf16.msra.mxu0 %v5242
        %5261 = vmatpush.bf16.msra.mxu0 %v5241
        %5262 = vmatpush.bf16.msra.mxu0 %v5240
        %5263 = vmatpush.bf16.msra.mxu0 %v5239
        %5264 = vmatpush.bf16.msra.mxu0 %v5238
        %5265 = vmatpush.bf16.msra.mxu0 %v5237
        %5266 = vmatpush.bf16.msra.mxu0 %v5236
        %5267 = vmatmul.bf16.gmra.mxu0 %v5253
        %v5268 = vpop.f32.mrf.mxu0
        %v5269 = vadd.f32 %v5205, %v5268
        %v5270 = vpop.f32.mrf.mxu0
        %5271 = vdwg.mxu0
        %v5272 = vmax.f32 %v5269, 0.0
        %v5273 = vpack.c.bf16 %v5272, %v5272
        %v5274 = vld [vmem:[%s5] sm:$0xf]
        %v5275 = vld [vmem:[%s5 + $0x4] sm:$0xf]
        %v5276 = vld [vmem:[%s5 + $0x8] sm:$0xf]
        %v5277 = vld [vmem:[%s5 + $0xc] sm:$0xf]
        %v5278 = vld [vmem:[%s5 + $0x10] sm:$0xf]
        %v5279 = vld [vmem:[%s5 + $0x14] sm:$0xf]
        %v5280 = vld [vmem:[%s5 + $0x18] sm:$0xf]
        %v5281 = vld [vmem:[%s5 + $0x1c] sm:$0xf]
        %v5282 = vld [vmem:[%s5 + $0x20] sm:$0xf]
        %v5283 = vld [vmem:[%s5 + $0x24] sm:$0xf]
        %v5284 = vld [vmem:[%s5 + $0x28] sm:$0x3]
        %v5285 = vperm.slane %v547, 0
        %v5297 = vunpack.c.l.b16 %v5274
        %v5298 = vunpack.c.l.b16 %v5275
        %v5299 = vunpack.c.l.b16 %v5276
        %v5300 = vunpack.c.l.b16 %v5277
        %v5301 = vunpack.c.l.b16 %v5278
        %v5302 = vunpack.c.l.b16 %v5279
        %v5303 = vunpack.c.l.b16 %v5280
        %v5304 = vunpack.c.l.b16 %v5281
        %v5305 = vunpack.c.l.b16 %v5282
        %v5306 = vunpack.c.l.b16 %v5283
        %v5307 = vunpack.c.l.b16 %v5284
        %v5308 = vpack.c.b16 %v5298, %v5297
        %v5309 = vpack.c.b16 %v5300, %v5299
        %v5310 = vpack.c.b16 %v5302, %v5301
        %v5311 = vpack.c.b16 %v5304, %v5303
        %v5312 = vpack.c.b16 %v5306, %v5305
        %v5313 = vpack.c.b16 %v5307, %v5307
        %vm5319 = vcmask 687104
        %v5321 = vsel %vm5319, %v5273, 0
        %vm5323 = vcmask 1041408
        %v5325 = vsel %vm5323, %v5313, 0
        %5327 = vmatpush.bf16.msra.mxu0 0
        %5328 = vmatpush.bf16.msra.mxu0 0
        %5329 = vmatpush.bf16.msra.mxu0 %v5325
        %5330 = vmatpush.bf16.msra.mxu0 %v5312
        %5331 = vmatpush.bf16.msra.mxu0 %v5311
        %5332 = vmatpush.bf16.msra.mxu0 %v5310
        %5333 = vmatpush.bf16.msra.mxu0 %v5309
        %5334 = vmatpush.bf16.msra.mxu0 %v5308
        %5335 = vmatmul.bf16.gmra.mxu0 %v5321
        %v5336 = vpop.f32.mrf.mxu0
        %v5337 = vadd.f32 %v5285, %v5336
        %v5338 = vpop.f32.mrf.mxu0
        %5339 = vdwg.mxu0
        %v5340 = vmax.f32 %v5337, 0.0
        %v5341 = vlaneseq
        %v5342 = vand.u32 %v5341, 127
        %vm5343 = vcmp.lt.s32.totalorder %v5342, 10
        %v5344 = vsel %vm5343, %v5340, -1e+30
        %5345 = vmax.xlane.f32.xlu0 %v5344
        %v5346 = vpop.xlane.xlu0 %5345
        %v5347 = vsub.f32 %v5344, %v5346
        %v5348 = vmul.f32 %v5347, 1.442695
        %v5349 = vpow.pop %v5348
        %5350 = vadd.xlane.f32.xlu0 %v5349
        %v5351 = vpop.xlane.xlu0 %5350
        %v5352 = vlog2.pop %v5351
        %v5353 = vmul.f32 %v5352, 0.6931472
        %v5354 = vsub.f32 %v5347, %v5353
        %5355 = vst [vmem:[%s541] sm:$0xff] %v5354
        %p5356 = scmp.lt.s32.totalorder %s18, 3
        %s5357 = scalar_select %p5356, %s18, 3
        %s5358 = smul.addr %s5357, 8
        %s5359 = scalar_lea.vmem %s7, %s5358
        // Predicated region
        $region90: #{net_forward.1} parent=84 // pred_check
          %p5360 = pneg %p188
        $region91: #{net_forward.1} parent=84 // pred_check_branch
          %5362 = sbr.rel (%p5360) target = $region93
        $region92: #{net_forward.1} parent=84 // pred_region
          _
        $region93: #{net_forward.1} parent=84 // pred_fallthru
          _
      $region85: #{net_forward.1} parent=5 // pred_fallthru
        _
      %p5363 = scmp.le.s32.totalorder 2, %s13
      // Predicated region
      $region94: #{net_forward.1} parent=5 // pred_check
        %p5364 = pneg %p5363
      $region95: #{net_forward.1} parent=5 // pred_check_branch
        %5366 = sbr.rel (%p5364) target = $region97
      $region96: #{net_forward.1} parent=5 // pred_region
        %s5367 = ssub.s32 %s13, 2
        // Predicated region
        $region98: #{net_forward.1} parent=96 // pred_check
          %p5368 = pneg %p194
        $region99: #{net_forward.1} parent=96 // pred_check_branch
          %5370 = sbr.rel (%p5368) target = $region101
        $region100: #{net_forward.1} parent=96 // pred_region
          %p5371 = scmp.lt.s32.totalorder %s19, 3
          %s5372 = scalar_select %p5371, %s19, 3
          %s5373 = smul.addr %s5372, 8
          %s5374 = scalar_lea.vmem %s7, %s5373
        $region101: #{net_forward.1} parent=96 // pred_fallthru
          _
      $region97: #{net_forward.1} parent=5 // pred_fallthru
        _
    $region6: #{net_forward.1} parent=1 // loop_footer
      %s17 = sadd.s32 1, %s13
    $region7: #{net_forward.1} parent=1 // loop_footer_branch
      %12 = sbr.rel target = $region3
    $region8: #{net_forward.1} parent=1 // loop_exit
      _

</llo_original>
